<compile_context>
chip_gen: v6e
topology: v6e:2x2x1
jax: 0.10.0
libtpu: 0.0.40
codegen_flags: <defaults>
</compile_context>

<pallas_src>
import functools

import jax
import jax.numpy as jnp
from jax import lax
from jax.experimental import pallas as pl
from jax.experimental.pallas import tpu as pltpu

C_IN = 128 + 128 + 64                  # 320, fixed by the module's Conv3d
NUM_ROT_BINS = 1
C_OUT = 1 + 3 + 2 * NUM_ROT_BINS + 3   # obj + size + rot + offset = 9
C_ROWS = 16                            # matmul rows padded to two sublane tiles
C_SLAB = C_OUT + 3                     # 9 raw conv rows + 3 activated size rows = 12
K_TOP = 8                              # self.K
NMS_KERNEL = 15
NMS_PAD = (NMS_KERNEL - 1) // 2        # 7
THRESH = 0.0
SIZE_COEFF = 2.0                       # coefficient used in the module for size_loss
CENTER_SMOOTH_COEFF = 0.001            # stand-in for hyp.center_smooth_coeff


# ---------------------------------------------------------------------------
# Kernel 1: 1x1x1 Conv3d, channel-major, with fused head activations
# ---------------------------------------------------------------------------
def conv_head_kernel(x_ref, w_ref, b_ref, slab_ref, obj_ref):
    x = x_ref[0]                                                      # (C_IN, tm)
    pred = jnp.dot(w_ref[...], x,
                   preferred_element_type=jnp.float32) + b_ref[...]  # (C_ROWS, tm)

    head = pred[0:4, :]                     # obj logit + 3 size logits
    e = jnp.exp(-jnp.abs(head))             # one transcendental shared by sig/softplus
    h0, e0 = head[0:1, :], e[0:1, :]
    inv = pl.reciprocal(1.0 + e0, approx=False)   # exact: scores feed top-k / thresh
    sig = jnp.where(h0 >= 0.0, 1.0, e0) * inv     # sigmoid(obj)
    h1, e1 = head[1:4, :], e[1:4, :]
    sp1 = jnp.maximum(h1, 0.0) + jnp.log1p(e1) + 1.0   # softplus(size) + 1

    # Single 12-row store: 9 raw conv rows + 3 activated size rows.  No second,
    # sublane-misaligned masked store; matmul pad rows 12..15 are simply dropped.
    slab_ref[0] = jnp.concatenate([pred[0:C_OUT, :], sp1], axis=0)
    obj_ref[0] = sig                        # objectness volume for NMS / top-k


def conv_head(x, w_pad, b_pad, tm):
    """x: (B, C_IN, M) channel-major -> slab (B, 12, M) and obj (B, 1, M)."""
    B, _, M = x.shape
    assert M % tm == 0
    cost = pl.CostEstimate(
        flops=2 * C_ROWS * C_IN * M * B,
        transcendentals=5 * M * B,
        bytes_accessed=(C_IN + C_SLAB + 1) * 4 * M * B + C_ROWS * (C_IN + 1) * 4)
    return pl.pallas_call(
        conv_head_kernel,
        out_shape=(jax.ShapeDtypeStruct((B, C_SLAB, M), jnp.float32),
                   jax.ShapeDtypeStruct((B, 1, M), jnp.float32)),
        grid=(B, M // tm),
        in_specs=[pl.BlockSpec((1, C_IN, tm), lambda b, i: (b, 0, i)),
                  pl.BlockSpec((C_ROWS, C_IN), lambda b, i: (0, 0)),
                  pl.BlockSpec((C_ROWS, 1), lambda b, i: (0, 0))],
        out_specs=(pl.BlockSpec((1, C_SLAB, tm), lambda b, i: (b, 0, i)),
                   pl.BlockSpec((1, 1, tm), lambda b, i: (b, 0, i))),
        # TODO(synk): on v7x, consider pltpu.CORE_PARALLEL on the M axis if the
        # default megacore partitioning leaves one TensorCore idle.
        # TODO(synk): accept bf16 x (keep f32 accumulation) if the upstream encoder
        # can emit bf16 features -- the head is purely HBM-read bound.
        compiler_params=pltpu.CompilerParams(
            dimension_semantics=("parallel", "parallel")),
        cost_estimate=cost,
    )(x, w_pad, b_pad)


def _pick_tile(M, tm_max=2048):
    # Largest lane tile dividing M: measured mem-bound tiling 256->63%, 512->85%,
    # 1024/2048->86%+ of HBM roofline; tm=2048 is ~5 MiB double-buffered.  The pad
    # fallback also stays large (512) instead of 256.
    for tm in (2048, 1024, 512, 256, 128):
        if tm <= tm_max and M % tm == 0:
            return tm, M
    tm = min(tm_max, 512)
    return tm, ((M + tm - 1) // tm) * tm


# ---------------------------------------------------------------------------
# Kernel 2: fused _nms (15^3 max-pool, stride 1) + _topk (K = 8), per batch
# ---------------------------------------------------------------------------
def _pool_axis_roll(a, axis, half):
    """Centered sliding max (window 2*half+1) along a lane/sublane axis.
    Boundary is padded with 0.0, exactly equivalent to -inf here because a >= 0
    (sigmoid).  Shifts use pltpu.roll + a boundary mask instead of minor-dim
    slices, so there are no full-volume relayout copies."""
    n = a.shape[axis]
    idx = lax.broadcasted_iota(jnp.int32, a.shape, axis)
    f = a                    # f[i] -> max a[i .. i+w-1]
    b = a                    # b[i] -> max a[i-w+1 .. i]
    w = 1
    while w < half + 1:      # window-doubling up to width half+1 = 8
        s = min(w, half + 1 - w)
        if s < n:
            rf = pltpu.roll(f, (n - s) % n, axis)              # rf[i] = f[(i+s) % n]
            f = jnp.maximum(f, jnp.where(idx < n - s, rf, 0.0))
            rb = pltpu.roll(b, s, axis)                        # rb[i] = b[(i-s) % n]
            b = jnp.maximum(b, jnp.where(idx >= s, rb, 0.0))
        w += s
    return jnp.maximum(f, b)                                   # window 2*half+1


def _pool_z_shift(a, half):
    """Same centered sliding max along the (major, untiled) Z axis; shifts are
    tile-aligned slice+concat (no lane/sublane relayout)."""
    Z = a.shape[0]
    f = a
    b = a
    w = 1
    while w < half + 1:
        s = min(w, half + 1 - w)
        if s < Z:
            pad = jnp.zeros((s,) + a.shape[1:], a.dtype)
            f = jnp.maximum(f, jnp.concatenate([f[s:], pad], axis=0))
            b = jnp.maximum(b, jnp.concatenate([pad, b[:-s]], axis=0))
        w += s
    return jnp.maximum(f, b)


def nms_topk_kernel(hp_ref, scores_ref, inds_ref, peaks_ref):
    heat = hp_ref[0]                                  # (Z, Y, X) unpadded, aligned
    Z, Y, X = heat.shape

    # --- _nms: separable 15^3 max-pool (stride 1, -inf-equivalent padding) ---
    hmax = _pool_axis_roll(heat, 2, NMS_PAD)          # X (lanes)
    hmax = _pool_axis_roll(hmax, 1, NMS_PAD)          # Y (sublanes)
    hmax = _pool_z_shift(hmax, NMS_PAD)               # Z (major)
    peaks = jnp.where(hmax == heat, heat, 0.0)        # heat * keep (exact compare)

    # --- _topk, two-stage ---
    # Stage 1: per-(z,y) row maxima (Z*Y candidates); park peaks in VMEM scratch.
    colmax = jnp.max(peaks, axis=2)                   # (Z, Y), small
    peaks_ref[...] = peaks

    zi = lax.broadcasted_iota(jnp.int32, (Z, Y), 0)
    yi = lax.broadcasted_iota(jnp.int32, (Z, Y), 1)
    rowid = zi * Y + yi                               # (Z, Y), small
    li = lax.broadcasted_iota(jnp.int32, (1, X), 1)
    kcol = lax.broadcasted_iota(jnp.int32, (1, K_TOP), 1)

    srow = jnp.zeros((1, K_TOP), jnp.float32)
    irow = jnp.zeros((1, K_TOP), jnp.int32)
    # Stage 2: each of the K=8 steps touches only the (Z,Y) candidate array and ONE
    # dynamically indexed row of the scratch: O(K*(Z*Y + X)) instead of O(K*N).
    for k in range(K_TOP):                            # static unroll, K = 8
        m = jnp.max(colmax)
        r = jnp.min(jnp.where(colmax == m, rowid, Z * Y))       # lowest flat row
        zsel = r // Y
        ysel = r % Y
        row = peaks_ref[zsel, pl.ds(ysel, 1), :]                # (1, X)
        xsel = jnp.min(jnp.where(row == m, li, X))              # lowest x in the row
        srow = jnp.where(kcol == k, m, srow)
        irow = jnp.where(kcol == k, r * X + xsel, irow)         # torch .view(B,1,-1)
        new_row = jnp.where(li == xsel, -1.0, row)              # invalidate (heat>=0)
        peaks_ref[zsel, pl.ds(ysel, 1), :] = new_row
        colmax = jnp.where(rowid == r, jnp.max(new_row), colmax)
    scores_ref[0] = srow
    inds_ref[0] = irow


def nms_topk(center_e):
    """center_e: (B, Z, Y, X) sigmoid objectness -> top-K scores & flat indices.
    The unpadded volume goes straight to VMEM; padding semantics are in-kernel.
    TODO(synk): tile over Z with a 7-voxel halo + running top-K merge when ~4x the
    volume exceeds the scoped VMEM limit (v7x: 64 MiB physical)."""
    B, Z, Y, X = center_e.shape
    vol_bytes = Z * Y * X * 4
    vmem_limit = int(min(64 * 2 ** 20, max(32 * 2 ** 20, 8 * vol_bytes)))
    scores, inds = pl.pallas_call(
        nms_topk_kernel,
        out_shape=(jax.ShapeDtypeStruct((B, 1, K_TOP), jnp.float32),
                   jax.ShapeDtypeStruct((B, 1, K_TOP), jnp.int32)),
        grid=(B,),
        in_specs=[pl.BlockSpec((1, Z, Y, X), lambda b: (b, 0, 0, 0))],
        out_specs=(pl.BlockSpec((1, 1, K_TOP), lambda b: (b, 0, 0)),
                   pl.BlockSpec((1, 1, K_TOP), lambda b: (b, 0, 0))),
        scratch_shapes=[pltpu.VMEM((Z, Y, X), jnp.float32)],
        compiler_params=pltpu.CompilerParams(
            dimension_semantics=("parallel",),
            vmem_limit_bytes=vmem_limit),
    )(center_e)
    return scores[:, 0], inds[:, 0]                   # (B, K), (B, K)


# ---------------------------------------------------------------------------
# JAX glue (losses, index bookkeeping, gathers, box assembly)
# ---------------------------------------------------------------------------
def gradient3d_abs(x):
    # TODO(synk): mirrors utils.basic.gradient3d(x, absolute=True); the util is
    # external to the provided module so this standard forward-diff is assumed.
    dz = x[:, :, 1:] - x[:, :, :-1]
    dy = x[:, :, :, 1:] - x[:, :, :, :-1]
    dx = x[:, :, :, :, 1:] - x[:, :, :, :, :-1]
    dz = jnp.concatenate([dz, jnp.zeros_like(x[:, :, :1])], axis=2)
    dy = jnp.concatenate([dy, jnp.zeros_like(x[:, :, :, :1])], axis=3)
    dx = jnp.concatenate([dx, jnp.zeros_like(x[:, :, :, :, :1])], axis=4)
    return jnp.abs(dz), jnp.abs(dy), jnp.abs(dx)


def centernet_forward(feat, params, crop, tm_max=2048):
    B, C, Z, Y, X = feat.shape
    assert C == C_IN
    M = Z * Y * X
    w_pad, b_pad = params

    # --- conv head (Pallas channel-major matmul + fused activations) ---
    tm, Mpad = _pick_tile(M, tm_max)
    x = feat.reshape(B, C, M)                        # free reshape; NCDHW kept
    if Mpad != M:
        x = jnp.pad(x, ((0, 0), (0, 0), (0, Mpad - M)))
    slab, obj = conv_head(x, w_pad, b_pad, tm)
    if Mpad != M:
        slab = slab[:, :, :M]
        obj = obj[:, :, :M]

    pred = slab[:, 0:C_OUT, :].reshape(B, C_OUT, Z, Y, X)       # raw conv3d output
    size_e = slab[:, C_OUT:C_OUT + 3, :].reshape(B, 3, Z, Y, X)  # softplus + 1
    center_e = obj.reshape(B, Z, Y, X)                          # sigmoid (free reshape)
    r0 = 4
    rx_e = pred[:, r0:r0 + NUM_ROT_BINS]
    ry_e = pred[:, r0 + NUM_ROT_BINS:r0 + 2 * NUM_ROT_BINS]
    offset_e = pred[:, r0 + 2 * NUM_ROT_BINS:C_OUT]

    # --- size_loss + smooth_loss (no-GT losses of the forward) ---
    # TODO(synk): fuse size_loss and the X-direction gradient term into the conv
    # head kernel via SMEM accumulators to avoid re-reading pred from HBM.
    size_loss = jnp.mean(jax.nn.relu(jnp.abs(size_e.reshape(-1)) - 3.0))
    total_loss = SIZE_COEFF * size_loss
    dz, dy, dx = gradient3d_abs(pred)
    smooth_vox = jnp.mean(dx + dy + dz, axis=1, keepdims=True)
    total_loss = total_loss + CENTER_SMOOTH_COEFF * jnp.mean(smooth_vox)

    # --- fused _nms + _topk (Pallas; NMS result never leaves VMEM) ---
    scorelist_e, indlist = nms_topk(center_e)               # (B, K), (B, K)
    ind_z = indlist // (Y * X)
    ind_y = (indlist % (Y * X)) // X
    ind_x = (indlist % (Y * X)) % X
    xyzlist_crop_e = jnp.stack([ind_x, ind_y, ind_z], axis=2).astype(jnp.float32)

    Z_crop, Y_crop, X_crop = crop
    crop_vec = jnp.array([X_crop, Y_crop, Z_crop], jnp.float32).reshape(1, 1, 3)
    xyzlist_mem_e = xyzlist_crop_e + crop_vec

    # utils.samp.bilinear_sample3d at integer peak coords == direct gather.
    # TODO(synk): general (fractional) trilinear sampling util is external.
    def gather_head(h):                                     # (B,Ch,Z,Y,X) -> (B,K,Ch)
        hf = h.reshape(B, h.shape[1], -1)
        g = jnp.take_along_axis(hf, indlist[:, None, :], axis=2)
        return jnp.transpose(g, (0, 2, 1))

    sizelist_e = gather_head(size_e)
    rxlist_e = gather_head(rx_e)
    rylist_e = gather_head(ry_e)
    offsetlist_e = gather_head(offset_e)

    # --- box assembly (thresholded, vectorised equivalent of the python loop) ---
    bin_angles = jnp.arange(NUM_ROT_BINS, dtype=jnp.float32) * (jnp.pi / NUM_ROT_BINS)
    rx_ang = bin_angles[jnp.argmax(rxlist_e, axis=2)]
    ry_ang = bin_angles[jnp.argmax(rylist_e, axis=2)]
    rz_ang = jnp.zeros_like(ry_ang)
    rot = jnp.stack([rx_ang, ry_ang, rz_ang], axis=2)
    # TODO(synk): vox_util.Mem2Ref / utils.geom.convert_boxlist_to_lrtlist are
    # external; box centers are kept in (offset-corrected) mem coordinates.
    boxlist = jnp.concatenate([xyzlist_mem_e + offsetlist_e, sizelist_e, rot], axis=2)

    valid = (scorelist_e > THRESH).astype(jnp.float32)
    boxlist = boxlist * valid[:, :, None]
    scorelist = scorelist_e * valid
    return total_loss, boxlist, scorelist


if __name__ == "__main__":
    key = jax.random.PRNGKey(0)
    B, Z, Y, X = 2, 8, 8, 128          # lane dim 128 keeps rolls / lane tiles aligned
    crop = (1, 1, 1)

    k_feat, k_w, k_b = jax.random.split(key, 3)
    feat = jax.random.normal(k_feat, (B, C_IN, Z, Y, X), jnp.float32)

    # Deterministic synthetic Conv3d(320 -> 9, k=1) parameters, padded to 16 rows.
    w = jax.random.normal(k_w, (C_OUT, C_IN), jnp.float32) * 0.05
    b = jax.random.normal(k_b, (C_OUT,), jnp.float32) * 0.05
    w_pad = jnp.zeros((C_ROWS, C_IN), jnp.float32).at[:C_OUT].set(w)
    b_pad = jnp.zeros((C_ROWS, 1), jnp.float32).at[:C_OUT, 0].set(b)

    # --- pure-JAX reference checks for the two Pallas kernels (small shapes) ---
    M = Z * Y * X
    tm, _ = _pick_tile(M)
    xcm = feat.reshape(B, C_IN, M)
    slab, obj = conv_head(xcm, w_pad, b_pad, tm)
    logits = jnp.einsum("ok,bkm->bom", w, xcm,
                        precision=jax.lax.Precision.HIGHEST) + b[None, :, None]
    assert jnp.allclose(slab[:, :C_OUT], logits, atol=2e-2, rtol=2e-2)
    assert jnp.allclose(slab[:, C_OUT:], jax.nn.softplus(logits[:, 1:4]) + 1.0,
                        atol=2e-2, rtol=2e-2)
    assert jnp.allclose(obj[:, 0], jax.nn.sigmoid(logits[:, 0]), atol=2e-2)

    center_e = obj.reshape(B, Z, Y, X)
    scores, _ = nms_topk(center_e)
    p = NMS_PAD
    hp = jnp.pad(center_e, ((0, 0), (p, p), (p, p), (p, p)),
                 constant_values=-jnp.inf)
    hmax = lax.reduce_window(hp, -jnp.inf, lax.max,
                             (1, NMS_KERNEL, NMS_KERNEL, NMS_KERNEL),
                             (1, 1, 1, 1), "VALID")
    peaks_ref_full = jnp.where(hmax == center_e, center_e, 0.0).reshape(B, -1)
    ref_scores, _ = lax.top_k(peaks_ref_full, K_TOP)
    assert jnp.allclose(scores, ref_scores, atol=1e-6)

    # --- full forward ---
    fwd = jax.jit(functools.partial(centernet_forward, crop=crop))
    total_loss, boxlist, scorelist = fwd(feat, (w_pad, b_pad))
    jax.block_until_ready((total_loss, boxlist, scorelist))
    assert boxlist.shape == (B, K_TOP, 9) and scorelist.shape == (B, K_TOP)
    print("KERNEL_OK")
</pallas_src>

<mosaic_0001>
module attributes {stable_mosaic.version = 11 : i64} {
  func.func @conv_head_kernel(%arg0: i32, %arg1: i32, %arg2: memref<1x320x2048xf32, #tpu.memory_space<vmem>>, %arg3: memref<16x320xf32, #tpu.memory_space<vmem>>, %arg4: memref<16x1xf32, #tpu.memory_space<vmem>>, %arg5: memref<1x12x2048xf32, #tpu.memory_space<vmem>>, %arg6: memref<1x1x2048xf32, #tpu.memory_space<vmem>>) attributes {dimension_semantics = [#tpu.dimension_semantics<parallel>, #tpu.dimension_semantics<parallel>], iteration_bounds = array<i64: 2, 4>, scalar_prefetch = 0 : i64, scratch_operands = 0 : i64, tpu.core_type = #tpu.core_type<tc>, window_params = [{transform_indices = @transform_0, window_bounds = array<i64: 1, 320, 2048>}, {pipeline_mode = #tpu.pipeline_mode<synchronous>, transform_indices = @transform_1, window_bounds = array<i64: 16, 320>}, {pipeline_mode = #tpu.pipeline_mode<synchronous>, transform_indices = @transform_2, window_bounds = array<i64: 16, 1>}, {transform_indices = @transform_3, window_bounds = array<i64: 1, 12, 2048>}, {transform_indices = @transform_4, window_bounds = array<i64: 1, 1, 2048>}]} {
    %c0 = arith.constant 0 : index
    %c0_0 = arith.constant 0 : index
    %c0_1 = arith.constant 0 : index
    %0 = vector.load %arg2[%c0, %c0_0, %c0_1] : memref<1x320x2048xf32, #tpu.memory_space<vmem>>, vector<1x320x2048xf32>
    %1 = vector.shape_cast %0 : vector<1x320x2048xf32> to vector<320x2048xf32>
    %c0_2 = arith.constant 0 : index
    %c0_3 = arith.constant 0 : index
    %2 = vector.load %arg3[%c0_2, %c0_3] : memref<16x320xf32, #tpu.memory_space<vmem>>, vector<16x320xf32>
    %cst = arith.constant dense<0.000000e+00> : vector<16x2048xf32>
    %3 = tpu.matmul %2, %1, %cst {dimension_numbers = #tpu.dot_dimension_numbers<[1], [0], [0], [1], [0, 0, 1, 1], [], []>} : vector<16x320xf32>, vector<320x2048xf32>, vector<16x2048xf32> -> vector<16x2048xf32>
    %c0_4 = arith.constant 0 : index
    %c0_5 = arith.constant 0 : index
    %4 = vector.load %arg4[%c0_4, %c0_5] : memref<16x1xf32, #tpu.memory_space<vmem>>, vector<16x1xf32>
    %5 = vector.broadcast %4 : vector<16x1xf32> to vector<16x2048xf32>
    %6 = arith.addf %3, %5 : vector<16x2048xf32>
    %7 = vector.extract_strided_slice %6 {offsets = [0, 0], sizes = [4, 2048], strides = [1, 1]} : vector<16x2048xf32> to vector<4x2048xf32>
    %8 = math.absf %7 : vector<4x2048xf32>
    %cst_6 = arith.constant 0.000000e+00 : f32
    %9 = vector.broadcast %cst_6 : f32 to vector<4x2048xf32>
    %10 = arith.subf %9, %8 : vector<4x2048xf32>
    %11 = math.exp %10 : vector<4x2048xf32>
    %12 = vector.extract_strided_slice %7 {offsets = [0, 0], sizes = [1, 2048], strides = [1, 1]} : vector<4x2048xf32> to vector<1x2048xf32>
    %13 = vector.extract_strided_slice %11 {offsets = [0, 0], sizes = [1, 2048], strides = [1, 1]} : vector<4x2048xf32> to vector<1x2048xf32>
    %cst_7 = arith.constant 1.000000e+00 : f32
    %14 = vector.broadcast %cst_7 : f32 to vector<1x2048xf32>
    %15 = arith.addf %14, %13 : vector<1x2048xf32>
    %16 = tpu.reciprocal %15 : vector<1x2048xf32> -> vector<1x2048xf32>
    %cst_8 = arith.constant 0.000000e+00 : f32
    %17 = vector.broadcast %cst_8 : f32 to vector<1x2048xf32>
    %18 = arith.cmpf oge, %12, %17 : vector<1x2048xf32>
    %cst_9 = arith.constant 1.000000e+00 : f32
    %19 = vector.broadcast %cst_9 : f32 to vector<1x2048xf32>
    %20 = arith.select %18, %19, %13 : vector<1x2048xi1>, vector<1x2048xf32>
    %21 = arith.mulf %20, %16 : vector<1x2048xf32>
    %22 = vector.extract_strided_slice %7 {offsets = [1, 0], sizes = [3, 2048], strides = [1, 1]} : vector<4x2048xf32> to vector<3x2048xf32>
    %23 = vector.extract_strided_slice %11 {offsets = [1, 0], sizes = [3, 2048], strides = [1, 1]} : vector<4x2048xf32> to vector<3x2048xf32>
    %cst_10 = arith.constant 0.000000e+00 : f32
    %24 = vector.broadcast %cst_10 : f32 to vector<3x2048xf32>
    %25 = arith.maximumf %22, %24 : vector<3x2048xf32>
    %26 = math.log1p %23 : vector<3x2048xf32>
    %27 = arith.addf %25, %26 : vector<3x2048xf32>
    %cst_11 = arith.constant 1.000000e+00 : f32
    %28 = vector.broadcast %cst_11 : f32 to vector<3x2048xf32>
    %29 = arith.addf %27, %28 : vector<3x2048xf32>
    %30 = vector.extract_strided_slice %6 {offsets = [0, 0], sizes = [9, 2048], strides = [1, 1]} : vector<16x2048xf32> to vector<9x2048xf32>
    %31 = tpu.concatenate %30, %29 in 0 : vector<9x2048xf32>, vector<3x2048xf32> -> vector<12x2048xf32>
    %c0_12 = arith.constant 0 : index
    %c0_13 = arith.constant 0 : index
    %c0_14 = arith.constant 0 : index
    %32 = vector.load %arg5[%c0_12, %c0_13, %c0_14] : memref<1x12x2048xf32, #tpu.memory_space<vmem>>, vector<1x12x2048xf32>
    %33 = vector.shape_cast %32 : vector<1x12x2048xf32> to vector<12x2048xf32>
    %34 = vector.shape_cast %31 : vector<12x2048xf32> to vector<1x12x2048xf32>
    tpu.vector_store %arg5[%c0_12, %c0_13, %c0_14], %34 {strides = array<i32>} : memref<1x12x2048xf32, #tpu.memory_space<vmem>>, vector<1x12x2048xf32>,
    %c0_15 = arith.constant 0 : index
    %c0_16 = arith.constant 0 : index
    %c0_17 = arith.constant 0 : index
    %35 = vector.load %arg6[%c0_15, %c0_16, %c0_17] : memref<1x1x2048xf32, #tpu.memory_space<vmem>>, vector<1x1x2048xf32>
    %36 = vector.shape_cast %35 : vector<1x1x2048xf32> to vector<1x2048xf32>
    %37 = vector.shape_cast %21 : vector<1x2048xf32> to vector<1x1x2048xf32>
    tpu.vector_store %arg6[%c0_15, %c0_16, %c0_17], %37 {strides = array<i32>} : memref<1x1x2048xf32, #tpu.memory_space<vmem>>, vector<1x1x2048xf32>,
    return
  }
  func.func @transform_0(%arg0: i32, %arg1: i32) -> (i32, i32, i32) {
    %c0_i32 = arith.constant 0 : i32
    %c0_i32_0 = arith.constant 0 : i32
    return %arg0, %c0_i32, %arg1 : i32, i32, i32
  }
  func.func @transform_1(%arg0: i32, %arg1: i32) -> (i32, i32) {
    %c0_i32 = arith.constant 0 : i32
    %c0_i32_0 = arith.constant 0 : i32
    %c0_i32_1 = arith.constant 0 : i32
    return %c0_i32, %c0_i32_0 : i32, i32
  }
  func.func @transform_2(%arg0: i32, %arg1: i32) -> (i32, i32) {
    %c0_i32 = arith.constant 0 : i32
    %c0_i32_0 = arith.constant 0 : i32
    %c0_i32_1 = arith.constant 0 : i32
    return %c0_i32, %c0_i32_0 : i32, i32
  }
  func.func @transform_3(%arg0: i32, %arg1: i32) -> (i32, i32, i32) {
    %c0_i32 = arith.constant 0 : i32
    %c0_i32_0 = arith.constant 0 : i32
    return %arg0, %c0_i32, %arg1 : i32, i32, i32
  }
  func.func @transform_4(%arg0: i32, %arg1: i32) -> (i32, i32, i32) {
    %c0_i32 = arith.constant 0 : i32
    %c0_i32_0 = arith.constant 0 : i32
    return %arg0, %c0_i32, %arg1 : i32, i32, i32
  }
}

</mosaic_0001>

<llo_original>
// kernel: tpu_custom_call.1
$region0: #{tpu_custom_call.1}
  #allocation0 [shape = 'u32[]', space=smem, size = 0x4, offset = 0x4, fixed_abs, tag = 'smem constant byte address 0x4 - core index']
  #allocation1 [shape = 'u32[144,128]{1,0:T(1,128)}', space=vmem, size = 0x12000, scoped, tag = 'internal scratch']
  %s0 = inlined_call_operand.hbm [shape: f32[2,320,8192], index: 0, kind: input, shape index: {}]
  %s1 = inlined_call_operand.hbm [shape: f32[16,320], index: 1, kind: input, shape index: {}]
  %s2 = inlined_call_operand.vmem [shape: f32[16,1], index: 2, kind: input, shape index: {}]
  %s3 = inlined_call_operand.vmem [shape: f32[2,12,8192], index: 3, kind: output, shape index: {0}]
  %s4 = inlined_call_operand.hbm [shape: f32[2,1,8192], index: 4, kind: output, shape index: {1}]
  %5 = xla_tuple %s3, %s4
  %s6 = sld [smem:[#allocation0]]
  $region80: #{tpu_custom_call.1} parent=0
    _
  %s8 = ssub.s32 1, %s6
  %s9 = scalar_select 0, %s8, %s6
  $region1: #{tpu_custom_call.1} parent=0
    #allocation2 [shape = 'u8[5242880]{0}', space=vmem, size = 0x500000, scoped, tag = 'input window, operand 0']
    #allocation3 [shape = 's32[2]{0}', space=sflag, size = 0x8, scoped, tag = 'scoped memory for tpu_custom_call.1']
    #allocation4 [shape = 's32[2]{0}', space=sflag, size = 0x8, scoped, tag = 'scoped memory for tpu_custom_call.1']
    #allocation5 [shape = 'u8[24576]{0}', space=vmem, size = 0x6000, scoped, tag = 'input window, operand 1, single buffered']
    #allocation6 [shape = 's32[1]{0}', space=sflag, size = 0x4, scoped, tag = 'scoped memory for tpu_custom_call.1']
    #allocation7 [shape = 'u8[262144]{0}', space=vmem, size = 0x40000, scoped, tag = 'output window, operand 0']
    #allocation8 [shape = 'u8[16384]{0}', space=vmem, size = 0x4000, scoped, tag = 'output window, operand 1']
    %10 = vsyncpa [#allocation3], 0
    %s11 = scalar_lea.sflag [#allocation3], 1
    %12 = vsyncpa %s11, 0
    %13 = vsyncpa [#allocation6], 0
    %14 = vsyncpa [#allocation4], 0
    %s15 = scalar_lea.sflag [#allocation4], 1
    %16 = vsyncpa %s15, 0
    loop: start=0, step=1, limit=10
    $region2: #{tpu_custom_call.1} parent=1 // loop_pre_header
      _
    $region3: #{tpu_custom_call.1} parent=1 // loop_header
      %s18 = sphi 0, %s22
      %p19 = scmp.ge.s32.totalorder %s18, 10
      %s25 = sphi 0, %s37
      %s26 = sphi 0, %s33
      %s27 = sphi 0, %s25
      %s28 = sphi 0, %s26
      %s29 = sphi 0, %s27
      %s30 = sphi 0, %s28
      %s42 = sphi 0, %s44
      %s45 = sphi 0, %s42
      %s46 = sphi 0, %s45
      %s62 = sphi 0, %s46
      %s66 = sphi 0, %s66
      %s68 = sphi 0, %s66
      %s69 = sphi 0, %s68
      %s83 = sphi 0, %s69
      %s87 = sphi 0, %s87
      %s89 = sphi 0, %s87
      %s90 = sphi 0, %s89
      %s104 = sphi 0, %s90
      %s112 = sphi 0, %s114
      %s115 = sphi 0, %s112
      %s116 = sphi 0, %s115
      %s132 = sphi 0, %s116
      %s140 = sphi 0, %s142
      %s143 = sphi 0, %s140
      %s144 = sphi 0, %s143
      %s160 = sphi 0, %s144
    $region4: #{tpu_custom_call.1} parent=1 // loop_header_branch
      %21 = sbr.rel (%p19) target = $region8
    $region5: #{tpu_custom_call.1} parent=1 // loop_body
      %s23 = ssub.s32 %s18, 1
      %s24 = ssub.s32 %s18, 2
      %s31 = sadd.s32 1, %s26
      %p32 = scmp.ge.s32.totalorder %s31, 4
      %s33 = scalar_select %p32, 0, %s31
      %s34 = sadd.s32 1, %s25
      %s35 = scalar_select %p32, %s34, %s25
      %p36 = scmp.ge.s32.totalorder %s35, 2
      %s37 = scalar_select %p36, 0, %s35
      %s38 = ssub.s32 %s25, %s37
      %s39 = ssub.s32 %s26, %s33
      %s40 = sor.u32 %s38, %s39
      %p41 = scmp.eq.s32.totalorder %s40, 0
      %s43 = sadd.s32 %s42, 1
      %s44 = scalar_select %p41, %s42, %s43
      %p47 = pneg %p41
      %p48 = scmp.eq.s32.totalorder %s18, 7
      %p49 = por %p47, %p48
      %p50 = scmp.ne.s32.totalorder %s42, %s45
      %p51 = scmp.eq.s32.totalorder %s18, 0
      %p52 = por %p50, %p51
      %p53 = scmp.ne.s32.totalorder %s42, %s45
      %p54 = scmp.eq.s32.totalorder %s23, 7
      %p55 = por %p53, %p54
      %p56 = scmp.ne.s32.totalorder %s45, %s46
      %p57 = scmp.eq.s32.totalorder %s23, 0
      %p58 = por %p56, %p57
      %p59 = scmp.ne.s32.totalorder %s45, %s46
      %p60 = scmp.eq.s32.totalorder %s24, 7
      %p61 = por %p59, %p60
      %p63 = scmp.ne.s32.totalorder %s46, %s62
      %p64 = scmp.eq.s32.totalorder %s24, 0
      %p65 = por %p63, %p64
      %s67 = sadd.s32 %s66, 1
      %p70 = scmp.eq.s32.totalorder %s18, 7
      %p71 = scmp.ne.s32.totalorder %s66, %s68
      %p72 = scmp.eq.s32.totalorder %s18, 0
      %p73 = por %p71, %p72
      %p74 = scmp.ne.s32.totalorder %s66, %s68
      %p75 = scmp.eq.s32.totalorder %s23, 7
      %p76 = por %p74, %p75
      %p77 = scmp.ne.s32.totalorder %s68, %s69
      %p78 = scmp.eq.s32.totalorder %s23, 0
      %p79 = por %p77, %p78
      %p80 = scmp.ne.s32.totalorder %s68, %s69
      %p81 = scmp.eq.s32.totalorder %s24, 7
      %p82 = por %p80, %p81
      %p84 = scmp.ne.s32.totalorder %s69, %s83
      %p85 = scmp.eq.s32.totalorder %s24, 0
      %p86 = por %p84, %p85
      %s88 = sadd.s32 %s87, 1
      %p91 = scmp.eq.s32.totalorder %s18, 7
      %p92 = scmp.ne.s32.totalorder %s87, %s89
      %p93 = scmp.eq.s32.totalorder %s18, 0
      %p94 = por %p92, %p93
      %p95 = scmp.ne.s32.totalorder %s87, %s89
      %p96 = scmp.eq.s32.totalorder %s23, 7
      %p97 = por %p95, %p96
      %p98 = scmp.ne.s32.totalorder %s89, %s90
      %p99 = scmp.eq.s32.totalorder %s23, 0
      %p100 = por %p98, %p99
      %p101 = scmp.ne.s32.totalorder %s89, %s90
      %p102 = scmp.eq.s32.totalorder %s24, 7
      %p103 = por %p101, %p102
      %p105 = scmp.ne.s32.totalorder %s90, %s104
      %p106 = scmp.eq.s32.totalorder %s24, 0
      %p107 = por %p105, %p106
      %s108 = ssub.s32 %s25, %s37
      %s109 = ssub.s32 %s26, %s33
      %s110 = sor.u32 %s108, %s109
      %p111 = scmp.eq.s32.totalorder %s110, 0
      %s113 = sadd.s32 %s112, 1
      %s114 = scalar_select %p111, %s112, %s113
      %p117 = pneg %p111
      %p118 = scmp.eq.s32.totalorder %s18, 7
      %p119 = por %p117, %p118
      %p120 = scmp.ne.s32.totalorder %s112, %s115
      %p121 = scmp.eq.s32.totalorder %s18, 0
      %p122 = por %p120, %p121
      %p123 = scmp.ne.s32.totalorder %s112, %s115
      %p124 = scmp.eq.s32.totalorder %s23, 7
      %p125 = por %p123, %p124
      %p126 = scmp.ne.s32.totalorder %s115, %s116
      %p127 = scmp.eq.s32.totalorder %s23, 0
      %p128 = por %p126, %p127
      %p129 = scmp.ne.s32.totalorder %s115, %s116
      %p130 = scmp.eq.s32.totalorder %s24, 7
      %p131 = por %p129, %p130
      %p133 = scmp.ne.s32.totalorder %s116, %s132
      %p134 = scmp.eq.s32.totalorder %s24, 0
      %p135 = por %p133, %p134
      %s136 = ssub.s32 %s25, %s37
      %s137 = ssub.s32 %s26, %s33
      %s138 = sor.u32 %s136, %s137
      %p139 = scmp.eq.s32.totalorder %s138, 0
      %s141 = sadd.s32 %s140, 1
      %s142 = scalar_select %p139, %s140, %s141
      %p145 = pneg %p139
      %p146 = scmp.eq.s32.totalorder %s18, 7
      %p147 = por %p145, %p146
      %p148 = scmp.ne.s32.totalorder %s140, %s143
      %p149 = scmp.eq.s32.totalorder %s18, 0
      %p150 = por %p148, %p149
      %p151 = scmp.ne.s32.totalorder %s140, %s143
      %p152 = scmp.eq.s32.totalorder %s23, 7
      %p153 = por %p151, %p152
      %p154 = scmp.ne.s32.totalorder %s143, %s144
      %p155 = scmp.eq.s32.totalorder %s23, 0
      %p156 = por %p154, %p155
      %p157 = scmp.ne.s32.totalorder %s143, %s144
      %p158 = scmp.eq.s32.totalorder %s24, 7
      %p159 = por %p157, %p158
      %p161 = scmp.ne.s32.totalorder %s144, %s160
      %p162 = scmp.eq.s32.totalorder %s24, 0
      %p163 = por %p161, %p162
      %p164 = scmp.le.s32.totalorder 1, %s18
      %p165 = scmp.lt.s32.totalorder %s18, 9
      %p166 = pnand %p164, %p165
      %p167 = pneg %p166
      // Predicated region
      $region9: #{tpu_custom_call.1} parent=5 // pred_check
        _
      $region10: #{tpu_custom_call.1} parent=5 // pred_check_branch
        %169 = sbr.rel (%p166) target = $region12
      $region11: #{tpu_custom_call.1} parent=5 // pred_region
        %s170 = ssub.s32 %s18, 1
        // Predicated region
        $region13: #{tpu_custom_call.1} parent=11 // pred_check
          %p171 = pneg %p79
        $region14: #{tpu_custom_call.1} parent=11 // pred_check_branch
          %173 = sbr.rel (%p171) target = $region16
        $region15: #{tpu_custom_call.1} parent=11 // pred_region
          %s175 = ssub.s32 768, 768
          %176 = vsyncadd [#allocation6], %s175
          %s177 = sshll.u32 [#allocation5], 4
          %s178 = int_to_ptr.vmem [resolvable:$true] %s177
          %183 = dma.hbm_to_vmem [thread:$0]  %s1, 768, %s178, [#allocation6], 384, 384, 24
        $region16: #{tpu_custom_call.1} parent=11 // pred_fallthru
          _
        // Predicated region
        $region17: #{tpu_custom_call.1} parent=11 // pred_check
          %p184 = pneg %p100
        $region18: #{tpu_custom_call.1} parent=11 // pred_check_branch
          %186 = sbr.rel (%p184) target = $region20
        $region19: #{tpu_custom_call.1} parent=11 // pred_region
          _
        $region20: #{tpu_custom_call.1} parent=11 // pred_fallthru
          _
      $region12: #{tpu_custom_call.1} parent=5 // pred_fallthru
        _
      %p187 = scmp.lt.s32.totalorder %s18, 8
      // Predicated region
      $region21: #{tpu_custom_call.1} parent=5 // pred_check
        %p188 = pneg %p187
      $region22: #{tpu_custom_call.1} parent=5 // pred_check_branch
        %190 = sbr.rel (%p188) target = $region24
      $region23: #{tpu_custom_call.1} parent=5 // pred_region
        // Predicated region
        $region25: #{tpu_custom_call.1} parent=23 // pred_check
          %p191 = pneg %p52
        $region26: #{tpu_custom_call.1} parent=23 // pred_check_branch
          %193 = sbr.rel (%p191) target = $region28
        $region27: #{tpu_custom_call.1} parent=23 // pred_region
          %s194 = sand.u32 %s42, 1
          %s195 = scalar_lea.sflag [#allocation3], %s194
          %s196 = sand.u32 %s42, 1
          %s197 = smul.addr %s196, 5120
          %s198 = scalar_lea.vmem [#allocation2], %s197
          %s199 = smul.u32 16, %s26
          %s201 = ssub.s32 81920, 81920
          %202 = vsyncadd %s195, %s201
          %s203 = smul.addr %s25, 2560
          %s204 = sadd.s32 %s199, %s203
          %s205 = smul.addr %s204, 128
          %s206 = scalar_lea.hbm %s0, %s205
          %s207 = sshll.u32 %s198, 4
          %s208 = int_to_ptr.vmem [resolvable:$true] %s207
          %213 = dma.hbm_to_vmem [thread:$0]  %s206, 81920, %s208, %s195, 8192, 2048, 128
        $region28: #{tpu_custom_call.1} parent=23 // pred_fallthru
          _
      $region24: #{tpu_custom_call.1} parent=5 // pred_fallthru
        _
      %p214 = scmp.le.s32.totalorder 1, %s18
      %p215 = scmp.lt.s32.totalorder %s18, 9
      %p216 = pnand %p214, %p215
      %p217 = pneg %p216
      // Predicated region
      $region29: #{tpu_custom_call.1} parent=5 // pred_check
        _
      $region30: #{tpu_custom_call.1} parent=5 // pred_check_branch
        %219 = sbr.rel (%p216) target = $region32
      $region31: #{tpu_custom_call.1} parent=5 // pred_region
        %s220 = ssub.s32 %s18, 1
        %s221 = sand.u32 %s45, 1
        %s222 = scalar_lea.sflag [#allocation3], %s221
        %s223 = sand.u32 %s45, 1
        %s224 = smul.addr %s223, 5120
        %s225 = scalar_lea.vmem [#allocation2], %s224
        // Predicated region
        $region33: #{tpu_custom_call.1} parent=31 // pred_check
          %p226 = pneg %p58
        $region34: #{tpu_custom_call.1} parent=31 // pred_check_branch
          %228 = sbr.rel (%p226) target = $region36
        $region35: #{tpu_custom_call.1} parent=31 // pred_region
          %229 = dma.done %s222, 81920
        $region36: #{tpu_custom_call.1} parent=31 // pred_fallthru
          _
        // Predicated region
        $region37: #{tpu_custom_call.1} parent=31 // pred_check
          %p230 = pneg %p79
        $region38: #{tpu_custom_call.1} parent=31 // pred_check_branch
          %232 = sbr.rel (%p230) target = $region40
        $region39: #{tpu_custom_call.1} parent=31 // pred_region
          %233 = dma.done [#allocation6], 768
        $region40: #{tpu_custom_call.1} parent=31 // pred_fallthru
          _
        %s234 = sand.u32 %s45, 1
        %s235 = scalar_lea.sflag [#allocation3], %s234
        %s236 = sand.u32 %s45, 1
        %s237 = smul.addr %s236, 5120
        %s238 = scalar_lea.vmem [#allocation2], %s237
        %p239 = pneg %p58
        %p240 = pneg %p55
        %p241 = pneg %p79
        %p242 = pneg %p76
        %p243 = pneg %p100
        %p244 = pneg %p97
        %p245 = pneg %p128
        %p246 = pneg %p125
        %s247 = sand.u32 %s115, 1
        %s248 = sand.u32 %s115, 1
        %s249 = smul.addr %s248, 256
        %s250 = scalar_lea.vmem [#allocation7], %s249
        %p251 = pneg %p156
        %p252 = pneg %p153
        %s253 = sand.u32 %s143, 1
        %s254 = scalar_lea.sflag [#allocation4], %s253
        %s255 = sand.u32 %s143, 1
        %s256 = smul.addr %s255, 16
        %s257 = scalar_lea.vmem [#allocation8], %s256
        %s258 = smul.u32 16, %s28
        %s259 = smul.u32 16, %s28
        %s260 = smul.u32 16, %s28
        %v261 = vld [vmem:[%s225] sm:$0xff]
        %v262 = vld [vmem:[%s225 + $0x8] sm:$0xff]
        %v263 = vld [vmem:[%s225 + $0x10] sm:$0xff]
        %v264 = vld [vmem:[%s225 + $0x18] sm:$0xff]
        %v265 = vld [vmem:[%s225 + $0x20] sm:$0xff]
        %v266 = vld [vmem:[%s225 + $0x28] sm:$0xff]
        %v267 = vld [vmem:[%s225 + $0x30] sm:$0xff]
        %v268 = vld [vmem:[%s225 + $0x38] sm:$0xff]
        %v269 = vld [vmem:[%s225 + $0x40] sm:$0xff]
        %v270 = vld [vmem:[%s225 + $0x48] sm:$0xff]
        %v271 = vld [vmem:[%s225 + $0x50] sm:$0xff]
        %v272 = vld [vmem:[%s225 + $0x58] sm:$0xff]
        %v273 = vld [vmem:[%s225 + $0x60] sm:$0xff]
        %v274 = vld [vmem:[%s225 + $0x68] sm:$0xff]
        %v275 = vld [vmem:[%s225 + $0x70] sm:$0xff]
        %v276 = vld [vmem:[%s225 + $0x78] sm:$0xff]
        %v277 = vld [vmem:[%s225 + $0x80] sm:$0xff]
        %v278 = vld [vmem:[%s225 + $0x88] sm:$0xff]
        %v279 = vld [vmem:[%s225 + $0x90] sm:$0xff]
        %v280 = vld [vmem:[%s225 + $0x98] sm:$0xff]
        %v281 = vld [vmem:[%s225 + $0xa0] sm:$0xff]
        %v282 = vld [vmem:[%s225 + $0xa8] sm:$0xff]
        %v283 = vld [vmem:[%s225 + $0xb0] sm:$0xff]
        %v284 = vld [vmem:[%s225 + $0xb8] sm:$0xff]
        %v285 = vld [vmem:[%s225 + $0xc0] sm:$0xff]
        %v286 = vld [vmem:[%s225 + $0xc8] sm:$0xff]
        %v287 = vld [vmem:[%s225 + $0xd0] sm:$0xff]
        %v288 = vld [vmem:[%s225 + $0xd8] sm:$0xff]
        %v289 = vld [vmem:[%s225 + $0xe0] sm:$0xff]
        %v290 = vld [vmem:[%s225 + $0xe8] sm:$0xff]
        %v291 = vld [vmem:[%s225 + $0xf0] sm:$0xff]
        %v292 = vld [vmem:[%s225 + $0xf8] sm:$0xff]
        %v293 = vld [vmem:[%s225 + $0x100] sm:$0xff]
        %v294 = vld [vmem:[%s225 + $0x108] sm:$0xff]
        %v295 = vld [vmem:[%s225 + $0x110] sm:$0xff]
        %v296 = vld [vmem:[%s225 + $0x118] sm:$0xff]
        %v297 = vld [vmem:[%s225 + $0x120] sm:$0xff]
        %v298 = vld [vmem:[%s225 + $0x128] sm:$0xff]
        %v299 = vld [vmem:[%s225 + $0x130] sm:$0xff]
        %v300 = vld [vmem:[%s225 + $0x138] sm:$0xff]
        %v301 = vld [vmem:[%s225 + $0x140] sm:$0xff]
        %v302 = vld [vmem:[%s225 + $0x148] sm:$0xff]
        %v303 = vld [vmem:[%s225 + $0x150] sm:$0xff]
        %v304 = vld [vmem:[%s225 + $0x158] sm:$0xff]
        %v305 = vld [vmem:[%s225 + $0x160] sm:$0xff]
        %v306 = vld [vmem:[%s225 + $0x168] sm:$0xff]
        %v307 = vld [vmem:[%s225 + $0x170] sm:$0xff]
        %v308 = vld [vmem:[%s225 + $0x178] sm:$0xff]
        %v309 = vld [vmem:[%s225 + $0x180] sm:$0xff]
        %v310 = vld [vmem:[%s225 + $0x188] sm:$0xff]
        %v311 = vld [vmem:[%s225 + $0x190] sm:$0xff]
        %v312 = vld [vmem:[%s225 + $0x198] sm:$0xff]
        %v313 = vld [vmem:[%s225 + $0x1a0] sm:$0xff]
        %v314 = vld [vmem:[%s225 + $0x1a8] sm:$0xff]
        %v315 = vld [vmem:[%s225 + $0x1b0] sm:$0xff]
        %v316 = vld [vmem:[%s225 + $0x1b8] sm:$0xff]
        %v317 = vld [vmem:[%s225 + $0x1c0] sm:$0xff]
        %v318 = vld [vmem:[%s225 + $0x1c8] sm:$0xff]
        %v319 = vld [vmem:[%s225 + $0x1d0] sm:$0xff]
        %v320 = vld [vmem:[%s225 + $0x1d8] sm:$0xff]
        %v321 = vld [vmem:[%s225 + $0x1e0] sm:$0xff]
        %v322 = vld [vmem:[%s225 + $0x1e8] sm:$0xff]
        %v323 = vld [vmem:[%s225 + $0x1f0] sm:$0xff]
        %v324 = vld [vmem:[%s225 + $0x1f8] sm:$0xff]
        %v325 = vld [vmem:[%s225 + $0x200] sm:$0xff]
        %v326 = vld [vmem:[%s225 + $0x208] sm:$0xff]
        %v327 = vld [vmem:[%s225 + $0x210] sm:$0xff]
        %v328 = vld [vmem:[%s225 + $0x218] sm:$0xff]
        %v329 = vld [vmem:[%s225 + $0x220] sm:$0xff]
        %v330 = vld [vmem:[%s225 + $0x228] sm:$0xff]
        %v331 = vld [vmem:[%s225 + $0x230] sm:$0xff]
        %v332 = vld [vmem:[%s225 + $0x238] sm:$0xff]
        %v333 = vld [vmem:[%s225 + $0x240] sm:$0xff]
        %v334 = vld [vmem:[%s225 + $0x248] sm:$0xff]
        %v335 = vld [vmem:[%s225 + $0x250] sm:$0xff]
        %v336 = vld [vmem:[%s225 + $0x258] sm:$0xff]
        %v337 = vld [vmem:[%s225 + $0x260] sm:$0xff]
        %v338 = vld [vmem:[%s225 + $0x268] sm:$0xff]
        %v339 = vld [vmem:[%s225 + $0x270] sm:$0xff]
        %v340 = vld [vmem:[%s225 + $0x278] sm:$0xff]
        %v341 = vld [vmem:[%s225 + $0x280] sm:$0xff]
        %v342 = vld [vmem:[%s225 + $0x288] sm:$0xff]
        %v343 = vld [vmem:[%s225 + $0x290] sm:$0xff]
        %v344 = vld [vmem:[%s225 + $0x298] sm:$0xff]
        %v345 = vld [vmem:[%s225 + $0x2a0] sm:$0xff]
        %v346 = vld [vmem:[%s225 + $0x2a8] sm:$0xff]
        %v347 = vld [vmem:[%s225 + $0x2b0] sm:$0xff]
        %v348 = vld [vmem:[%s225 + $0x2b8] sm:$0xff]
        %v349 = vld [vmem:[%s225 + $0x2c0] sm:$0xff]
        %v350 = vld [vmem:[%s225 + $0x2c8] sm:$0xff]
        %v351 = vld [vmem:[%s225 + $0x2d0] sm:$0xff]
        %v352 = vld [vmem:[%s225 + $0x2d8] sm:$0xff]
        %v353 = vld [vmem:[%s225 + $0x2e0] sm:$0xff]
        %v354 = vld [vmem:[%s225 + $0x2e8] sm:$0xff]
        %v355 = vld [vmem:[%s225 + $0x2f0] sm:$0xff]
        %v356 = vld [vmem:[%s225 + $0x2f8] sm:$0xff]
        %v357 = vld [vmem:[%s225 + $0x300] sm:$0xff]
        %v358 = vld [vmem:[%s225 + $0x308] sm:$0xff]
        %v359 = vld [vmem:[%s225 + $0x310] sm:$0xff]
        %v360 = vld [vmem:[%s225 + $0x318] sm:$0xff]
        %v361 = vld [vmem:[%s225 + $0x320] sm:$0xff]
        %v362 = vld [vmem:[%s225 + $0x328] sm:$0xff]
        %v363 = vld [vmem:[%s225 + $0x330] sm:$0xff]
        %v364 = vld [vmem:[%s225 + $0x338] sm:$0xff]
        %v365 = vld [vmem:[%s225 + $0x340] sm:$0xff]
        %v366 = vld [vmem:[%s225 + $0x348] sm:$0xff]
        %v367 = vld [vmem:[%s225 + $0x350] sm:$0xff]
        %v368 = vld [vmem:[%s225 + $0x358] sm:$0xff]
        %v369 = vld [vmem:[%s225 + $0x360] sm:$0xff]
        %v370 = vld [vmem:[%s225 + $0x368] sm:$0xff]
        %v371 = vld [vmem:[%s225 + $0x370] sm:$0xff]
        %v372 = vld [vmem:[%s225 + $0x378] sm:$0xff]
        %v373 = vld [vmem:[%s225 + $0x380] sm:$0xff]
        %v374 = vld [vmem:[%s225 + $0x388] sm:$0xff]
        %v375 = vld [vmem:[%s225 + $0x390] sm:$0xff]
        %v376 = vld [vmem:[%s225 + $0x398] sm:$0xff]
        %v377 = vld [vmem:[%s225 + $0x3a0] sm:$0xff]
        %v378 = vld [vmem:[%s225 + $0x3a8] sm:$0xff]
        %v379 = vld [vmem:[%s225 + $0x3b0] sm:$0xff]
        %v380 = vld [vmem:[%s225 + $0x3b8] sm:$0xff]
        %v381 = vld [vmem:[%s225 + $0x3c0] sm:$0xff]
        %v382 = vld [vmem:[%s225 + $0x3c8] sm:$0xff]
        %v383 = vld [vmem:[%s225 + $0x3d0] sm:$0xff]
        %v384 = vld [vmem:[%s225 + $0x3d8] sm:$0xff]
        %v385 = vld [vmem:[%s225 + $0x3e0] sm:$0xff]
        %v386 = vld [vmem:[%s225 + $0x3e8] sm:$0xff]
        %v387 = vld [vmem:[%s225 + $0x3f0] sm:$0xff]
        %v388 = vld [vmem:[%s225 + $0x3f8] sm:$0xff]
        %v389 = vld [vmem:[%s225 + $0x400] sm:$0xff]
        %v390 = vld [vmem:[%s225 + $0x408] sm:$0xff]
        %v391 = vld [vmem:[%s225 + $0x410] sm:$0xff]
        %v392 = vld [vmem:[%s225 + $0x418] sm:$0xff]
        %v393 = vld [vmem:[%s225 + $0x420] sm:$0xff]
        %v394 = vld [vmem:[%s225 + $0x428] sm:$0xff]
        %v395 = vld [vmem:[%s225 + $0x430] sm:$0xff]
        %v396 = vld [vmem:[%s225 + $0x438] sm:$0xff]
        %v397 = vld [vmem:[%s225 + $0x440] sm:$0xff]
        %v398 = vld [vmem:[%s225 + $0x448] sm:$0xff]
        %v399 = vld [vmem:[%s225 + $0x450] sm:$0xff]
        %v400 = vld [vmem:[%s225 + $0x458] sm:$0xff]
        %v401 = vld [vmem:[%s225 + $0x460] sm:$0xff]
        %v402 = vld [vmem:[%s225 + $0x468] sm:$0xff]
        %v403 = vld [vmem:[%s225 + $0x470] sm:$0xff]
        %v404 = vld [vmem:[%s225 + $0x478] sm:$0xff]
        %v405 = vld [vmem:[%s225 + $0x480] sm:$0xff]
        %v406 = vld [vmem:[%s225 + $0x488] sm:$0xff]
        %v407 = vld [vmem:[%s225 + $0x490] sm:$0xff]
        %v408 = vld [vmem:[%s225 + $0x498] sm:$0xff]
        %v409 = vld [vmem:[%s225 + $0x4a0] sm:$0xff]
        %v410 = vld [vmem:[%s225 + $0x4a8] sm:$0xff]
        %v411 = vld [vmem:[%s225 + $0x4b0] sm:$0xff]
        %v412 = vld [vmem:[%s225 + $0x4b8] sm:$0xff]
        %v413 = vld [vmem:[%s225 + $0x4c0] sm:$0xff]
        %v414 = vld [vmem:[%s225 + $0x4c8] sm:$0xff]
        %v415 = vld [vmem:[%s225 + $0x4d0] sm:$0xff]
        %v416 = vld [vmem:[%s225 + $0x4d8] sm:$0xff]
        %v417 = vld [vmem:[%s225 + $0x4e0] sm:$0xff]
        %v418 = vld [vmem:[%s225 + $0x4e8] sm:$0xff]
        %v419 = vld [vmem:[%s225 + $0x4f0] sm:$0xff]
        %v420 = vld [vmem:[%s225 + $0x4f8] sm:$0xff]
        %v421 = vld [vmem:[%s225 + $0x500] sm:$0xff]
        %v422 = vld [vmem:[%s225 + $0x508] sm:$0xff]
        %v423 = vld [vmem:[%s225 + $0x510] sm:$0xff]
        %v424 = vld [vmem:[%s225 + $0x518] sm:$0xff]
        %v425 = vld [vmem:[%s225 + $0x520] sm:$0xff]
        %v426 = vld [vmem:[%s225 + $0x528] sm:$0xff]
        %v427 = vld [vmem:[%s225 + $0x530] sm:$0xff]
        %v428 = vld [vmem:[%s225 + $0x538] sm:$0xff]
        %v429 = vld [vmem:[%s225 + $0x540] sm:$0xff]
        %v430 = vld [vmem:[%s225 + $0x548] sm:$0xff]
        %v431 = vld [vmem:[%s225 + $0x550] sm:$0xff]
        %v432 = vld [vmem:[%s225 + $0x558] sm:$0xff]
        %v433 = vld [vmem:[%s225 + $0x560] sm:$0xff]
        %v434 = vld [vmem:[%s225 + $0x568] sm:$0xff]
        %v435 = vld [vmem:[%s225 + $0x570] sm:$0xff]
        %v436 = vld [vmem:[%s225 + $0x578] sm:$0xff]
        %v437 = vld [vmem:[%s225 + $0x580] sm:$0xff]
        %v438 = vld [vmem:[%s225 + $0x588] sm:$0xff]
        %v439 = vld [vmem:[%s225 + $0x590] sm:$0xff]
        %v440 = vld [vmem:[%s225 + $0x598] sm:$0xff]
        %v441 = vld [vmem:[%s225 + $0x5a0] sm:$0xff]
        %v442 = vld [vmem:[%s225 + $0x5a8] sm:$0xff]
        %v443 = vld [vmem:[%s225 + $0x5b0] sm:$0xff]
        %v444 = vld [vmem:[%s225 + $0x5b8] sm:$0xff]
        %v445 = vld [vmem:[%s225 + $0x5c0] sm:$0xff]
        %v446 = vld [vmem:[%s225 + $0x5c8] sm:$0xff]
        %v447 = vld [vmem:[%s225 + $0x5d0] sm:$0xff]
        %v448 = vld [vmem:[%s225 + $0x5d8] sm:$0xff]
        %v449 = vld [vmem:[%s225 + $0x5e0] sm:$0xff]
        %v450 = vld [vmem:[%s225 + $0x5e8] sm:$0xff]
        %v451 = vld [vmem:[%s225 + $0x5f0] sm:$0xff]
        %v452 = vld [vmem:[%s225 + $0x5f8] sm:$0xff]
        %v453 = vld [vmem:[%s225 + $0x600] sm:$0xff]
        %v454 = vld [vmem:[%s225 + $0x608] sm:$0xff]
        %v455 = vld [vmem:[%s225 + $0x610] sm:$0xff]
        %v456 = vld [vmem:[%s225 + $0x618] sm:$0xff]
        %v457 = vld [vmem:[%s225 + $0x620] sm:$0xff]
        %v458 = vld [vmem:[%s225 + $0x628] sm:$0xff]
        %v459 = vld [vmem:[%s225 + $0x630] sm:$0xff]
        %v460 = vld [vmem:[%s225 + $0x638] sm:$0xff]
        %v461 = vld [vmem:[%s225 + $0x640] sm:$0xff]
        %v462 = vld [vmem:[%s225 + $0x648] sm:$0xff]
        %v463 = vld [vmem:[%s225 + $0x650] sm:$0xff]
        %v464 = vld [vmem:[%s225 + $0x658] sm:$0xff]
        %v465 = vld [vmem:[%s225 + $0x660] sm:$0xff]
        %v466 = vld [vmem:[%s225 + $0x668] sm:$0xff]
        %v467 = vld [vmem:[%s225 + $0x670] sm:$0xff]
        %v468 = vld [vmem:[%s225 + $0x678] sm:$0xff]
        %v469 = vld [vmem:[%s225 + $0x680] sm:$0xff]
        %v470 = vld [vmem:[%s225 + $0x688] sm:$0xff]
        %v471 = vld [vmem:[%s225 + $0x690] sm:$0xff]
        %v472 = vld [vmem:[%s225 + $0x698] sm:$0xff]
        %v473 = vld [vmem:[%s225 + $0x6a0] sm:$0xff]
        %v474 = vld [vmem:[%s225 + $0x6a8] sm:$0xff]
        %v475 = vld [vmem:[%s225 + $0x6b0] sm:$0xff]
        %v476 = vld [vmem:[%s225 + $0x6b8] sm:$0xff]
        %v477 = vld [vmem:[%s225 + $0x6c0] sm:$0xff]
        %v478 = vld [vmem:[%s225 + $0x6c8] sm:$0xff]
        %v479 = vld [vmem:[%s225 + $0x6d0] sm:$0xff]
        %v480 = vld [vmem:[%s225 + $0x6d8] sm:$0xff]
        %v481 = vld [vmem:[%s225 + $0x6e0] sm:$0xff]
        %v482 = vld [vmem:[%s225 + $0x6e8] sm:$0xff]
        %v483 = vld [vmem:[%s225 + $0x6f0] sm:$0xff]
        %v484 = vld [vmem:[%s225 + $0x6f8] sm:$0xff]
        %v485 = vld [vmem:[%s225 + $0x700] sm:$0xff]
        %v486 = vld [vmem:[%s225 + $0x708] sm:$0xff]
        %v487 = vld [vmem:[%s225 + $0x710] sm:$0xff]
        %v488 = vld [vmem:[%s225 + $0x718] sm:$0xff]
        %v489 = vld [vmem:[%s225 + $0x720] sm:$0xff]
        %v490 = vld [vmem:[%s225 + $0x728] sm:$0xff]
        %v491 = vld [vmem:[%s225 + $0x730] sm:$0xff]
        %v492 = vld [vmem:[%s225 + $0x738] sm:$0xff]
        %v493 = vld [vmem:[%s225 + $0x740] sm:$0xff]
        %v494 = vld [vmem:[%s225 + $0x748] sm:$0xff]
        %v495 = vld [vmem:[%s225 + $0x750] sm:$0xff]
        %v496 = vld [vmem:[%s225 + $0x758] sm:$0xff]
        %v497 = vld [vmem:[%s225 + $0x760] sm:$0xff]
        %v498 = vld [vmem:[%s225 + $0x768] sm:$0xff]
        %v499 = vld [vmem:[%s225 + $0x770] sm:$0xff]
        %v500 = vld [vmem:[%s225 + $0x778] sm:$0xff]
        %v501 = vld [vmem:[%s225 + $0x780] sm:$0xff]
        %v502 = vld [vmem:[%s225 + $0x788] sm:$0xff]
        %v503 = vld [vmem:[%s225 + $0x790] sm:$0xff]
        %v504 = vld [vmem:[%s225 + $0x798] sm:$0xff]
        %v505 = vld [vmem:[%s225 + $0x7a0] sm:$0xff]
        %v506 = vld [vmem:[%s225 + $0x7a8] sm:$0xff]
        %v507 = vld [vmem:[%s225 + $0x7b0] sm:$0xff]
        %v508 = vld [vmem:[%s225 + $0x7b8] sm:$0xff]
        %v509 = vld [vmem:[%s225 + $0x7c0] sm:$0xff]
        %v510 = vld [vmem:[%s225 + $0x7c8] sm:$0xff]
        %v511 = vld [vmem:[%s225 + $0x7d0] sm:$0xff]
        %v512 = vld [vmem:[%s225 + $0x7d8] sm:$0xff]
        %v513 = vld [vmem:[%s225 + $0x7e0] sm:$0xff]
        %v514 = vld [vmem:[%s225 + $0x7e8] sm:$0xff]
        %v515 = vld [vmem:[%s225 + $0x7f0] sm:$0xff]
        %v516 = vld [vmem:[%s225 + $0x7f8] sm:$0xff]
        %v517 = vld [vmem:[%s225 + $0x800] sm:$0xff]
        %v518 = vld [vmem:[%s225 + $0x808] sm:$0xff]
        %v519 = vld [vmem:[%s225 + $0x810] sm:$0xff]
        %v520 = vld [vmem:[%s225 + $0x818] sm:$0xff]
        %v521 = vld [vmem:[%s225 + $0x820] sm:$0xff]
        %v522 = vld [vmem:[%s225 + $0x828] sm:$0xff]
        %v523 = vld [vmem:[%s225 + $0x830] sm:$0xff]
        %v524 = vld [vmem:[%s225 + $0x838] sm:$0xff]
        %v525 = vld [vmem:[%s225 + $0x840] sm:$0xff]
        %v526 = vld [vmem:[%s225 + $0x848] sm:$0xff]
        %v527 = vld [vmem:[%s225 + $0x850] sm:$0xff]
        %v528 = vld [vmem:[%s225 + $0x858] sm:$0xff]
        %v529 = vld [vmem:[%s225 + $0x860] sm:$0xff]
        %v530 = vld [vmem:[%s225 + $0x868] sm:$0xff]
        %v531 = vld [vmem:[%s225 + $0x870] sm:$0xff]
        %v532 = vld [vmem:[%s225 + $0x878] sm:$0xff]
        %v533 = vld [vmem:[%s225 + $0x880] sm:$0xff]
        %v534 = vld [vmem:[%s225 + $0x888] sm:$0xff]
        %v535 = vld [vmem:[%s225 + $0x890] sm:$0xff]
        %v536 = vld [vmem:[%s225 + $0x898] sm:$0xff]
        %v537 = vld [vmem:[%s225 + $0x8a0] sm:$0xff]
        %v538 = vld [vmem:[%s225 + $0x8a8] sm:$0xff]
        %v539 = vld [vmem:[%s225 + $0x8b0] sm:$0xff]
        %v540 = vld [vmem:[%s225 + $0x8b8] sm:$0xff]
        %v541 = vld [vmem:[%s225 + $0x8c0] sm:$0xff]
        %v542 = vld [vmem:[%s225 + $0x8c8] sm:$0xff]
        %v543 = vld [vmem:[%s225 + $0x8d0] sm:$0xff]
        %v544 = vld [vmem:[%s225 + $0x8d8] sm:$0xff]
        %v545 = vld [vmem:[%s225 + $0x8e0] sm:$0xff]
        %v546 = vld [vmem:[%s225 + $0x8e8] sm:$0xff]
        %v547 = vld [vmem:[%s225 + $0x8f0] sm:$0xff]
        %v548 = vld [vmem:[%s225 + $0x8f8] sm:$0xff]
        %v549 = vld [vmem:[%s225 + $0x900] sm:$0xff]
        %v550 = vld [vmem:[%s225 + $0x908] sm:$0xff]
        %v551 = vld [vmem:[%s225 + $0x910] sm:$0xff]
        %v552 = vld [vmem:[%s225 + $0x918] sm:$0xff]
        %v553 = vld [vmem:[%s225 + $0x920] sm:$0xff]
        %v554 = vld [vmem:[%s225 + $0x928] sm:$0xff]
        %v555 = vld [vmem:[%s225 + $0x930] sm:$0xff]
        %v556 = vld [vmem:[%s225 + $0x938] sm:$0xff]
        %v557 = vld [vmem:[%s225 + $0x940] sm:$0xff]
        %v558 = vld [vmem:[%s225 + $0x948] sm:$0xff]
        %v559 = vld [vmem:[%s225 + $0x950] sm:$0xff]
        %v560 = vld [vmem:[%s225 + $0x958] sm:$0xff]
        %v561 = vld [vmem:[%s225 + $0x960] sm:$0xff]
        %v562 = vld [vmem:[%s225 + $0x968] sm:$0xff]
        %v563 = vld [vmem:[%s225 + $0x970] sm:$0xff]
        %v564 = vld [vmem:[%s225 + $0x978] sm:$0xff]
        %v565 = vld [vmem:[%s225 + $0x980] sm:$0xff]
        %v566 = vld [vmem:[%s225 + $0x988] sm:$0xff]
        %v567 = vld [vmem:[%s225 + $0x990] sm:$0xff]
        %v568 = vld [vmem:[%s225 + $0x998] sm:$0xff]
        %v569 = vld [vmem:[%s225 + $0x9a0] sm:$0xff]
        %v570 = vld [vmem:[%s225 + $0x9a8] sm:$0xff]
        %v571 = vld [vmem:[%s225 + $0x9b0] sm:$0xff]
        %v572 = vld [vmem:[%s225 + $0x9b8] sm:$0xff]
        %v573 = vld [vmem:[%s225 + $0x9c0] sm:$0xff]
        %v574 = vld [vmem:[%s225 + $0x9c8] sm:$0xff]
        %v575 = vld [vmem:[%s225 + $0x9d0] sm:$0xff]
        %v576 = vld [vmem:[%s225 + $0x9d8] sm:$0xff]
        %v577 = vld [vmem:[%s225 + $0x9e0] sm:$0xff]
        %v578 = vld [vmem:[%s225 + $0x9e8] sm:$0xff]
        %v579 = vld [vmem:[%s225 + $0x9f0] sm:$0xff]
        %v580 = vld [vmem:[%s225 + $0x9f8] sm:$0xff]
        %v581 = vld [vmem:[%s225 + $0xa00] sm:$0xff]
        %v582 = vld [vmem:[%s225 + $0xa08] sm:$0xff]
        %v583 = vld [vmem:[%s225 + $0xa10] sm:$0xff]
        %v584 = vld [vmem:[%s225 + $0xa18] sm:$0xff]
        %v585 = vld [vmem:[%s225 + $0xa20] sm:$0xff]
        %v586 = vld [vmem:[%s225 + $0xa28] sm:$0xff]
        %v587 = vld [vmem:[%s225 + $0xa30] sm:$0xff]
        %v588 = vld [vmem:[%s225 + $0xa38] sm:$0xff]
        %v589 = vld [vmem:[%s225 + $0xa40] sm:$0xff]
        %v590 = vld [vmem:[%s225 + $0xa48] sm:$0xff]
        %v591 = vld [vmem:[%s225 + $0xa50] sm:$0xff]
        %v592 = vld [vmem:[%s225 + $0xa58] sm:$0xff]
        %v593 = vld [vmem:[%s225 + $0xa60] sm:$0xff]
        %v594 = vld [vmem:[%s225 + $0xa68] sm:$0xff]
        %v595 = vld [vmem:[%s225 + $0xa70] sm:$0xff]
        %v596 = vld [vmem:[%s225 + $0xa78] sm:$0xff]
        %v597 = vld [vmem:[%s225 + $0xa80] sm:$0xff]
        %v598 = vld [vmem:[%s225 + $0xa88] sm:$0xff]
        %v599 = vld [vmem:[%s225 + $0xa90] sm:$0xff]
        %v600 = vld [vmem:[%s225 + $0xa98] sm:$0xff]
        %v601 = vld [vmem:[%s225 + $0xaa0] sm:$0xff]
        %v602 = vld [vmem:[%s225 + $0xaa8] sm:$0xff]
        %v603 = vld [vmem:[%s225 + $0xab0] sm:$0xff]
        %v604 = vld [vmem:[%s225 + $0xab8] sm:$0xff]
        %v605 = vld [vmem:[%s225 + $0xac0] sm:$0xff]
        %v606 = vld [vmem:[%s225 + $0xac8] sm:$0xff]
        %v607 = vld [vmem:[%s225 + $0xad0] sm:$0xff]
        %v608 = vld [vmem:[%s225 + $0xad8] sm:$0xff]
        %v609 = vld [vmem:[%s225 + $0xae0] sm:$0xff]
        %v610 = vld [vmem:[%s225 + $0xae8] sm:$0xff]
        %v611 = vld [vmem:[%s225 + $0xaf0] sm:$0xff]
        %v612 = vld [vmem:[%s225 + $0xaf8] sm:$0xff]
        %v613 = vld [vmem:[%s225 + $0xb00] sm:$0xff]
        %v614 = vld [vmem:[%s225 + $0xb08] sm:$0xff]
        %v615 = vld [vmem:[%s225 + $0xb10] sm:$0xff]
        %v616 = vld [vmem:[%s225 + $0xb18] sm:$0xff]
        %v617 = vld [vmem:[%s225 + $0xb20] sm:$0xff]
        %v618 = vld [vmem:[%s225 + $0xb28] sm:$0xff]
        %v619 = vld [vmem:[%s225 + $0xb30] sm:$0xff]
        %v620 = vld [vmem:[%s225 + $0xb38] sm:$0xff]
        %v621 = vld [vmem:[%s225 + $0xb40] sm:$0xff]
        %v622 = vld [vmem:[%s225 + $0xb48] sm:$0xff]
        %v623 = vld [vmem:[%s225 + $0xb50] sm:$0xff]
        %v624 = vld [vmem:[%s225 + $0xb58] sm:$0xff]
        %v625 = vld [vmem:[%s225 + $0xb60] sm:$0xff]
        %v626 = vld [vmem:[%s225 + $0xb68] sm:$0xff]
        %v627 = vld [vmem:[%s225 + $0xb70] sm:$0xff]
        %v628 = vld [vmem:[%s225 + $0xb78] sm:$0xff]
        %v629 = vld [vmem:[%s225 + $0xb80] sm:$0xff]
        %v630 = vld [vmem:[%s225 + $0xb88] sm:$0xff]
        %v631 = vld [vmem:[%s225 + $0xb90] sm:$0xff]
        %v632 = vld [vmem:[%s225 + $0xb98] sm:$0xff]
        %v633 = vld [vmem:[%s225 + $0xba0] sm:$0xff]
        %v634 = vld [vmem:[%s225 + $0xba8] sm:$0xff]
        %v635 = vld [vmem:[%s225 + $0xbb0] sm:$0xff]
        %v636 = vld [vmem:[%s225 + $0xbb8] sm:$0xff]
        %v637 = vld [vmem:[%s225 + $0xbc0] sm:$0xff]
        %v638 = vld [vmem:[%s225 + $0xbc8] sm:$0xff]
        %v639 = vld [vmem:[%s225 + $0xbd0] sm:$0xff]
        %v640 = vld [vmem:[%s225 + $0xbd8] sm:$0xff]
        %v641 = vld [vmem:[%s225 + $0xbe0] sm:$0xff]
        %v642 = vld [vmem:[%s225 + $0xbe8] sm:$0xff]
        %v643 = vld [vmem:[%s225 + $0xbf0] sm:$0xff]
        %v644 = vld [vmem:[%s225 + $0xbf8] sm:$0xff]
        %v645 = vld [vmem:[%s225 + $0xc00] sm:$0xff]
        %v646 = vld [vmem:[%s225 + $0xc08] sm:$0xff]
        %v647 = vld [vmem:[%s225 + $0xc10] sm:$0xff]
        %v648 = vld [vmem:[%s225 + $0xc18] sm:$0xff]
        %v649 = vld [vmem:[%s225 + $0xc20] sm:$0xff]
        %v650 = vld [vmem:[%s225 + $0xc28] sm:$0xff]
        %v651 = vld [vmem:[%s225 + $0xc30] sm:$0xff]
        %v652 = vld [vmem:[%s225 + $0xc38] sm:$0xff]
        %v653 = vld [vmem:[%s225 + $0xc40] sm:$0xff]
        %v654 = vld [vmem:[%s225 + $0xc48] sm:$0xff]
        %v655 = vld [vmem:[%s225 + $0xc50] sm:$0xff]
        %v656 = vld [vmem:[%s225 + $0xc58] sm:$0xff]
        %v657 = vld [vmem:[%s225 + $0xc60] sm:$0xff]
        %v658 = vld [vmem:[%s225 + $0xc68] sm:$0xff]
        %v659 = vld [vmem:[%s225 + $0xc70] sm:$0xff]
        %v660 = vld [vmem:[%s225 + $0xc78] sm:$0xff]
        %v661 = vld [vmem:[%s225 + $0xc80] sm:$0xff]
        %v662 = vld [vmem:[%s225 + $0xc88] sm:$0xff]
        %v663 = vld [vmem:[%s225 + $0xc90] sm:$0xff]
        %v664 = vld [vmem:[%s225 + $0xc98] sm:$0xff]
        %v665 = vld [vmem:[%s225 + $0xca0] sm:$0xff]
        %v666 = vld [vmem:[%s225 + $0xca8] sm:$0xff]
        %v667 = vld [vmem:[%s225 + $0xcb0] sm:$0xff]
        %v668 = vld [vmem:[%s225 + $0xcb8] sm:$0xff]
        %v669 = vld [vmem:[%s225 + $0xcc0] sm:$0xff]
        %v670 = vld [vmem:[%s225 + $0xcc8] sm:$0xff]
        %v671 = vld [vmem:[%s225 + $0xcd0] sm:$0xff]
        %v672 = vld [vmem:[%s225 + $0xcd8] sm:$0xff]
        %v673 = vld [vmem:[%s225 + $0xce0] sm:$0xff]
        %v674 = vld [vmem:[%s225 + $0xce8] sm:$0xff]
        %v675 = vld [vmem:[%s225 + $0xcf0] sm:$0xff]
        %v676 = vld [vmem:[%s225 + $0xcf8] sm:$0xff]
        %v677 = vld [vmem:[%s225 + $0xd00] sm:$0xff]
        %v678 = vld [vmem:[%s225 + $0xd08] sm:$0xff]
        %v679 = vld [vmem:[%s225 + $0xd10] sm:$0xff]
        %v680 = vld [vmem:[%s225 + $0xd18] sm:$0xff]
        %v681 = vld [vmem:[%s225 + $0xd20] sm:$0xff]
        %v682 = vld [vmem:[%s225 + $0xd28] sm:$0xff]
        %v683 = vld [vmem:[%s225 + $0xd30] sm:$0xff]
        %v684 = vld [vmem:[%s225 + $0xd38] sm:$0xff]
        %v685 = vld [vmem:[%s225 + $0xd40] sm:$0xff]
        %v686 = vld [vmem:[%s225 + $0xd48] sm:$0xff]
        %v687 = vld [vmem:[%s225 + $0xd50] sm:$0xff]
        %v688 = vld [vmem:[%s225 + $0xd58] sm:$0xff]
        %v689 = vld [vmem:[%s225 + $0xd60] sm:$0xff]
        %v690 = vld [vmem:[%s225 + $0xd68] sm:$0xff]
        %v691 = vld [vmem:[%s225 + $0xd70] sm:$0xff]
        %v692 = vld [vmem:[%s225 + $0xd78] sm:$0xff]
        %v693 = vld [vmem:[%s225 + $0xd80] sm:$0xff]
        %v694 = vld [vmem:[%s225 + $0xd88] sm:$0xff]
        %v695 = vld [vmem:[%s225 + $0xd90] sm:$0xff]
        %v696 = vld [vmem:[%s225 + $0xd98] sm:$0xff]
        %v697 = vld [vmem:[%s225 + $0xda0] sm:$0xff]
        %v698 = vld [vmem:[%s225 + $0xda8] sm:$0xff]
        %v699 = vld [vmem:[%s225 + $0xdb0] sm:$0xff]
        %v700 = vld [vmem:[%s225 + $0xdb8] sm:$0xff]
        %v701 = vld [vmem:[%s225 + $0xdc0] sm:$0xff]
        %v702 = vld [vmem:[%s225 + $0xdc8] sm:$0xff]
        %v703 = vld [vmem:[%s225 + $0xdd0] sm:$0xff]
        %v704 = vld [vmem:[%s225 + $0xdd8] sm:$0xff]
        %v705 = vld [vmem:[%s225 + $0xde0] sm:$0xff]
        %v706 = vld [vmem:[%s225 + $0xde8] sm:$0xff]
        %v707 = vld [vmem:[%s225 + $0xdf0] sm:$0xff]
        %v708 = vld [vmem:[%s225 + $0xdf8] sm:$0xff]
        %v709 = vld [vmem:[%s225 + $0xe00] sm:$0xff]
        %v710 = vld [vmem:[%s225 + $0xe08] sm:$0xff]
        %v711 = vld [vmem:[%s225 + $0xe10] sm:$0xff]
        %v712 = vld [vmem:[%s225 + $0xe18] sm:$0xff]
        %v713 = vld [vmem:[%s225 + $0xe20] sm:$0xff]
        %v714 = vld [vmem:[%s225 + $0xe28] sm:$0xff]
        %v715 = vld [vmem:[%s225 + $0xe30] sm:$0xff]
        %v716 = vld [vmem:[%s225 + $0xe38] sm:$0xff]
        %v717 = vld [vmem:[%s225 + $0xe40] sm:$0xff]
        %v718 = vld [vmem:[%s225 + $0xe48] sm:$0xff]
        %v719 = vld [vmem:[%s225 + $0xe50] sm:$0xff]
        %v720 = vld [vmem:[%s225 + $0xe58] sm:$0xff]
        %v721 = vld [vmem:[%s225 + $0xe60] sm:$0xff]
        %v722 = vld [vmem:[%s225 + $0xe68] sm:$0xff]
        %v723 = vld [vmem:[%s225 + $0xe70] sm:$0xff]
        %v724 = vld [vmem:[%s225 + $0xe78] sm:$0xff]
        %v725 = vld [vmem:[%s225 + $0xe80] sm:$0xff]
        %v726 = vld [vmem:[%s225 + $0xe88] sm:$0xff]
        %v727 = vld [vmem:[%s225 + $0xe90] sm:$0xff]
        %v728 = vld [vmem:[%s225 + $0xe98] sm:$0xff]
        %v729 = vld [vmem:[%s225 + $0xea0] sm:$0xff]
        %v730 = vld [vmem:[%s225 + $0xea8] sm:$0xff]
        %v731 = vld [vmem:[%s225 + $0xeb0] sm:$0xff]
        %v732 = vld [vmem:[%s225 + $0xeb8] sm:$0xff]
        %v733 = vld [vmem:[%s225 + $0xec0] sm:$0xff]
        %v734 = vld [vmem:[%s225 + $0xec8] sm:$0xff]
        %v735 = vld [vmem:[%s225 + $0xed0] sm:$0xff]
        %v736 = vld [vmem:[%s225 + $0xed8] sm:$0xff]
        %v737 = vld [vmem:[%s225 + $0xee0] sm:$0xff]
        %v738 = vld [vmem:[%s225 + $0xee8] sm:$0xff]
        %v739 = vld [vmem:[%s225 + $0xef0] sm:$0xff]
        %v740 = vld [vmem:[%s225 + $0xef8] sm:$0xff]
        %v741 = vld [vmem:[%s225 + $0xf00] sm:$0xff]
        %v742 = vld [vmem:[%s225 + $0xf08] sm:$0xff]
        %v743 = vld [vmem:[%s225 + $0xf10] sm:$0xff]
        %v744 = vld [vmem:[%s225 + $0xf18] sm:$0xff]
        %v745 = vld [vmem:[%s225 + $0xf20] sm:$0xff]
        %v746 = vld [vmem:[%s225 + $0xf28] sm:$0xff]
        %v747 = vld [vmem:[%s225 + $0xf30] sm:$0xff]
        %v748 = vld [vmem:[%s225 + $0xf38] sm:$0xff]
        %v749 = vld [vmem:[%s225 + $0xf40] sm:$0xff]
        %v750 = vld [vmem:[%s225 + $0xf48] sm:$0xff]
        %v751 = vld [vmem:[%s225 + $0xf50] sm:$0xff]
        %v752 = vld [vmem:[%s225 + $0xf58] sm:$0xff]
        %v753 = vld [vmem:[%s225 + $0xf60] sm:$0xff]
        %v754 = vld [vmem:[%s225 + $0xf68] sm:$0xff]
        %v755 = vld [vmem:[%s225 + $0xf70] sm:$0xff]
        %v756 = vld [vmem:[%s225 + $0xf78] sm:$0xff]
        %v757 = vld [vmem:[%s225 + $0xf80] sm:$0xff]
        %v758 = vld [vmem:[%s225 + $0xf88] sm:$0xff]
        %v759 = vld [vmem:[%s225 + $0xf90] sm:$0xff]
        %v760 = vld [vmem:[%s225 + $0xf98] sm:$0xff]
        %v761 = vld [vmem:[%s225 + $0xfa0] sm:$0xff]
        %v762 = vld [vmem:[%s225 + $0xfa8] sm:$0xff]
        %v763 = vld [vmem:[%s225 + $0xfb0] sm:$0xff]
        %v764 = vld [vmem:[%s225 + $0xfb8] sm:$0xff]
        %v765 = vld [vmem:[%s225 + $0xfc0] sm:$0xff]
        %v766 = vld [vmem:[%s225 + $0xfc8] sm:$0xff]
        %v767 = vld [vmem:[%s225 + $0xfd0] sm:$0xff]
        %v768 = vld [vmem:[%s225 + $0xfd8] sm:$0xff]
        %v769 = vld [vmem:[%s225 + $0xfe0] sm:$0xff]
        %v770 = vld [vmem:[%s225 + $0xfe8] sm:$0xff]
        %v771 = vld [vmem:[%s225 + $0xff0] sm:$0xff]
        %v772 = vld [vmem:[%s225 + $0xff8] sm:$0xff]
        %v773 = vld [vmem:[%s225 + $0x1000] sm:$0xff]
        %v774 = vld [vmem:[%s225 + $0x1008] sm:$0xff]
        %v775 = vld [vmem:[%s225 + $0x1010] sm:$0xff]
        %v776 = vld [vmem:[%s225 + $0x1018] sm:$0xff]
        %v777 = vld [vmem:[%s225 + $0x1020] sm:$0xff]
        %v778 = vld [vmem:[%s225 + $0x1028] sm:$0xff]
        %v779 = vld [vmem:[%s225 + $0x1030] sm:$0xff]
        %v780 = vld [vmem:[%s225 + $0x1038] sm:$0xff]
        %v781 = vld [vmem:[%s225 + $0x1040] sm:$0xff]
        %v782 = vld [vmem:[%s225 + $0x1048] sm:$0xff]
        %v783 = vld [vmem:[%s225 + $0x1050] sm:$0xff]
        %v784 = vld [vmem:[%s225 + $0x1058] sm:$0xff]
        %v785 = vld [vmem:[%s225 + $0x1060] sm:$0xff]
        %v786 = vld [vmem:[%s225 + $0x1068] sm:$0xff]
        %v787 = vld [vmem:[%s225 + $0x1070] sm:$0xff]
        %v788 = vld [vmem:[%s225 + $0x1078] sm:$0xff]
        %v789 = vld [vmem:[%s225 + $0x1080] sm:$0xff]
        %v790 = vld [vmem:[%s225 + $0x1088] sm:$0xff]
        %v791 = vld [vmem:[%s225 + $0x1090] sm:$0xff]
        %v792 = vld [vmem:[%s225 + $0x1098] sm:$0xff]
        %v793 = vld [vmem:[%s225 + $0x10a0] sm:$0xff]
        %v794 = vld [vmem:[%s225 + $0x10a8] sm:$0xff]
        %v795 = vld [vmem:[%s225 + $0x10b0] sm:$0xff]
        %v796 = vld [vmem:[%s225 + $0x10b8] sm:$0xff]
        %v797 = vld [vmem:[%s225 + $0x10c0] sm:$0xff]
        %v798 = vld [vmem:[%s225 + $0x10c8] sm:$0xff]
        %v799 = vld [vmem:[%s225 + $0x10d0] sm:$0xff]
        %v800 = vld [vmem:[%s225 + $0x10d8] sm:$0xff]
        %v801 = vld [vmem:[%s225 + $0x10e0] sm:$0xff]
        %v802 = vld [vmem:[%s225 + $0x10e8] sm:$0xff]
        %v803 = vld [vmem:[%s225 + $0x10f0] sm:$0xff]
        %v804 = vld [vmem:[%s225 + $0x10f8] sm:$0xff]
        %v805 = vld [vmem:[%s225 + $0x1100] sm:$0xff]
        %v806 = vld [vmem:[%s225 + $0x1108] sm:$0xff]
        %v807 = vld [vmem:[%s225 + $0x1110] sm:$0xff]
        %v808 = vld [vmem:[%s225 + $0x1118] sm:$0xff]
        %v809 = vld [vmem:[%s225 + $0x1120] sm:$0xff]
        %v810 = vld [vmem:[%s225 + $0x1128] sm:$0xff]
        %v811 = vld [vmem:[%s225 + $0x1130] sm:$0xff]
        %v812 = vld [vmem:[%s225 + $0x1138] sm:$0xff]
        %v813 = vld [vmem:[%s225 + $0x1140] sm:$0xff]
        %v814 = vld [vmem:[%s225 + $0x1148] sm:$0xff]
        %v815 = vld [vmem:[%s225 + $0x1150] sm:$0xff]
        %v816 = vld [vmem:[%s225 + $0x1158] sm:$0xff]
        %v817 = vld [vmem:[%s225 + $0x1160] sm:$0xff]
        %v818 = vld [vmem:[%s225 + $0x1168] sm:$0xff]
        %v819 = vld [vmem:[%s225 + $0x1170] sm:$0xff]
        %v820 = vld [vmem:[%s225 + $0x1178] sm:$0xff]
        %v821 = vld [vmem:[%s225 + $0x1180] sm:$0xff]
        %v822 = vld [vmem:[%s225 + $0x1188] sm:$0xff]
        %v823 = vld [vmem:[%s225 + $0x1190] sm:$0xff]
        %v824 = vld [vmem:[%s225 + $0x1198] sm:$0xff]
        %v825 = vld [vmem:[%s225 + $0x11a0] sm:$0xff]
        %v826 = vld [vmem:[%s225 + $0x11a8] sm:$0xff]
        %v827 = vld [vmem:[%s225 + $0x11b0] sm:$0xff]
        %v828 = vld [vmem:[%s225 + $0x11b8] sm:$0xff]
        %v829 = vld [vmem:[%s225 + $0x11c0] sm:$0xff]
        %v830 = vld [vmem:[%s225 + $0x11c8] sm:$0xff]
        %v831 = vld [vmem:[%s225 + $0x11d0] sm:$0xff]
        %v832 = vld [vmem:[%s225 + $0x11d8] sm:$0xff]
        %v833 = vld [vmem:[%s225 + $0x11e0] sm:$0xff]
        %v834 = vld [vmem:[%s225 + $0x11e8] sm:$0xff]
        %v835 = vld [vmem:[%s225 + $0x11f0] sm:$0xff]
        %v836 = vld [vmem:[%s225 + $0x11f8] sm:$0xff]
        %v837 = vld [vmem:[%s225 + $0x1200] sm:$0xff]
        %v838 = vld [vmem:[%s225 + $0x1208] sm:$0xff]
        %v839 = vld [vmem:[%s225 + $0x1210] sm:$0xff]
        %v840 = vld [vmem:[%s225 + $0x1218] sm:$0xff]
        %v841 = vld [vmem:[%s225 + $0x1220] sm:$0xff]
        %v842 = vld [vmem:[%s225 + $0x1228] sm:$0xff]
        %v843 = vld [vmem:[%s225 + $0x1230] sm:$0xff]
        %v844 = vld [vmem:[%s225 + $0x1238] sm:$0xff]
        %v845 = vld [vmem:[%s225 + $0x1240] sm:$0xff]
        %v846 = vld [vmem:[%s225 + $0x1248] sm:$0xff]
        %v847 = vld [vmem:[%s225 + $0x1250] sm:$0xff]
        %v848 = vld [vmem:[%s225 + $0x1258] sm:$0xff]
        %v849 = vld [vmem:[%s225 + $0x1260] sm:$0xff]
        %v850 = vld [vmem:[%s225 + $0x1268] sm:$0xff]
        %v851 = vld [vmem:[%s225 + $0x1270] sm:$0xff]
        %v852 = vld [vmem:[%s225 + $0x1278] sm:$0xff]
        %v853 = vld [vmem:[%s225 + $0x1280] sm:$0xff]
        %v854 = vld [vmem:[%s225 + $0x1288] sm:$0xff]
        %v855 = vld [vmem:[%s225 + $0x1290] sm:$0xff]
        %v856 = vld [vmem:[%s225 + $0x1298] sm:$0xff]
        %v857 = vld [vmem:[%s225 + $0x12a0] sm:$0xff]
        %v858 = vld [vmem:[%s225 + $0x12a8] sm:$0xff]
        %v859 = vld [vmem:[%s225 + $0x12b0] sm:$0xff]
        %v860 = vld [vmem:[%s225 + $0x12b8] sm:$0xff]
        %v861 = vld [vmem:[%s225 + $0x12c0] sm:$0xff]
        %v862 = vld [vmem:[%s225 + $0x12c8] sm:$0xff]
        %v863 = vld [vmem:[%s225 + $0x12d0] sm:$0xff]
        %v864 = vld [vmem:[%s225 + $0x12d8] sm:$0xff]
        %v865 = vld [vmem:[%s225 + $0x12e0] sm:$0xff]
        %v866 = vld [vmem:[%s225 + $0x12e8] sm:$0xff]
        %v867 = vld [vmem:[%s225 + $0x12f0] sm:$0xff]
        %v868 = vld [vmem:[%s225 + $0x12f8] sm:$0xff]
        %v869 = vld [vmem:[%s225 + $0x1300] sm:$0xff]
        %v870 = vld [vmem:[%s225 + $0x1308] sm:$0xff]
        %v871 = vld [vmem:[%s225 + $0x1310] sm:$0xff]
        %v872 = vld [vmem:[%s225 + $0x1318] sm:$0xff]
        %v873 = vld [vmem:[%s225 + $0x1320] sm:$0xff]
        %v874 = vld [vmem:[%s225 + $0x1328] sm:$0xff]
        %v875 = vld [vmem:[%s225 + $0x1330] sm:$0xff]
        %v876 = vld [vmem:[%s225 + $0x1338] sm:$0xff]
        %v877 = vld [vmem:[%s225 + $0x1340] sm:$0xff]
        %v878 = vld [vmem:[%s225 + $0x1348] sm:$0xff]
        %v879 = vld [vmem:[%s225 + $0x1350] sm:$0xff]
        %v880 = vld [vmem:[%s225 + $0x1358] sm:$0xff]
        %v881 = vld [vmem:[%s225 + $0x1360] sm:$0xff]
        %v882 = vld [vmem:[%s225 + $0x1368] sm:$0xff]
        %v883 = vld [vmem:[%s225 + $0x1370] sm:$0xff]
        %v884 = vld [vmem:[%s225 + $0x1378] sm:$0xff]
        %v885 = vld [vmem:[%s225 + $0x1380] sm:$0xff]
        %v886 = vld [vmem:[%s225 + $0x1388] sm:$0xff]
        %v887 = vld [vmem:[%s225 + $0x1390] sm:$0xff]
        %v888 = vld [vmem:[%s225 + $0x1398] sm:$0xff]
        %v889 = vld [vmem:[%s225 + $0x13a0] sm:$0xff]
        %v890 = vld [vmem:[%s225 + $0x13a8] sm:$0xff]
        %v891 = vld [vmem:[%s225 + $0x13b0] sm:$0xff]
        %v892 = vld [vmem:[%s225 + $0x13b8] sm:$0xff]
        %v893 = vld [vmem:[%s225 + $0x13c0] sm:$0xff]
        %v894 = vld [vmem:[%s225 + $0x13c8] sm:$0xff]
        %v895 = vld [vmem:[%s225 + $0x13d0] sm:$0xff]
        %v896 = vld [vmem:[%s225 + $0x13d8] sm:$0xff]
        %v897 = vld [vmem:[%s225 + $0x13e0] sm:$0xff]
        %v898 = vld [vmem:[%s225 + $0x13e8] sm:$0xff]
        %v899 = vld [vmem:[%s225 + $0x13f0] sm:$0xff]
        %v900 = vld [vmem:[%s225 + $0x13f8] sm:$0xff]
        %v901 = vld [vmem:[#allocation5] sm:$0xff]
        %v902 = vld [vmem:[#allocation5 + $0x8] sm:$0xff]
        %v903 = vld [vmem:[#allocation5 + $0x10] sm:$0xff]
        %v904 = vld [vmem:[#allocation5 + $0x18] sm:$0xff]
        %v905 = vld [vmem:[#allocation5 + $0x20] sm:$0xff]
        %v906 = vld [vmem:[#allocation5 + $0x28] sm:$0xff]
        %v907 = vld [vmem:[%s2] sm:$0xff]
        %v908 = vld [vmem:[%s2 + $0x8] sm:$0xff]
        %910 = vset.pattern.permute.xlu0 0
        %911 = vperm.xlu0 %910, %v907
        %v912 = vpop.permute.xlu0 %911
        %915 = vset.pattern.permute.xlu0 0
        %916 = vperm.xlu0 %915, %v908
        %v917 = vpop.permute.xlu0 %916
        %vm919 = vcmask 523264
        %v921 = vsel %vm919, %v903, 0
        %v924 = vsel %vm919, %v906, 0
        %926 = vmatprep.subr.mxu0 %v502
        %927 = vmatpush1.msra.mxu0 %v501
        %928 = vmatprep.subr.mxu0 %v486
        %929 = vmatpush1.msra.mxu0 %v485
        %930 = vmatprep.subr.mxu0 %v470
        %931 = vmatpush1.msra.mxu0 %v469
        %932 = vmatprep.subr.mxu0 %v454
        %933 = vmatpush1.msra.mxu0 %v453
        %934 = vmatprep.subr.mxu0 %v438
        %935 = vmatpush1.msra.mxu0 %v437
        %936 = vmatprep.subr.mxu0 %v422
        %937 = vmatpush1.msra.mxu0 %v421
        %938 = vmatprep.subr.mxu0 %v406
        %939 = vmatpush1.msra.mxu0 %v405
        %940 = vmatprep.subr.mxu0 %v390
        %941 = vmatpush1.msra.mxu0 %v389
        %942 = vmatprep.subr.mxu0 %v374
        %943 = vmatpush1.msra.mxu0 %v373
        %944 = vmatprep.subr.mxu0 %v358
        %945 = vmatpush1.msra.mxu0 %v357
        %946 = vmatprep.subr.mxu0 %v342
        %947 = vmatpush1.msra.mxu0 %v341
        %948 = vmatprep.subr.mxu0 %v326
        %949 = vmatpush1.msra.mxu0 %v325
        %950 = vmatprep.subr.mxu0 %v310
        %951 = vmatpush1.msra.mxu0 %v309
        %952 = vmatprep.subr.mxu0 %v294
        %953 = vmatpush1.msra.mxu0 %v293
        %954 = vmatprep.subr.mxu0 %v278
        %955 = vmatpush1.msra.mxu0 %v277
        %956 = vmatprep.subr.mxu0 %v262
        %957 = vmatpush1.msra.mxu0 %v261
        %958 = vmatprep.subr.mxu0 %v758
        %959 = vmatpush2.msra.mxu0 %v757
        %960 = vmatprep.subr.mxu0 %v742
        %961 = vmatpush2.msra.mxu0 %v741
        %962 = vmatprep.subr.mxu0 %v726
        %963 = vmatpush2.msra.mxu0 %v725
        %964 = vmatprep.subr.mxu0 %v710
        %965 = vmatpush2.msra.mxu0 %v709
        %966 = vmatprep.subr.mxu0 %v694
        %967 = vmatpush2.msra.mxu0 %v693
        %968 = vmatprep.subr.mxu0 %v678
        %969 = vmatpush2.msra.mxu0 %v677
        %970 = vmatprep.subr.mxu0 %v662
        %971 = vmatpush2.msra.mxu0 %v661
        %972 = vmatprep.subr.mxu0 %v646
        %973 = vmatpush2.msra.mxu0 %v645
        %974 = vmatprep.subr.mxu0 %v630
        %975 = vmatpush2.msra.mxu0 %v629
        %976 = vmatprep.subr.mxu0 %v614
        %977 = vmatpush2.msra.mxu0 %v613
        %978 = vmatprep.subr.mxu0 %v598
        %979 = vmatpush2.msra.mxu0 %v597
        %980 = vmatprep.subr.mxu0 %v582
        %981 = vmatpush2.msra.mxu0 %v581
        %982 = vmatprep.subr.mxu0 %v566
        %983 = vmatpush2.msra.mxu0 %v565
        %984 = vmatprep.subr.mxu0 %v550
        %985 = vmatpush2.msra.mxu0 %v549
        %986 = vmatprep.subr.mxu0 %v534
        %987 = vmatpush2.msra.mxu0 %v533
        %988 = vmatprep.subr.mxu0 %v518
        %989 = vmatpush2.msra.mxu0 %v517
        %990 = vmatprep.mubr.f32.mxu0 %v902
        %991 = vmatmul.mubr.f32.gmra.mxu0 %v901
        %v992 = vpop.f32.mrf.mxu0
        %v993 = vadd.f32 %v912, %v992
        %v994 = vpop.f32.mrf.mxu0
        %v995 = vadd.f32 %v912, %v994
        %996 = vmatprep.mubr.f32.mxu0 %v905
        %997 = vmatmul.mubr.f32.gmra.mxu0 %v904
        %v998 = vpop.f32.mrf.mxu0
        %v999 = vadd.f32 %v917, %v998
        %v1000 = vpop.f32.mrf.mxu0
        %v1001 = vadd.f32 %v917, %v1000
        %1002 = vdwg.mxu0
        %1003 = vmatprep.subr.mxu0 0.0
        %1004 = vmatpush1.msra.mxu0 0.0
        %1005 = vmatprep.subr.mxu0 0.0
        %1006 = vmatpush1.msra.mxu0 0.0
        %1007 = vmatprep.subr.mxu0 0.0
        %1008 = vmatpush1.msra.mxu0 0.0
        %1009 = vmatprep.subr.mxu0 0.0
        %1010 = vmatpush1.msra.mxu0 0.0
        %1011 = vmatprep.subr.mxu0 0.0
        %1012 = vmatpush1.msra.mxu0 0.0
        %1013 = vmatprep.subr.mxu0 0.0
        %1014 = vmatpush1.msra.mxu0 0.0
        %1015 = vmatprep.subr.mxu0 0.0
        %1016 = vmatpush1.msra.mxu0 0.0
        %1017 = vmatprep.subr.mxu0 0.0
        %1018 = vmatpush1.msra.mxu0 0.0
        %1019 = vmatprep.subr.mxu0 %v886
        %1020 = vmatpush1.msra.mxu0 %v885
        %1021 = vmatprep.subr.mxu0 %v870
        %1022 = vmatpush1.msra.mxu0 %v869
        %1023 = vmatprep.subr.mxu0 %v854
        %1024 = vmatpush1.msra.mxu0 %v853
        %1025 = vmatprep.subr.mxu0 %v838
        %1026 = vmatpush1.msra.mxu0 %v837
        %1027 = vmatprep.subr.mxu0 %v822
        %1028 = vmatpush1.msra.mxu0 %v821
        %1029 = vmatprep.subr.mxu0 %v806
        %1030 = vmatpush1.msra.mxu0 %v805
        %1031 = vmatprep.subr.mxu0 %v790
        %1032 = vmatpush1.msra.mxu0 %v789
        %1033 = vmatprep.subr.mxu0 %v774
        %1034 = vmatpush1.msra.mxu0 %v773
        %1035 = vmatprep.subr.mxu0 0.0
        %1036 = vmatpush2.msra.mxu0 0.0
        %1037 = vmatprep.subr.mxu0 0.0
        %1038 = vmatpush2.msra.mxu0 0.0
        %1039 = vmatprep.subr.mxu0 0.0
        %1040 = vmatpush2.msra.mxu0 0.0
        %1041 = vmatprep.subr.mxu0 0.0
        %1042 = vmatpush2.msra.mxu0 0.0
        %1043 = vmatprep.subr.mxu0 0.0
        %1044 = vmatpush2.msra.mxu0 0.0
        %1045 = vmatprep.subr.mxu0 0.0
        %1046 = vmatpush2.msra.mxu0 0.0
        %1047 = vmatprep.subr.mxu0 0.0
        %1048 = vmatpush2.msra.mxu0 0.0
        %1049 = vmatprep.subr.mxu0 0.0
        %1050 = vmatpush2.msra.mxu0 0.0
        %1051 = vmatprep.subr.mxu0 0.0
        %1052 = vmatpush2.msra.mxu0 0.0
        %1053 = vmatprep.subr.mxu0 0.0
        %1054 = vmatpush2.msra.mxu0 0.0
        %1055 = vmatprep.subr.mxu0 0.0
        %1056 = vmatpush2.msra.mxu0 0.0
        %1057 = vmatprep.subr.mxu0 0.0
        %1058 = vmatpush2.msra.mxu0 0.0
        %1059 = vmatprep.subr.mxu0 0.0
        %1060 = vmatpush2.msra.mxu0 0.0
        %1061 = vmatprep.subr.mxu0 0.0
        %1062 = vmatpush2.msra.mxu0 0.0
        %1063 = vmatprep.subr.mxu0 0.0
        %1064 = vmatpush2.msra.mxu0 0.0
        %1065 = vmatprep.subr.mxu0 0.0
        %1066 = vmatpush2.msra.mxu0 0.0
        %1067 = vmatprep.mubr.f32.mxu0 0.0
        %1068 = vmatmul.mubr.f32.gmra.mxu0 %v921
        %v1069 = vpop.f32.mrf.mxu0
        %v1070 = vadd.f32 %v993, %v1069
        %v1071 = vpop.f32.mrf.mxu0
        %v1072 = vadd.f32 %v995, %v1071
        %1073 = vmatprep.mubr.f32.mxu0 0.0
        %1074 = vmatmul.mubr.f32.gmra.mxu0 %v924
        %v1075 = vpop.f32.mrf.mxu0
        %v1076 = vadd.f32 %v999, %v1075
        %v1077 = vpop.f32.mrf.mxu0
        %v1078 = vadd.f32 %v1001, %v1077
        %1079 = vdwg.mxu0
        %1080 = vmatprep.subr.mxu0 %v504
        %1081 = vmatpush1.msra.mxu0 %v503
        %1082 = vmatprep.subr.mxu0 %v488
        %1083 = vmatpush1.msra.mxu0 %v487
        %1084 = vmatprep.subr.mxu0 %v472
        %1085 = vmatpush1.msra.mxu0 %v471
        %1086 = vmatprep.subr.mxu0 %v456
        %1087 = vmatpush1.msra.mxu0 %v455
        %1088 = vmatprep.subr.mxu0 %v440
        %1089 = vmatpush1.msra.mxu0 %v439
        %1090 = vmatprep.subr.mxu0 %v424
        %1091 = vmatpush1.msra.mxu0 %v423
        %1092 = vmatprep.subr.mxu0 %v408
        %1093 = vmatpush1.msra.mxu0 %v407
        %1094 = vmatprep.subr.mxu0 %v392
        %1095 = vmatpush1.msra.mxu0 %v391
        %1096 = vmatprep.subr.mxu0 %v376
        %1097 = vmatpush1.msra.mxu0 %v375
        %1098 = vmatprep.subr.mxu0 %v360
        %1099 = vmatpush1.msra.mxu0 %v359
        %1100 = vmatprep.subr.mxu0 %v344
        %1101 = vmatpush1.msra.mxu0 %v343
        %1102 = vmatprep.subr.mxu0 %v328
        %1103 = vmatpush1.msra.mxu0 %v327
        %1104 = vmatprep.subr.mxu0 %v312
        %1105 = vmatpush1.msra.mxu0 %v311
        %1106 = vmatprep.subr.mxu0 %v296
        %1107 = vmatpush1.msra.mxu0 %v295
        %1108 = vmatprep.subr.mxu0 %v280
        %1109 = vmatpush1.msra.mxu0 %v279
        %1110 = vmatprep.subr.mxu0 %v264
        %1111 = vmatpush1.msra.mxu0 %v263
        %1112 = vmatprep.subr.mxu0 %v760
        %1113 = vmatpush2.msra.mxu0 %v759
        %1114 = vmatprep.subr.mxu0 %v744
        %1115 = vmatpush2.msra.mxu0 %v743
        %1116 = vmatprep.subr.mxu0 %v728
        %1117 = vmatpush2.msra.mxu0 %v727
        %1118 = vmatprep.subr.mxu0 %v712
        %1119 = vmatpush2.msra.mxu0 %v711
        %1120 = vmatprep.subr.mxu0 %v696
        %1121 = vmatpush2.msra.mxu0 %v695
        %1122 = vmatprep.subr.mxu0 %v680
        %1123 = vmatpush2.msra.mxu0 %v679
        %1124 = vmatprep.subr.mxu0 %v664
        %1125 = vmatpush2.msra.mxu0 %v663
        %1126 = vmatprep.subr.mxu0 %v648
        %1127 = vmatpush2.msra.mxu0 %v647
        %1128 = vmatprep.subr.mxu0 %v632
        %1129 = vmatpush2.msra.mxu0 %v631
        %1130 = vmatprep.subr.mxu0 %v616
        %1131 = vmatpush2.msra.mxu0 %v615
        %1132 = vmatprep.subr.mxu0 %v600
        %1133 = vmatpush2.msra.mxu0 %v599
        %1134 = vmatprep.subr.mxu0 %v584
        %1135 = vmatpush2.msra.mxu0 %v583
        %1136 = vmatprep.subr.mxu0 %v568
        %1137 = vmatpush2.msra.mxu0 %v567
        %1138 = vmatprep.subr.mxu0 %v552
        %1139 = vmatpush2.msra.mxu0 %v551
        %1140 = vmatprep.subr.mxu0 %v536
        %1141 = vmatpush2.msra.mxu0 %v535
        %1142 = vmatprep.subr.mxu0 %v520
        %1143 = vmatpush2.msra.mxu0 %v519
        %1144 = vmatprep.mubr.f32.mxu0 %v902
        %1145 = vmatmul.mubr.f32.gmra.mxu0 %v901
        %v1146 = vpop.f32.mrf.mxu0
        %v1147 = vadd.f32 %v912, %v1146
        %v1148 = vpop.f32.mrf.mxu0
        %v1149 = vadd.f32 %v912, %v1148
        %1150 = vmatprep.mubr.f32.mxu0 %v905
        %1151 = vmatmul.mubr.f32.gmra.mxu0 %v904
        %v1152 = vpop.f32.mrf.mxu0
        %v1153 = vadd.f32 %v917, %v1152
        %v1154 = vpop.f32.mrf.mxu0
        %v1155 = vadd.f32 %v917, %v1154
        %1156 = vdwg.mxu0
        %1157 = vmatprep.subr.mxu0 0.0
        %1158 = vmatpush1.msra.mxu0 0.0
        %1159 = vmatprep.subr.mxu0 0.0
        %1160 = vmatpush1.msra.mxu0 0.0
        %1161 = vmatprep.subr.mxu0 0.0
        %1162 = vmatpush1.msra.mxu0 0.0
        %1163 = vmatprep.subr.mxu0 0.0
        %1164 = vmatpush1.msra.mxu0 0.0
        %1165 = vmatprep.subr.mxu0 0.0
        %1166 = vmatpush1.msra.mxu0 0.0
        %1167 = vmatprep.subr.mxu0 0.0
        %1168 = vmatpush1.msra.mxu0 0.0
        %1169 = vmatprep.subr.mxu0 0.0
        %1170 = vmatpush1.msra.mxu0 0.0
        %1171 = vmatprep.subr.mxu0 0.0
        %1172 = vmatpush1.msra.mxu0 0.0
        %1173 = vmatprep.subr.mxu0 %v888
        %1174 = vmatpush1.msra.mxu0 %v887
        %1175 = vmatprep.subr.mxu0 %v872
        %1176 = vmatpush1.msra.mxu0 %v871
        %1177 = vmatprep.subr.mxu0 %v856
        %1178 = vmatpush1.msra.mxu0 %v855
        %1179 = vmatprep.subr.mxu0 %v840
        %1180 = vmatpush1.msra.mxu0 %v839
        %1181 = vmatprep.subr.mxu0 %v824
        %1182 = vmatpush1.msra.mxu0 %v823
        %1183 = vmatprep.subr.mxu0 %v808
        %1184 = vmatpush1.msra.mxu0 %v807
        %1185 = vmatprep.subr.mxu0 %v792
        %1186 = vmatpush1.msra.mxu0 %v791
        %1187 = vmatprep.subr.mxu0 %v776
        %1188 = vmatpush1.msra.mxu0 %v775
        %1189 = vmatprep.subr.mxu0 0.0
        %1190 = vmatpush2.msra.mxu0 0.0
        %1191 = vmatprep.subr.mxu0 0.0
        %1192 = vmatpush2.msra.mxu0 0.0
        %1193 = vmatprep.subr.mxu0 0.0
        %1194 = vmatpush2.msra.mxu0 0.0
        %1195 = vmatprep.subr.mxu0 0.0
        %1196 = vmatpush2.msra.mxu0 0.0
        %1197 = vmatprep.subr.mxu0 0.0
        %1198 = vmatpush2.msra.mxu0 0.0
        %1199 = vmatprep.subr.mxu0 0.0
        %1200 = vmatpush2.msra.mxu0 0.0
        %1201 = vmatprep.subr.mxu0 0.0
        %1202 = vmatpush2.msra.mxu0 0.0
        %1203 = vmatprep.subr.mxu0 0.0
        %1204 = vmatpush2.msra.mxu0 0.0
        %1205 = vmatprep.subr.mxu0 0.0
        %1206 = vmatpush2.msra.mxu0 0.0
        %1207 = vmatprep.subr.mxu0 0.0
        %1208 = vmatpush2.msra.mxu0 0.0
        %1209 = vmatprep.subr.mxu0 0.0
        %1210 = vmatpush2.msra.mxu0 0.0
        %1211 = vmatprep.subr.mxu0 0.0
        %1212 = vmatpush2.msra.mxu0 0.0
        %1213 = vmatprep.subr.mxu0 0.0
        %1214 = vmatpush2.msra.mxu0 0.0
        %1215 = vmatprep.subr.mxu0 0.0
        %1216 = vmatpush2.msra.mxu0 0.0
        %1217 = vmatprep.subr.mxu0 0.0
        %1218 = vmatpush2.msra.mxu0 0.0
        %1219 = vmatprep.subr.mxu0 0.0
        %1220 = vmatpush2.msra.mxu0 0.0
        %1221 = vmatprep.mubr.f32.mxu0 0.0
        %1222 = vmatmul.mubr.f32.gmra.mxu0 %v921
        %v1223 = vpop.f32.mrf.mxu0
        %v1224 = vadd.f32 %v1147, %v1223
        %v1225 = vpop.f32.mrf.mxu0
        %v1226 = vadd.f32 %v1149, %v1225
        %1227 = vmatprep.mubr.f32.mxu0 0.0
        %1228 = vmatmul.mubr.f32.gmra.mxu0 %v924
        %v1229 = vpop.f32.mrf.mxu0
        %v1230 = vadd.f32 %v1153, %v1229
        %v1231 = vpop.f32.mrf.mxu0
        %v1232 = vadd.f32 %v1155, %v1231
        %1233 = vdwg.mxu0
        %1234 = vmatprep.subr.mxu0 %v506
        %1235 = vmatpush1.msra.mxu0 %v505
        %1236 = vmatprep.subr.mxu0 %v490
        %1237 = vmatpush1.msra.mxu0 %v489
        %1238 = vmatprep.subr.mxu0 %v474
        %1239 = vmatpush1.msra.mxu0 %v473
        %1240 = vmatprep.subr.mxu0 %v458
        %1241 = vmatpush1.msra.mxu0 %v457
        %1242 = vmatprep.subr.mxu0 %v442
        %1243 = vmatpush1.msra.mxu0 %v441
        %1244 = vmatprep.subr.mxu0 %v426
        %1245 = vmatpush1.msra.mxu0 %v425
        %1246 = vmatprep.subr.mxu0 %v410
        %1247 = vmatpush1.msra.mxu0 %v409
        %1248 = vmatprep.subr.mxu0 %v394
        %1249 = vmatpush1.msra.mxu0 %v393
        %1250 = vmatprep.subr.mxu0 %v378
        %1251 = vmatpush1.msra.mxu0 %v377
        %1252 = vmatprep.subr.mxu0 %v362
        %1253 = vmatpush1.msra.mxu0 %v361
        %1254 = vmatprep.subr.mxu0 %v346
        %1255 = vmatpush1.msra.mxu0 %v345
        %1256 = vmatprep.subr.mxu0 %v330
        %1257 = vmatpush1.msra.mxu0 %v329
        %1258 = vmatprep.subr.mxu0 %v314
        %1259 = vmatpush1.msra.mxu0 %v313
        %1260 = vmatprep.subr.mxu0 %v298
        %1261 = vmatpush1.msra.mxu0 %v297
        %1262 = vmatprep.subr.mxu0 %v282
        %1263 = vmatpush1.msra.mxu0 %v281
        %1264 = vmatprep.subr.mxu0 %v266
        %1265 = vmatpush1.msra.mxu0 %v265
        %1266 = vmatprep.subr.mxu0 %v762
        %1267 = vmatpush2.msra.mxu0 %v761
        %1268 = vmatprep.subr.mxu0 %v746
        %1269 = vmatpush2.msra.mxu0 %v745
        %1270 = vmatprep.subr.mxu0 %v730
        %1271 = vmatpush2.msra.mxu0 %v729
        %1272 = vmatprep.subr.mxu0 %v714
        %1273 = vmatpush2.msra.mxu0 %v713
        %1274 = vmatprep.subr.mxu0 %v698
        %1275 = vmatpush2.msra.mxu0 %v697
        %1276 = vmatprep.subr.mxu0 %v682
        %1277 = vmatpush2.msra.mxu0 %v681
        %1278 = vmatprep.subr.mxu0 %v666
        %1279 = vmatpush2.msra.mxu0 %v665
        %1280 = vmatprep.subr.mxu0 %v650
        %1281 = vmatpush2.msra.mxu0 %v649
        %1282 = vmatprep.subr.mxu0 %v634
        %1283 = vmatpush2.msra.mxu0 %v633
        %1284 = vmatprep.subr.mxu0 %v618
        %1285 = vmatpush2.msra.mxu0 %v617
        %1286 = vmatprep.subr.mxu0 %v602
        %1287 = vmatpush2.msra.mxu0 %v601
        %1288 = vmatprep.subr.mxu0 %v586
        %1289 = vmatpush2.msra.mxu0 %v585
        %1290 = vmatprep.subr.mxu0 %v570
        %1291 = vmatpush2.msra.mxu0 %v569
        %1292 = vmatprep.subr.mxu0 %v554
        %1293 = vmatpush2.msra.mxu0 %v553
        %1294 = vmatprep.subr.mxu0 %v538
        %1295 = vmatpush2.msra.mxu0 %v537
        %1296 = vmatprep.subr.mxu0 %v522
        %1297 = vmatpush2.msra.mxu0 %v521
        %1298 = vmatprep.mubr.f32.mxu0 %v902
        %1299 = vmatmul.mubr.f32.gmra.mxu0 %v901
        %v1300 = vpop.f32.mrf.mxu0
        %v1301 = vadd.f32 %v912, %v1300
        %v1302 = vpop.f32.mrf.mxu0
        %v1303 = vadd.f32 %v912, %v1302
        %1304 = vmatprep.mubr.f32.mxu0 %v905
        %1305 = vmatmul.mubr.f32.gmra.mxu0 %v904
        %v1306 = vpop.f32.mrf.mxu0
        %v1307 = vadd.f32 %v917, %v1306
        %v1308 = vpop.f32.mrf.mxu0
        %v1309 = vadd.f32 %v917, %v1308
        %1310 = vdwg.mxu0
        %1311 = vmatprep.subr.mxu0 0.0
        %1312 = vmatpush1.msra.mxu0 0.0
        %1313 = vmatprep.subr.mxu0 0.0
        %1314 = vmatpush1.msra.mxu0 0.0
        %1315 = vmatprep.subr.mxu0 0.0
        %1316 = vmatpush1.msra.mxu0 0.0
        %1317 = vmatprep.subr.mxu0 0.0
        %1318 = vmatpush1.msra.mxu0 0.0
        %1319 = vmatprep.subr.mxu0 0.0
        %1320 = vmatpush1.msra.mxu0 0.0
        %1321 = vmatprep.subr.mxu0 0.0
        %1322 = vmatpush1.msra.mxu0 0.0
        %1323 = vmatprep.subr.mxu0 0.0
        %1324 = vmatpush1.msra.mxu0 0.0
        %1325 = vmatprep.subr.mxu0 0.0
        %1326 = vmatpush1.msra.mxu0 0.0
        %1327 = vmatprep.subr.mxu0 %v890
        %1328 = vmatpush1.msra.mxu0 %v889
        %1329 = vmatprep.subr.mxu0 %v874
        %1330 = vmatpush1.msra.mxu0 %v873
        %1331 = vmatprep.subr.mxu0 %v858
        %1332 = vmatpush1.msra.mxu0 %v857
        %1333 = vmatprep.subr.mxu0 %v842
        %1334 = vmatpush1.msra.mxu0 %v841
        %1335 = vmatprep.subr.mxu0 %v826
        %1336 = vmatpush1.msra.mxu0 %v825
        %1337 = vmatprep.subr.mxu0 %v810
        %1338 = vmatpush1.msra.mxu0 %v809
        %1339 = vmatprep.subr.mxu0 %v794
        %1340 = vmatpush1.msra.mxu0 %v793
        %1341 = vmatprep.subr.mxu0 %v778
        %1342 = vmatpush1.msra.mxu0 %v777
        %1343 = vmatprep.subr.mxu0 0.0
        %1344 = vmatpush2.msra.mxu0 0.0
        %1345 = vmatprep.subr.mxu0 0.0
        %1346 = vmatpush2.msra.mxu0 0.0
        %1347 = vmatprep.subr.mxu0 0.0
        %1348 = vmatpush2.msra.mxu0 0.0
        %1349 = vmatprep.subr.mxu0 0.0
        %1350 = vmatpush2.msra.mxu0 0.0
        %1351 = vmatprep.subr.mxu0 0.0
        %1352 = vmatpush2.msra.mxu0 0.0
        %1353 = vmatprep.subr.mxu0 0.0
        %1354 = vmatpush2.msra.mxu0 0.0
        %1355 = vmatprep.subr.mxu0 0.0
        %1356 = vmatpush2.msra.mxu0 0.0
        %1357 = vmatprep.subr.mxu0 0.0
        %1358 = vmatpush2.msra.mxu0 0.0
        %1359 = vmatprep.subr.mxu0 0.0
        %1360 = vmatpush2.msra.mxu0 0.0
        %1361 = vmatprep.subr.mxu0 0.0
        %1362 = vmatpush2.msra.mxu0 0.0
        %1363 = vmatprep.subr.mxu0 0.0
        %1364 = vmatpush2.msra.mxu0 0.0
        %1365 = vmatprep.subr.mxu0 0.0
        %1366 = vmatpush2.msra.mxu0 0.0
        %1367 = vmatprep.subr.mxu0 0.0
        %1368 = vmatpush2.msra.mxu0 0.0
        %1369 = vmatprep.subr.mxu0 0.0
        %1370 = vmatpush2.msra.mxu0 0.0
        %1371 = vmatprep.subr.mxu0 0.0
        %1372 = vmatpush2.msra.mxu0 0.0
        %1373 = vmatprep.subr.mxu0 0.0
        %1374 = vmatpush2.msra.mxu0 0.0
        %1375 = vmatprep.mubr.f32.mxu0 0.0
        %1376 = vmatmul.mubr.f32.gmra.mxu0 %v921
        %v1377 = vpop.f32.mrf.mxu0
        %v1378 = vadd.f32 %v1301, %v1377
        %v1379 = vpop.f32.mrf.mxu0
        %v1380 = vadd.f32 %v1303, %v1379
        %1381 = vmatprep.mubr.f32.mxu0 0.0
        %1382 = vmatmul.mubr.f32.gmra.mxu0 %v924
        %v1383 = vpop.f32.mrf.mxu0
        %v1384 = vadd.f32 %v1307, %v1383
        %v1385 = vpop.f32.mrf.mxu0
        %v1386 = vadd.f32 %v1309, %v1385
        %1387 = vdwg.mxu0
        %1388 = vmatprep.subr.mxu0 %v508
        %1389 = vmatpush1.msra.mxu0 %v507
        %1390 = vmatprep.subr.mxu0 %v492
        %1391 = vmatpush1.msra.mxu0 %v491
        %1392 = vmatprep.subr.mxu0 %v476
        %1393 = vmatpush1.msra.mxu0 %v475
        %1394 = vmatprep.subr.mxu0 %v460
        %1395 = vmatpush1.msra.mxu0 %v459
        %1396 = vmatprep.subr.mxu0 %v444
        %1397 = vmatpush1.msra.mxu0 %v443
        %1398 = vmatprep.subr.mxu0 %v428
        %1399 = vmatpush1.msra.mxu0 %v427
        %1400 = vmatprep.subr.mxu0 %v412
        %1401 = vmatpush1.msra.mxu0 %v411
        %1402 = vmatprep.subr.mxu0 %v396
        %1403 = vmatpush1.msra.mxu0 %v395
        %1404 = vmatprep.subr.mxu0 %v380
        %1405 = vmatpush1.msra.mxu0 %v379
        %1406 = vmatprep.subr.mxu0 %v364
        %1407 = vmatpush1.msra.mxu0 %v363
        %1408 = vmatprep.subr.mxu0 %v348
        %1409 = vmatpush1.msra.mxu0 %v347
        %1410 = vmatprep.subr.mxu0 %v332
        %1411 = vmatpush1.msra.mxu0 %v331
        %1412 = vmatprep.subr.mxu0 %v316
        %1413 = vmatpush1.msra.mxu0 %v315
        %1414 = vmatprep.subr.mxu0 %v300
        %1415 = vmatpush1.msra.mxu0 %v299
        %1416 = vmatprep.subr.mxu0 %v284
        %1417 = vmatpush1.msra.mxu0 %v283
        %1418 = vmatprep.subr.mxu0 %v268
        %1419 = vmatpush1.msra.mxu0 %v267
        %1420 = vmatprep.subr.mxu0 %v764
        %1421 = vmatpush2.msra.mxu0 %v763
        %1422 = vmatprep.subr.mxu0 %v748
        %1423 = vmatpush2.msra.mxu0 %v747
        %1424 = vmatprep.subr.mxu0 %v732
        %1425 = vmatpush2.msra.mxu0 %v731
        %1426 = vmatprep.subr.mxu0 %v716
        %1427 = vmatpush2.msra.mxu0 %v715
        %1428 = vmatprep.subr.mxu0 %v700
        %1429 = vmatpush2.msra.mxu0 %v699
        %1430 = vmatprep.subr.mxu0 %v684
        %1431 = vmatpush2.msra.mxu0 %v683
        %1432 = vmatprep.subr.mxu0 %v668
        %1433 = vmatpush2.msra.mxu0 %v667
        %1434 = vmatprep.subr.mxu0 %v652
        %1435 = vmatpush2.msra.mxu0 %v651
        %1436 = vmatprep.subr.mxu0 %v636
        %1437 = vmatpush2.msra.mxu0 %v635
        %1438 = vmatprep.subr.mxu0 %v620
        %1439 = vmatpush2.msra.mxu0 %v619
        %1440 = vmatprep.subr.mxu0 %v604
        %1441 = vmatpush2.msra.mxu0 %v603
        %1442 = vmatprep.subr.mxu0 %v588
        %1443 = vmatpush2.msra.mxu0 %v587
        %1444 = vmatprep.subr.mxu0 %v572
        %1445 = vmatpush2.msra.mxu0 %v571
        %1446 = vmatprep.subr.mxu0 %v556
        %1447 = vmatpush2.msra.mxu0 %v555
        %1448 = vmatprep.subr.mxu0 %v540
        %1449 = vmatpush2.msra.mxu0 %v539
        %1450 = vmatprep.subr.mxu0 %v524
        %1451 = vmatpush2.msra.mxu0 %v523
        %1452 = vmatprep.mubr.f32.mxu0 %v902
        %1453 = vmatmul.mubr.f32.gmra.mxu0 %v901
        %v1454 = vpop.f32.mrf.mxu0
        %v1455 = vadd.f32 %v912, %v1454
        %v1456 = vpop.f32.mrf.mxu0
        %v1457 = vadd.f32 %v912, %v1456
        %1458 = vmatprep.mubr.f32.mxu0 %v905
        %1459 = vmatmul.mubr.f32.gmra.mxu0 %v904
        %v1460 = vpop.f32.mrf.mxu0
        %v1461 = vadd.f32 %v917, %v1460
        %v1462 = vpop.f32.mrf.mxu0
        %v1463 = vadd.f32 %v917, %v1462
        %1464 = vdwg.mxu0
        %1465 = vmatprep.subr.mxu0 0.0
        %1466 = vmatpush1.msra.mxu0 0.0
        %1467 = vmatprep.subr.mxu0 0.0
        %1468 = vmatpush1.msra.mxu0 0.0
        %1469 = vmatprep.subr.mxu0 0.0
        %1470 = vmatpush1.msra.mxu0 0.0
        %1471 = vmatprep.subr.mxu0 0.0
        %1472 = vmatpush1.msra.mxu0 0.0
        %1473 = vmatprep.subr.mxu0 0.0
        %1474 = vmatpush1.msra.mxu0 0.0
        %1475 = vmatprep.subr.mxu0 0.0
        %1476 = vmatpush1.msra.mxu0 0.0
        %1477 = vmatprep.subr.mxu0 0.0
        %1478 = vmatpush1.msra.mxu0 0.0
        %1479 = vmatprep.subr.mxu0 0.0
        %1480 = vmatpush1.msra.mxu0 0.0
        %1481 = vmatprep.subr.mxu0 %v892
        %1482 = vmatpush1.msra.mxu0 %v891
        %1483 = vmatprep.subr.mxu0 %v876
        %1484 = vmatpush1.msra.mxu0 %v875
        %1485 = vmatprep.subr.mxu0 %v860
        %1486 = vmatpush1.msra.mxu0 %v859
        %1487 = vmatprep.subr.mxu0 %v844
        %1488 = vmatpush1.msra.mxu0 %v843
        %1489 = vmatprep.subr.mxu0 %v828
        %1490 = vmatpush1.msra.mxu0 %v827
        %1491 = vmatprep.subr.mxu0 %v812
        %1492 = vmatpush1.msra.mxu0 %v811
        %1493 = vmatprep.subr.mxu0 %v796
        %1494 = vmatpush1.msra.mxu0 %v795
        %1495 = vmatprep.subr.mxu0 %v780
        %1496 = vmatpush1.msra.mxu0 %v779
        %1497 = vmatprep.subr.mxu0 0.0
        %1498 = vmatpush2.msra.mxu0 0.0
        %1499 = vmatprep.subr.mxu0 0.0
        %1500 = vmatpush2.msra.mxu0 0.0
        %1501 = vmatprep.subr.mxu0 0.0
        %1502 = vmatpush2.msra.mxu0 0.0
        %1503 = vmatprep.subr.mxu0 0.0
        %1504 = vmatpush2.msra.mxu0 0.0
        %1505 = vmatprep.subr.mxu0 0.0
        %1506 = vmatpush2.msra.mxu0 0.0
        %1507 = vmatprep.subr.mxu0 0.0
        %1508 = vmatpush2.msra.mxu0 0.0
        %1509 = vmatprep.subr.mxu0 0.0
        %1510 = vmatpush2.msra.mxu0 0.0
        %1511 = vmatprep.subr.mxu0 0.0
        %1512 = vmatpush2.msra.mxu0 0.0
        %1513 = vmatprep.subr.mxu0 0.0
        %1514 = vmatpush2.msra.mxu0 0.0
        %1515 = vmatprep.subr.mxu0 0.0
        %1516 = vmatpush2.msra.mxu0 0.0
        %1517 = vmatprep.subr.mxu0 0.0
        %1518 = vmatpush2.msra.mxu0 0.0
        %1519 = vmatprep.subr.mxu0 0.0
        %1520 = vmatpush2.msra.mxu0 0.0
        %1521 = vmatprep.subr.mxu0 0.0
        %1522 = vmatpush2.msra.mxu0 0.0
        %1523 = vmatprep.subr.mxu0 0.0
        %1524 = vmatpush2.msra.mxu0 0.0
        %1525 = vmatprep.subr.mxu0 0.0
        %1526 = vmatpush2.msra.mxu0 0.0
        %1527 = vmatprep.subr.mxu0 0.0
        %1528 = vmatpush2.msra.mxu0 0.0
        %1529 = vmatprep.mubr.f32.mxu0 0.0
        %1530 = vmatmul.mubr.f32.gmra.mxu0 %v921
        %v1531 = vpop.f32.mrf.mxu0
        %v1532 = vadd.f32 %v1455, %v1531
        %v1533 = vpop.f32.mrf.mxu0
        %v1534 = vadd.f32 %v1457, %v1533
        %1535 = vmatprep.mubr.f32.mxu0 0.0
        %1536 = vmatmul.mubr.f32.gmra.mxu0 %v924
        %v1537 = vpop.f32.mrf.mxu0
        %v1538 = vadd.f32 %v1461, %v1537
        %v1539 = vpop.f32.mrf.mxu0
        %v1540 = vadd.f32 %v1463, %v1539
        %1541 = vdwg.mxu0
        %1542 = vmatprep.subr.mxu0 %v510
        %1543 = vmatpush1.msra.mxu0 %v509
        %1544 = vmatprep.subr.mxu0 %v494
        %1545 = vmatpush1.msra.mxu0 %v493
        %1546 = vmatprep.subr.mxu0 %v478
        %1547 = vmatpush1.msra.mxu0 %v477
        %1548 = vmatprep.subr.mxu0 %v462
        %1549 = vmatpush1.msra.mxu0 %v461
        %1550 = vmatprep.subr.mxu0 %v446
        %1551 = vmatpush1.msra.mxu0 %v445
        %1552 = vmatprep.subr.mxu0 %v430
        %1553 = vmatpush1.msra.mxu0 %v429
        %1554 = vmatprep.subr.mxu0 %v414
        %1555 = vmatpush1.msra.mxu0 %v413
        %1556 = vmatprep.subr.mxu0 %v398
        %1557 = vmatpush1.msra.mxu0 %v397
        %1558 = vmatprep.subr.mxu0 %v382
        %1559 = vmatpush1.msra.mxu0 %v381
        %1560 = vmatprep.subr.mxu0 %v366
        %1561 = vmatpush1.msra.mxu0 %v365
        %1562 = vmatprep.subr.mxu0 %v350
        %1563 = vmatpush1.msra.mxu0 %v349
        %1564 = vmatprep.subr.mxu0 %v334
        %1565 = vmatpush1.msra.mxu0 %v333
        %1566 = vmatprep.subr.mxu0 %v318
        %1567 = vmatpush1.msra.mxu0 %v317
        %1568 = vmatprep.subr.mxu0 %v302
        %1569 = vmatpush1.msra.mxu0 %v301
        %1570 = vmatprep.subr.mxu0 %v286
        %1571 = vmatpush1.msra.mxu0 %v285
        %1572 = vmatprep.subr.mxu0 %v270
        %1573 = vmatpush1.msra.mxu0 %v269
        %1574 = vmatprep.subr.mxu0 %v766
        %1575 = vmatpush2.msra.mxu0 %v765
        %1576 = vmatprep.subr.mxu0 %v750
        %1577 = vmatpush2.msra.mxu0 %v749
        %1578 = vmatprep.subr.mxu0 %v734
        %1579 = vmatpush2.msra.mxu0 %v733
        %1580 = vmatprep.subr.mxu0 %v718
        %1581 = vmatpush2.msra.mxu0 %v717
        %1582 = vmatprep.subr.mxu0 %v702
        %1583 = vmatpush2.msra.mxu0 %v701
        %1584 = vmatprep.subr.mxu0 %v686
        %1585 = vmatpush2.msra.mxu0 %v685
        %1586 = vmatprep.subr.mxu0 %v670
        %1587 = vmatpush2.msra.mxu0 %v669
        %1588 = vmatprep.subr.mxu0 %v654
        %1589 = vmatpush2.msra.mxu0 %v653
        %1590 = vmatprep.subr.mxu0 %v638
        %1591 = vmatpush2.msra.mxu0 %v637
        %1592 = vmatprep.subr.mxu0 %v622
        %1593 = vmatpush2.msra.mxu0 %v621
        %1594 = vmatprep.subr.mxu0 %v606
        %1595 = vmatpush2.msra.mxu0 %v605
        %1596 = vmatprep.subr.mxu0 %v590
        %1597 = vmatpush2.msra.mxu0 %v589
        %1598 = vmatprep.subr.mxu0 %v574
        %1599 = vmatpush2.msra.mxu0 %v573
        %1600 = vmatprep.subr.mxu0 %v558
        %1601 = vmatpush2.msra.mxu0 %v557
        %1602 = vmatprep.subr.mxu0 %v542
        %1603 = vmatpush2.msra.mxu0 %v541
        %1604 = vmatprep.subr.mxu0 %v526
        %1605 = vmatpush2.msra.mxu0 %v525
        %1606 = vmatprep.mubr.f32.mxu0 %v902
        %1607 = vmatmul.mubr.f32.gmra.mxu0 %v901
        %v1608 = vpop.f32.mrf.mxu0
        %v1609 = vadd.f32 %v912, %v1608
        %v1610 = vpop.f32.mrf.mxu0
        %v1611 = vadd.f32 %v912, %v1610
        %1612 = vmatprep.mubr.f32.mxu0 %v905
        %1613 = vmatmul.mubr.f32.gmra.mxu0 %v904
        %v1614 = vpop.f32.mrf.mxu0
        %v1615 = vadd.f32 %v917, %v1614
        %v1616 = vpop.f32.mrf.mxu0
        %v1617 = vadd.f32 %v917, %v1616
        %1618 = vdwg.mxu0
        %1619 = vmatprep.subr.mxu0 0.0
        %1620 = vmatpush1.msra.mxu0 0.0
        %1621 = vmatprep.subr.mxu0 0.0
        %1622 = vmatpush1.msra.mxu0 0.0
        %1623 = vmatprep.subr.mxu0 0.0
        %1624 = vmatpush1.msra.mxu0 0.0
        %1625 = vmatprep.subr.mxu0 0.0
        %1626 = vmatpush1.msra.mxu0 0.0
        %1627 = vmatprep.subr.mxu0 0.0
        %1628 = vmatpush1.msra.mxu0 0.0
        %1629 = vmatprep.subr.mxu0 0.0
        %1630 = vmatpush1.msra.mxu0 0.0
        %1631 = vmatprep.subr.mxu0 0.0
        %1632 = vmatpush1.msra.mxu0 0.0
        %1633 = vmatprep.subr.mxu0 0.0
        %1634 = vmatpush1.msra.mxu0 0.0
        %1635 = vmatprep.subr.mxu0 %v894
        %1636 = vmatpush1.msra.mxu0 %v893
        %1637 = vmatprep.subr.mxu0 %v878
        %1638 = vmatpush1.msra.mxu0 %v877
        %1639 = vmatprep.subr.mxu0 %v862
        %1640 = vmatpush1.msra.mxu0 %v861
        %1641 = vmatprep.subr.mxu0 %v846
        %1642 = vmatpush1.msra.mxu0 %v845
        %1643 = vmatprep.subr.mxu0 %v830
        %1644 = vmatpush1.msra.mxu0 %v829
        %1645 = vmatprep.subr.mxu0 %v814
        %1646 = vmatpush1.msra.mxu0 %v813
        %1647 = vmatprep.subr.mxu0 %v798
        %1648 = vmatpush1.msra.mxu0 %v797
        %1649 = vmatprep.subr.mxu0 %v782
        %1650 = vmatpush1.msra.mxu0 %v781
        %1651 = vmatprep.subr.mxu0 0.0
        %1652 = vmatpush2.msra.mxu0 0.0
        %1653 = vmatprep.subr.mxu0 0.0
        %1654 = vmatpush2.msra.mxu0 0.0
        %1655 = vmatprep.subr.mxu0 0.0
        %1656 = vmatpush2.msra.mxu0 0.0
        %1657 = vmatprep.subr.mxu0 0.0
        %1658 = vmatpush2.msra.mxu0 0.0
        %1659 = vmatprep.subr.mxu0 0.0
        %1660 = vmatpush2.msra.mxu0 0.0
        %1661 = vmatprep.subr.mxu0 0.0
        %1662 = vmatpush2.msra.mxu0 0.0
        %1663 = vmatprep.subr.mxu0 0.0
        %1664 = vmatpush2.msra.mxu0 0.0
        %1665 = vmatprep.subr.mxu0 0.0
        %1666 = vmatpush2.msra.mxu0 0.0
        %1667 = vmatprep.subr.mxu0 0.0
        %1668 = vmatpush2.msra.mxu0 0.0
        %1669 = vmatprep.subr.mxu0 0.0
        %1670 = vmatpush2.msra.mxu0 0.0
        %1671 = vmatprep.subr.mxu0 0.0
        %1672 = vmatpush2.msra.mxu0 0.0
        %1673 = vmatprep.subr.mxu0 0.0
        %1674 = vmatpush2.msra.mxu0 0.0
        %1675 = vmatprep.subr.mxu0 0.0
        %1676 = vmatpush2.msra.mxu0 0.0
        %1677 = vmatprep.subr.mxu0 0.0
        %1678 = vmatpush2.msra.mxu0 0.0
        %1679 = vmatprep.subr.mxu0 0.0
        %1680 = vmatpush2.msra.mxu0 0.0
        %1681 = vmatprep.subr.mxu0 0.0
        %1682 = vmatpush2.msra.mxu0 0.0
        %1683 = vmatprep.mubr.f32.mxu0 0.0
        %1684 = vmatmul.mubr.f32.gmra.mxu0 %v921
        %v1685 = vpop.f32.mrf.mxu0
        %v1686 = vadd.f32 %v1609, %v1685
        %v1687 = vpop.f32.mrf.mxu0
        %v1688 = vadd.f32 %v1611, %v1687
        %1689 = vmatprep.mubr.f32.mxu0 0.0
        %1690 = vmatmul.mubr.f32.gmra.mxu0 %v924
        %v1691 = vpop.f32.mrf.mxu0
        %v1692 = vadd.f32 %v1615, %v1691
        %v1693 = vpop.f32.mrf.mxu0
        %v1694 = vadd.f32 %v1617, %v1693
        %1695 = vdwg.mxu0
        %1696 = vmatprep.subr.mxu0 %v512
        %1697 = vmatpush1.msra.mxu0 %v511
        %1698 = vmatprep.subr.mxu0 %v496
        %1699 = vmatpush1.msra.mxu0 %v495
        %1700 = vmatprep.subr.mxu0 %v480
        %1701 = vmatpush1.msra.mxu0 %v479
        %1702 = vmatprep.subr.mxu0 %v464
        %1703 = vmatpush1.msra.mxu0 %v463
        %1704 = vmatprep.subr.mxu0 %v448
        %1705 = vmatpush1.msra.mxu0 %v447
        %1706 = vmatprep.subr.mxu0 %v432
        %1707 = vmatpush1.msra.mxu0 %v431
        %1708 = vmatprep.subr.mxu0 %v416
        %1709 = vmatpush1.msra.mxu0 %v415
        %1710 = vmatprep.subr.mxu0 %v400
        %1711 = vmatpush1.msra.mxu0 %v399
        %1712 = vmatprep.subr.mxu0 %v384
        %1713 = vmatpush1.msra.mxu0 %v383
        %1714 = vmatprep.subr.mxu0 %v368
        %1715 = vmatpush1.msra.mxu0 %v367
        %1716 = vmatprep.subr.mxu0 %v352
        %1717 = vmatpush1.msra.mxu0 %v351
        %1718 = vmatprep.subr.mxu0 %v336
        %1719 = vmatpush1.msra.mxu0 %v335
        %1720 = vmatprep.subr.mxu0 %v320
        %1721 = vmatpush1.msra.mxu0 %v319
        %1722 = vmatprep.subr.mxu0 %v304
        %1723 = vmatpush1.msra.mxu0 %v303
        %1724 = vmatprep.subr.mxu0 %v288
        %1725 = vmatpush1.msra.mxu0 %v287
        %1726 = vmatprep.subr.mxu0 %v272
        %1727 = vmatpush1.msra.mxu0 %v271
        %1728 = vmatprep.subr.mxu0 %v768
        %1729 = vmatpush2.msra.mxu0 %v767
        %1730 = vmatprep.subr.mxu0 %v752
        %1731 = vmatpush2.msra.mxu0 %v751
        %1732 = vmatprep.subr.mxu0 %v736
        %1733 = vmatpush2.msra.mxu0 %v735
        %1734 = vmatprep.subr.mxu0 %v720
        %1735 = vmatpush2.msra.mxu0 %v719
        %1736 = vmatprep.subr.mxu0 %v704
        %1737 = vmatpush2.msra.mxu0 %v703
        %1738 = vmatprep.subr.mxu0 %v688
        %1739 = vmatpush2.msra.mxu0 %v687
        %1740 = vmatprep.subr.mxu0 %v672
        %1741 = vmatpush2.msra.mxu0 %v671
        %1742 = vmatprep.subr.mxu0 %v656
        %1743 = vmatpush2.msra.mxu0 %v655
        %1744 = vmatprep.subr.mxu0 %v640
        %1745 = vmatpush2.msra.mxu0 %v639
        %1746 = vmatprep.subr.mxu0 %v624
        %1747 = vmatpush2.msra.mxu0 %v623
        %1748 = vmatprep.subr.mxu0 %v608
        %1749 = vmatpush2.msra.mxu0 %v607
        %1750 = vmatprep.subr.mxu0 %v592
        %1751 = vmatpush2.msra.mxu0 %v591
        %1752 = vmatprep.subr.mxu0 %v576
        %1753 = vmatpush2.msra.mxu0 %v575
        %1754 = vmatprep.subr.mxu0 %v560
        %1755 = vmatpush2.msra.mxu0 %v559
        %1756 = vmatprep.subr.mxu0 %v544
        %1757 = vmatpush2.msra.mxu0 %v543
        %1758 = vmatprep.subr.mxu0 %v528
        %1759 = vmatpush2.msra.mxu0 %v527
        %1760 = vmatprep.mubr.f32.mxu0 %v902
        %1761 = vmatmul.mubr.f32.gmra.mxu0 %v901
        %v1762 = vpop.f32.mrf.mxu0
        %v1763 = vadd.f32 %v912, %v1762
        %v1764 = vpop.f32.mrf.mxu0
        %v1765 = vadd.f32 %v912, %v1764
        %1766 = vmatprep.mubr.f32.mxu0 %v905
        %1767 = vmatmul.mubr.f32.gmra.mxu0 %v904
        %v1768 = vpop.f32.mrf.mxu0
        %v1769 = vadd.f32 %v917, %v1768
        %v1770 = vpop.f32.mrf.mxu0
        %v1771 = vadd.f32 %v917, %v1770
        %1772 = vdwg.mxu0
        %1773 = vmatprep.subr.mxu0 0.0
        %1774 = vmatpush1.msra.mxu0 0.0
        %1775 = vmatprep.subr.mxu0 0.0
        %1776 = vmatpush1.msra.mxu0 0.0
        %1777 = vmatprep.subr.mxu0 0.0
        %1778 = vmatpush1.msra.mxu0 0.0
        %1779 = vmatprep.subr.mxu0 0.0
        %1780 = vmatpush1.msra.mxu0 0.0
        %1781 = vmatprep.subr.mxu0 0.0
        %1782 = vmatpush1.msra.mxu0 0.0
        %1783 = vmatprep.subr.mxu0 0.0
        %1784 = vmatpush1.msra.mxu0 0.0
        %1785 = vmatprep.subr.mxu0 0.0
        %1786 = vmatpush1.msra.mxu0 0.0
        %1787 = vmatprep.subr.mxu0 0.0
        %1788 = vmatpush1.msra.mxu0 0.0
        %1789 = vmatprep.subr.mxu0 %v896
        %1790 = vmatpush1.msra.mxu0 %v895
        %1791 = vmatprep.subr.mxu0 %v880
        %1792 = vmatpush1.msra.mxu0 %v879
        %1793 = vmatprep.subr.mxu0 %v864
        %1794 = vmatpush1.msra.mxu0 %v863
        %1795 = vmatprep.subr.mxu0 %v848
        %1796 = vmatpush1.msra.mxu0 %v847
        %1797 = vmatprep.subr.mxu0 %v832
        %1798 = vmatpush1.msra.mxu0 %v831
        %1799 = vmatprep.subr.mxu0 %v816
        %1800 = vmatpush1.msra.mxu0 %v815
        %1801 = vmatprep.subr.mxu0 %v800
        %1802 = vmatpush1.msra.mxu0 %v799
        %1803 = vmatprep.subr.mxu0 %v784
        %1804 = vmatpush1.msra.mxu0 %v783
        %1805 = vmatprep.subr.mxu0 0.0
        %1806 = vmatpush2.msra.mxu0 0.0
        %1807 = vmatprep.subr.mxu0 0.0
        %1808 = vmatpush2.msra.mxu0 0.0
        %1809 = vmatprep.subr.mxu0 0.0
        %1810 = vmatpush2.msra.mxu0 0.0
        %1811 = vmatprep.subr.mxu0 0.0
        %1812 = vmatpush2.msra.mxu0 0.0
        %1813 = vmatprep.subr.mxu0 0.0
        %1814 = vmatpush2.msra.mxu0 0.0
        %1815 = vmatprep.subr.mxu0 0.0
        %1816 = vmatpush2.msra.mxu0 0.0
        %1817 = vmatprep.subr.mxu0 0.0
        %1818 = vmatpush2.msra.mxu0 0.0
        %1819 = vmatprep.subr.mxu0 0.0
        %1820 = vmatpush2.msra.mxu0 0.0
        %1821 = vmatprep.subr.mxu0 0.0
        %1822 = vmatpush2.msra.mxu0 0.0
        %1823 = vmatprep.subr.mxu0 0.0
        %1824 = vmatpush2.msra.mxu0 0.0
        %1825 = vmatprep.subr.mxu0 0.0
        %1826 = vmatpush2.msra.mxu0 0.0
        %1827 = vmatprep.subr.mxu0 0.0
        %1828 = vmatpush2.msra.mxu0 0.0
        %1829 = vmatprep.subr.mxu0 0.0
        %1830 = vmatpush2.msra.mxu0 0.0
        %1831 = vmatprep.subr.mxu0 0.0
        %1832 = vmatpush2.msra.mxu0 0.0
        %1833 = vmatprep.subr.mxu0 0.0
        %1834 = vmatpush2.msra.mxu0 0.0
        %1835 = vmatprep.subr.mxu0 0.0
        %1836 = vmatpush2.msra.mxu0 0.0
        %1837 = vmatprep.mubr.f32.mxu0 0.0
        %1838 = vmatmul.mubr.f32.gmra.mxu0 %v921
        %v1839 = vpop.f32.mrf.mxu0
        %v1840 = vadd.f32 %v1763, %v1839
        %v1841 = vpop.f32.mrf.mxu0
        %v1842 = vadd.f32 %v1765, %v1841
        %1843 = vmatprep.mubr.f32.mxu0 0.0
        %1844 = vmatmul.mubr.f32.gmra.mxu0 %v924
        %v1845 = vpop.f32.mrf.mxu0
        %v1846 = vadd.f32 %v1769, %v1845
        %v1847 = vpop.f32.mrf.mxu0
        %v1848 = vadd.f32 %v1771, %v1847
        %1849 = vdwg.mxu0
        %1850 = vmatprep.subr.mxu0 %v514
        %1851 = vmatpush1.msra.mxu0 %v513
        %1852 = vmatprep.subr.mxu0 %v498
        %1853 = vmatpush1.msra.mxu0 %v497
        %1854 = vmatprep.subr.mxu0 %v482
        %1855 = vmatpush1.msra.mxu0 %v481
        %1856 = vmatprep.subr.mxu0 %v466
        %1857 = vmatpush1.msra.mxu0 %v465
        %1858 = vmatprep.subr.mxu0 %v450
        %1859 = vmatpush1.msra.mxu0 %v449
        %1860 = vmatprep.subr.mxu0 %v434
        %1861 = vmatpush1.msra.mxu0 %v433
        %1862 = vmatprep.subr.mxu0 %v418
        %1863 = vmatpush1.msra.mxu0 %v417
        %1864 = vmatprep.subr.mxu0 %v402
        %1865 = vmatpush1.msra.mxu0 %v401
        %1866 = vmatprep.subr.mxu0 %v386
        %1867 = vmatpush1.msra.mxu0 %v385
        %1868 = vmatprep.subr.mxu0 %v370
        %1869 = vmatpush1.msra.mxu0 %v369
        %1870 = vmatprep.subr.mxu0 %v354
        %1871 = vmatpush1.msra.mxu0 %v353
        %1872 = vmatprep.subr.mxu0 %v338
        %1873 = vmatpush1.msra.mxu0 %v337
        %1874 = vmatprep.subr.mxu0 %v322
        %1875 = vmatpush1.msra.mxu0 %v321
        %1876 = vmatprep.subr.mxu0 %v306
        %1877 = vmatpush1.msra.mxu0 %v305
        %1878 = vmatprep.subr.mxu0 %v290
        %1879 = vmatpush1.msra.mxu0 %v289
        %1880 = vmatprep.subr.mxu0 %v274
        %1881 = vmatpush1.msra.mxu0 %v273
        %1882 = vmatprep.subr.mxu0 %v770
        %1883 = vmatpush2.msra.mxu0 %v769
        %1884 = vmatprep.subr.mxu0 %v754
        %1885 = vmatpush2.msra.mxu0 %v753
        %1886 = vmatprep.subr.mxu0 %v738
        %1887 = vmatpush2.msra.mxu0 %v737
        %1888 = vmatprep.subr.mxu0 %v722
        %1889 = vmatpush2.msra.mxu0 %v721
        %1890 = vmatprep.subr.mxu0 %v706
        %1891 = vmatpush2.msra.mxu0 %v705
        %1892 = vmatprep.subr.mxu0 %v690
        %1893 = vmatpush2.msra.mxu0 %v689
        %1894 = vmatprep.subr.mxu0 %v674
        %1895 = vmatpush2.msra.mxu0 %v673
        %1896 = vmatprep.subr.mxu0 %v658
        %1897 = vmatpush2.msra.mxu0 %v657
        %1898 = vmatprep.subr.mxu0 %v642
        %1899 = vmatpush2.msra.mxu0 %v641
        %1900 = vmatprep.subr.mxu0 %v626
        %1901 = vmatpush2.msra.mxu0 %v625
        %1902 = vmatprep.subr.mxu0 %v610
        %1903 = vmatpush2.msra.mxu0 %v609
        %1904 = vmatprep.subr.mxu0 %v594
        %1905 = vmatpush2.msra.mxu0 %v593
        %1906 = vmatprep.subr.mxu0 %v578
        %1907 = vmatpush2.msra.mxu0 %v577
        %1908 = vmatprep.subr.mxu0 %v562
        %1909 = vmatpush2.msra.mxu0 %v561
        %1910 = vmatprep.subr.mxu0 %v546
        %1911 = vmatpush2.msra.mxu0 %v545
        %1912 = vmatprep.subr.mxu0 %v530
        %1913 = vmatpush2.msra.mxu0 %v529
        %1914 = vmatprep.mubr.f32.mxu0 %v902
        %1915 = vmatmul.mubr.f32.gmra.mxu0 %v901
        %v1916 = vpop.f32.mrf.mxu0
        %v1917 = vadd.f32 %v912, %v1916
        %v1918 = vpop.f32.mrf.mxu0
        %v1919 = vadd.f32 %v912, %v1918
        %1920 = vmatprep.mubr.f32.mxu0 %v905
        %1921 = vmatmul.mubr.f32.gmra.mxu0 %v904
        %v1922 = vpop.f32.mrf.mxu0
        %v1923 = vadd.f32 %v917, %v1922
        %v1924 = vpop.f32.mrf.mxu0
        %v1925 = vadd.f32 %v917, %v1924
        %1926 = vdwg.mxu0
        %1927 = vmatprep.subr.mxu0 0.0
        %1928 = vmatpush1.msra.mxu0 0.0
        %1929 = vmatprep.subr.mxu0 0.0
        %1930 = vmatpush1.msra.mxu0 0.0
        %1931 = vmatprep.subr.mxu0 0.0
        %1932 = vmatpush1.msra.mxu0 0.0
        %1933 = vmatprep.subr.mxu0 0.0
        %1934 = vmatpush1.msra.mxu0 0.0
        %1935 = vmatprep.subr.mxu0 0.0
        %1936 = vmatpush1.msra.mxu0 0.0
        %1937 = vmatprep.subr.mxu0 0.0
        %1938 = vmatpush1.msra.mxu0 0.0
        %1939 = vmatprep.subr.mxu0 0.0
        %1940 = vmatpush1.msra.mxu0 0.0
        %1941 = vmatprep.subr.mxu0 0.0
        %1942 = vmatpush1.msra.mxu0 0.0
        %1943 = vmatprep.subr.mxu0 %v898
        %1944 = vmatpush1.msra.mxu0 %v897
        %1945 = vmatprep.subr.mxu0 %v882
        %1946 = vmatpush1.msra.mxu0 %v881
        %1947 = vmatprep.subr.mxu0 %v866
        %1948 = vmatpush1.msra.mxu0 %v865
        %1949 = vmatprep.subr.mxu0 %v850
        %1950 = vmatpush1.msra.mxu0 %v849
        %1951 = vmatprep.subr.mxu0 %v834
        %1952 = vmatpush1.msra.mxu0 %v833
        %1953 = vmatprep.subr.mxu0 %v818
        %1954 = vmatpush1.msra.mxu0 %v817
        %1955 = vmatprep.subr.mxu0 %v802
        %1956 = vmatpush1.msra.mxu0 %v801
        %1957 = vmatprep.subr.mxu0 %v786
        %1958 = vmatpush1.msra.mxu0 %v785
        %1959 = vmatprep.subr.mxu0 0.0
        %1960 = vmatpush2.msra.mxu0 0.0
        %1961 = vmatprep.subr.mxu0 0.0
        %1962 = vmatpush2.msra.mxu0 0.0
        %1963 = vmatprep.subr.mxu0 0.0
        %1964 = vmatpush2.msra.mxu0 0.0
        %1965 = vmatprep.subr.mxu0 0.0
        %1966 = vmatpush2.msra.mxu0 0.0
        %1967 = vmatprep.subr.mxu0 0.0
        %1968 = vmatpush2.msra.mxu0 0.0
        %1969 = vmatprep.subr.mxu0 0.0
        %1970 = vmatpush2.msra.mxu0 0.0
        %1971 = vmatprep.subr.mxu0 0.0
        %1972 = vmatpush2.msra.mxu0 0.0
        %1973 = vmatprep.subr.mxu0 0.0
        %1974 = vmatpush2.msra.mxu0 0.0
        %1975 = vmatprep.subr.mxu0 0.0
        %1976 = vmatpush2.msra.mxu0 0.0
        %1977 = vmatprep.subr.mxu0 0.0
        %1978 = vmatpush2.msra.mxu0 0.0
        %1979 = vmatprep.subr.mxu0 0.0
        %1980 = vmatpush2.msra.mxu0 0.0
        %1981 = vmatprep.subr.mxu0 0.0
        %1982 = vmatpush2.msra.mxu0 0.0
        %1983 = vmatprep.subr.mxu0 0.0
        %1984 = vmatpush2.msra.mxu0 0.0
        %1985 = vmatprep.subr.mxu0 0.0
        %1986 = vmatpush2.msra.mxu0 0.0
        %1987 = vmatprep.subr.mxu0 0.0
        %1988 = vmatpush2.msra.mxu0 0.0
        %1989 = vmatprep.subr.mxu0 0.0
        %1990 = vmatpush2.msra.mxu0 0.0
        %1991 = vmatprep.mubr.f32.mxu0 0.0
        %1992 = vmatmul.mubr.f32.gmra.mxu0 %v921
        %v1993 = vpop.f32.mrf.mxu0
        %v1994 = vadd.f32 %v1917, %v1993
        %v1995 = vpop.f32.mrf.mxu0
        %v1996 = vadd.f32 %v1919, %v1995
        %1997 = vmatprep.mubr.f32.mxu0 0.0
        %1998 = vmatmul.mubr.f32.gmra.mxu0 %v924
        %v1999 = vpop.f32.mrf.mxu0
        %v2000 = vadd.f32 %v1923, %v1999
        %v2001 = vpop.f32.mrf.mxu0
        %v2002 = vadd.f32 %v1925, %v2001
        %2003 = vdwg.mxu0
        %2004 = vmatprep.subr.mxu0 %v516
        %2005 = vmatpush1.msra.mxu0 %v515
        %2006 = vmatprep.subr.mxu0 %v500
        %2007 = vmatpush1.msra.mxu0 %v499
        %2008 = vmatprep.subr.mxu0 %v484
        %2009 = vmatpush1.msra.mxu0 %v483
        %2010 = vmatprep.subr.mxu0 %v468
        %2011 = vmatpush1.msra.mxu0 %v467
        %2012 = vmatprep.subr.mxu0 %v452
        %2013 = vmatpush1.msra.mxu0 %v451
        %2014 = vmatprep.subr.mxu0 %v436
        %2015 = vmatpush1.msra.mxu0 %v435
        %2016 = vmatprep.subr.mxu0 %v420
        %2017 = vmatpush1.msra.mxu0 %v419
        %2018 = vmatprep.subr.mxu0 %v404
        %2019 = vmatpush1.msra.mxu0 %v403
        %2020 = vmatprep.subr.mxu0 %v388
        %2021 = vmatpush1.msra.mxu0 %v387
        %2022 = vmatprep.subr.mxu0 %v372
        %2023 = vmatpush1.msra.mxu0 %v371
        %2024 = vmatprep.subr.mxu0 %v356
        %2025 = vmatpush1.msra.mxu0 %v355
        %2026 = vmatprep.subr.mxu0 %v340
        %2027 = vmatpush1.msra.mxu0 %v339
        %2028 = vmatprep.subr.mxu0 %v324
        %2029 = vmatpush1.msra.mxu0 %v323
        %2030 = vmatprep.subr.mxu0 %v308
        %2031 = vmatpush1.msra.mxu0 %v307
        %2032 = vmatprep.subr.mxu0 %v292
        %2033 = vmatpush1.msra.mxu0 %v291
        %2034 = vmatprep.subr.mxu0 %v276
        %2035 = vmatpush1.msra.mxu0 %v275
        %2036 = vmatprep.subr.mxu0 %v772
        %2037 = vmatpush2.msra.mxu0 %v771
        %2038 = vmatprep.subr.mxu0 %v756
        %2039 = vmatpush2.msra.mxu0 %v755
        %2040 = vmatprep.subr.mxu0 %v740
        %2041 = vmatpush2.msra.mxu0 %v739
        %2042 = vmatprep.subr.mxu0 %v724
        %2043 = vmatpush2.msra.mxu0 %v723
        %2044 = vmatprep.subr.mxu0 %v708
        %2045 = vmatpush2.msra.mxu0 %v707
        %2046 = vmatprep.subr.mxu0 %v692
        %2047 = vmatpush2.msra.mxu0 %v691
        %2048 = vmatprep.subr.mxu0 %v676
        %2049 = vmatpush2.msra.mxu0 %v675
        %2050 = vmatprep.subr.mxu0 %v660
        %2051 = vmatpush2.msra.mxu0 %v659
        %2052 = vmatprep.subr.mxu0 %v644
        %2053 = vmatpush2.msra.mxu0 %v643
        %2054 = vmatprep.subr.mxu0 %v628
        %2055 = vmatpush2.msra.mxu0 %v627
        %2056 = vmatprep.subr.mxu0 %v612
        %2057 = vmatpush2.msra.mxu0 %v611
        %2058 = vmatprep.subr.mxu0 %v596
        %2059 = vmatpush2.msra.mxu0 %v595
        %2060 = vmatprep.subr.mxu0 %v580
        %2061 = vmatpush2.msra.mxu0 %v579
        %2062 = vmatprep.subr.mxu0 %v564
        %2063 = vmatpush2.msra.mxu0 %v563
        %2064 = vmatprep.subr.mxu0 %v548
        %2065 = vmatpush2.msra.mxu0 %v547
        %2066 = vmatprep.subr.mxu0 %v532
        %2067 = vmatpush2.msra.mxu0 %v531
        %2068 = vmatprep.mubr.f32.mxu0 %v902
        %2069 = vmatmul.mubr.f32.gmra.mxu0 %v901
        %v2070 = vpop.f32.mrf.mxu0
        %v2071 = vadd.f32 %v912, %v2070
        %v2072 = vpop.f32.mrf.mxu0
        %v2073 = vadd.f32 %v912, %v2072
        %2074 = vmatprep.mubr.f32.mxu0 %v905
        %2075 = vmatmul.mubr.f32.gmra.mxu0 %v904
        %v2076 = vpop.f32.mrf.mxu0
        %v2077 = vadd.f32 %v917, %v2076
        %v2078 = vpop.f32.mrf.mxu0
        %v2079 = vadd.f32 %v917, %v2078
        %2080 = vdwg.mxu0
        %2081 = vmatprep.subr.mxu0 0.0
        %2082 = vmatpush1.msra.mxu0 0.0
        %2083 = vmatprep.subr.mxu0 0.0
        %2084 = vmatpush1.msra.mxu0 0.0
        %2085 = vmatprep.subr.mxu0 0.0
        %2086 = vmatpush1.msra.mxu0 0.0
        %2087 = vmatprep.subr.mxu0 0.0
        %2088 = vmatpush1.msra.mxu0 0.0
        %2089 = vmatprep.subr.mxu0 0.0
        %2090 = vmatpush1.msra.mxu0 0.0
        %2091 = vmatprep.subr.mxu0 0.0
        %2092 = vmatpush1.msra.mxu0 0.0
        %2093 = vmatprep.subr.mxu0 0.0
        %2094 = vmatpush1.msra.mxu0 0.0
        %2095 = vmatprep.subr.mxu0 0.0
        %2096 = vmatpush1.msra.mxu0 0.0
        %2097 = vmatprep.subr.mxu0 %v900
        %2098 = vmatpush1.msra.mxu0 %v899
        %2099 = vmatprep.subr.mxu0 %v884
        %2100 = vmatpush1.msra.mxu0 %v883
        %2101 = vmatprep.subr.mxu0 %v868
        %2102 = vmatpush1.msra.mxu0 %v867
        %2103 = vmatprep.subr.mxu0 %v852
        %2104 = vmatpush1.msra.mxu0 %v851
        %2105 = vmatprep.subr.mxu0 %v836
        %2106 = vmatpush1.msra.mxu0 %v835
        %2107 = vmatprep.subr.mxu0 %v820
        %2108 = vmatpush1.msra.mxu0 %v819
        %2109 = vmatprep.subr.mxu0 %v804
        %2110 = vmatpush1.msra.mxu0 %v803
        %2111 = vmatprep.subr.mxu0 %v788
        %2112 = vmatpush1.msra.mxu0 %v787
        %2113 = vmatprep.subr.mxu0 0.0
        %2114 = vmatpush2.msra.mxu0 0.0
        %2115 = vmatprep.subr.mxu0 0.0
        %2116 = vmatpush2.msra.mxu0 0.0
        %2117 = vmatprep.subr.mxu0 0.0
        %2118 = vmatpush2.msra.mxu0 0.0
        %2119 = vmatprep.subr.mxu0 0.0
        %2120 = vmatpush2.msra.mxu0 0.0
        %2121 = vmatprep.subr.mxu0 0.0
        %2122 = vmatpush2.msra.mxu0 0.0
        %2123 = vmatprep.subr.mxu0 0.0
        %2124 = vmatpush2.msra.mxu0 0.0
        %2125 = vmatprep.subr.mxu0 0.0
        %2126 = vmatpush2.msra.mxu0 0.0
        %2127 = vmatprep.subr.mxu0 0.0
        %2128 = vmatpush2.msra.mxu0 0.0
        %2129 = vmatprep.subr.mxu0 0.0
        %2130 = vmatpush2.msra.mxu0 0.0
        %2131 = vmatprep.subr.mxu0 0.0
        %2132 = vmatpush2.msra.mxu0 0.0
        %2133 = vmatprep.subr.mxu0 0.0
        %2134 = vmatpush2.msra.mxu0 0.0
        %2135 = vmatprep.subr.mxu0 0.0
        %2136 = vmatpush2.msra.mxu0 0.0
        %2137 = vmatprep.subr.mxu0 0.0
        %2138 = vmatpush2.msra.mxu0 0.0
        %2139 = vmatprep.subr.mxu0 0.0
        %2140 = vmatpush2.msra.mxu0 0.0
        %2141 = vmatprep.subr.mxu0 0.0
        %2142 = vmatpush2.msra.mxu0 0.0
        %2143 = vmatprep.subr.mxu0 0.0
        %2144 = vmatpush2.msra.mxu0 0.0
        %2145 = vmatprep.mubr.f32.mxu0 0.0
        %2146 = vmatmul.mubr.f32.gmra.mxu0 %v921
        %v2147 = vpop.f32.mrf.mxu0
        %v2148 = vadd.f32 %v2071, %v2147
        %v2149 = vpop.f32.mrf.mxu0
        %v2150 = vadd.f32 %v2073, %v2149
        %2151 = vmatprep.mubr.f32.mxu0 0.0
        %2152 = vmatmul.mubr.f32.gmra.mxu0 %v924
        %v2153 = vpop.f32.mrf.mxu0
        %v2154 = vadd.f32 %v2077, %v2153
        %v2155 = vpop.f32.mrf.mxu0
        %v2156 = vadd.f32 %v2079, %v2155
        %2157 = vdwg.mxu0
        %v2158 = vand.u32 2147483647, %v1070
        %v2159 = vand.u32 2147483647, %v1072
        %v2160 = vand.u32 2147483647, %v1224
        %v2161 = vand.u32 2147483647, %v1226
        %v2162 = vand.u32 2147483647, %v1378
        %v2163 = vand.u32 2147483647, %v1380
        %v2164 = vand.u32 2147483647, %v1532
        %v2165 = vand.u32 2147483647, %v1534
        %v2166 = vand.u32 2147483647, %v1686
        %v2167 = vand.u32 2147483647, %v1688
        %v2168 = vand.u32 2147483647, %v1840
        %v2169 = vand.u32 2147483647, %v1842
        %v2170 = vand.u32 2147483647, %v1994
        %v2171 = vand.u32 2147483647, %v1996
        %v2172 = vand.u32 2147483647, %v2148
        %v2173 = vand.u32 2147483647, %v2150
        %v2174 = vsub.f32 0.0, %v2158
        %v2175 = vsub.f32 0.0, %v2159
        %v2176 = vsub.f32 0.0, %v2160
        %v2177 = vsub.f32 0.0, %v2161
        %v2178 = vsub.f32 0.0, %v2162
        %v2179 = vsub.f32 0.0, %v2163
        %v2180 = vsub.f32 0.0, %v2164
        %v2181 = vsub.f32 0.0, %v2165
        %v2182 = vsub.f32 0.0, %v2166
        %v2183 = vsub.f32 0.0, %v2167
        %v2184 = vsub.f32 0.0, %v2168
        %v2185 = vsub.f32 0.0, %v2169
        %v2186 = vsub.f32 0.0, %v2170
        %v2187 = vsub.f32 0.0, %v2171
        %v2188 = vsub.f32 0.0, %v2172
        %v2189 = vsub.f32 0.0, %v2173
        %v2190 = vmul.f32 %v2174, 1.442695
        %v2191 = vpow.pop %v2190
        %v2192 = vmul.f32 %v2175, 1.442695
        %v2193 = vpow.pop %v2192
        %v2194 = vmul.f32 %v2176, 1.442695
        %v2195 = vpow.pop %v2194
        %v2196 = vmul.f32 %v2177, 1.442695
        %v2197 = vpow.pop %v2196
        %v2198 = vmul.f32 %v2178, 1.442695
        %v2199 = vpow.pop %v2198
        %v2200 = vmul.f32 %v2179, 1.442695
        %v2201 = vpow.pop %v2200
        %v2202 = vmul.f32 %v2180, 1.442695
        %v2203 = vpow.pop %v2202
        %v2204 = vmul.f32 %v2181, 1.442695
        %v2205 = vpow.pop %v2204
        %v2206 = vmul.f32 %v2182, 1.442695
        %v2207 = vpow.pop %v2206
        %v2208 = vmul.f32 %v2183, 1.442695
        %v2209 = vpow.pop %v2208
        %v2210 = vmul.f32 %v2184, 1.442695
        %v2211 = vpow.pop %v2210
        %v2212 = vmul.f32 %v2185, 1.442695
        %v2213 = vpow.pop %v2212
        %v2214 = vmul.f32 %v2186, 1.442695
        %v2215 = vpow.pop %v2214
        %v2216 = vmul.f32 %v2187, 1.442695
        %v2217 = vpow.pop %v2216
        %v2218 = vmul.f32 %v2188, 1.442695
        %v2219 = vpow.pop %v2218
        %v2220 = vmul.f32 %v2189, 1.442695
        %v2221 = vpow.pop %v2220
        %v2222 = vadd.f32 %v2191, 1.0
        %v2223 = vadd.f32 %v2193, 1.0
        %v2224 = vadd.f32 %v2195, 1.0
        %v2225 = vadd.f32 %v2197, 1.0
        %v2226 = vadd.f32 %v2199, 1.0
        %v2227 = vadd.f32 %v2201, 1.0
        %v2228 = vadd.f32 %v2203, 1.0
        %v2229 = vadd.f32 %v2205, 1.0
        %v2230 = vadd.f32 %v2207, 1.0
        %v2231 = vadd.f32 %v2209, 1.0
        %v2232 = vadd.f32 %v2211, 1.0
        %v2233 = vadd.f32 %v2213, 1.0
        %v2234 = vadd.f32 %v2215, 1.0
        %v2235 = vadd.f32 %v2217, 1.0
        %v2236 = vadd.f32 %v2219, 1.0
        %v2237 = vadd.f32 %v2221, 1.0
        %v2238 = vrcp.pop %v2222
        %v2239 = vrcp.pop %v2223
        %v2240 = vrcp.pop %v2224
        %v2241 = vrcp.pop %v2225
        %v2242 = vrcp.pop %v2226
        %v2243 = vrcp.pop %v2227
        %v2244 = vrcp.pop %v2228
        %v2245 = vrcp.pop %v2229
        %v2246 = vrcp.pop %v2230
        %v2247 = vrcp.pop %v2231
        %v2248 = vrcp.pop %v2232
        %v2249 = vrcp.pop %v2233
        %v2250 = vrcp.pop %v2234
        %v2251 = vrcp.pop %v2235
        %v2252 = vrcp.pop %v2236
        %v2253 = vrcp.pop %v2237
        %vm2254 = vcmp.ge.f32.partialorder %v1070, 0.0
        %vm2255 = vcmp.ge.f32.partialorder %v1072, 0.0
        %vm2256 = vcmp.ge.f32.partialorder %v1224, 0.0
        %vm2257 = vcmp.ge.f32.partialorder %v1226, 0.0
        %vm2258 = vcmp.ge.f32.partialorder %v1378, 0.0
        %vm2259 = vcmp.ge.f32.partialorder %v1380, 0.0
        %vm2260 = vcmp.ge.f32.partialorder %v1532, 0.0
        %vm2261 = vcmp.ge.f32.partialorder %v1534, 0.0
        %vm2262 = vcmp.ge.f32.partialorder %v1686, 0.0
        %vm2263 = vcmp.ge.f32.partialorder %v1688, 0.0
        %vm2264 = vcmp.ge.f32.partialorder %v1840, 0.0
        %vm2265 = vcmp.ge.f32.partialorder %v1842, 0.0
        %vm2266 = vcmp.ge.f32.partialorder %v1994, 0.0
        %vm2267 = vcmp.ge.f32.partialorder %v1996, 0.0
        %vm2268 = vcmp.ge.f32.partialorder %v2148, 0.0
        %vm2269 = vcmp.ge.f32.partialorder %v2150, 0.0
        %v2270 = vsel %vm2254, 1.0, %v2191
        %v2271 = vsel %vm2255, 1.0, %v2193
        %v2272 = vsel %vm2256, 1.0, %v2195
        %v2273 = vsel %vm2257, 1.0, %v2197
        %v2274 = vsel %vm2258, 1.0, %v2199
        %v2275 = vsel %vm2259, 1.0, %v2201
        %v2276 = vsel %vm2260, 1.0, %v2203
        %v2277 = vsel %vm2261, 1.0, %v2205
        %v2278 = vsel %vm2262, 1.0, %v2207
        %v2279 = vsel %vm2263, 1.0, %v2209
        %v2280 = vsel %vm2264, 1.0, %v2211
        %v2281 = vsel %vm2265, 1.0, %v2213
        %v2282 = vsel %vm2266, 1.0, %v2215
        %v2283 = vsel %vm2267, 1.0, %v2217
        %v2284 = vsel %vm2268, 1.0, %v2219
        %v2285 = vsel %vm2269, 1.0, %v2221
        %v2286 = vmul.f32 %v2270, %v2238
        %v2287 = vmul.f32 %v2271, %v2239
        %v2288 = vmul.f32 %v2272, %v2240
        %v2289 = vmul.f32 %v2273, %v2241
        %v2290 = vmul.f32 %v2274, %v2242
        %v2291 = vmul.f32 %v2275, %v2243
        %v2292 = vmul.f32 %v2276, %v2244
        %v2293 = vmul.f32 %v2277, %v2245
        %v2294 = vmul.f32 %v2278, %v2246
        %v2295 = vmul.f32 %v2279, %v2247
        %v2296 = vmul.f32 %v2280, %v2248
        %v2297 = vmul.f32 %v2281, %v2249
        %v2298 = vmul.f32 %v2282, %v2250
        %v2299 = vmul.f32 %v2283, %v2251
        %v2300 = vmul.f32 %v2284, %v2252
        %v2301 = vmul.f32 %v2285, %v2253
        %v2302 = vmax.f32 %v1070, 0.0
        %v2303 = vmax.f32 %v1072, 0.0
        %v2304 = vmax.f32 %v1224, 0.0
        %v2305 = vmax.f32 %v1226, 0.0
        %v2306 = vmax.f32 %v1378, 0.0
        %v2307 = vmax.f32 %v1380, 0.0
        %v2308 = vmax.f32 %v1532, 0.0
        %v2309 = vmax.f32 %v1534, 0.0
        %v2310 = vmax.f32 %v1686, 0.0
        %v2311 = vmax.f32 %v1688, 0.0
        %v2312 = vmax.f32 %v1840, 0.0
        %v2313 = vmax.f32 %v1842, 0.0
        %v2314 = vmax.f32 %v1994, 0.0
        %v2315 = vmax.f32 %v1996, 0.0
        %v2316 = vmax.f32 %v2148, 0.0
        %v2317 = vmax.f32 %v2150, 0.0
        %v2318 = vadd.f32 %v2191, 1.0
        %v2319 = vlog2.pop %v2318
        %v2320 = vmul.f32 %v2319, 0.6931472
        %v2321 = vmul.f32 -0.5, %v2191
        %v2322 = vadd.f32 %v2321, 1.0
        %v2323 = vmul.f32 %v2322, %v2191
        %v2324 = vand.u32 2147483647, %v2191
        %vm2325 = vcmp.lt.f32.partialorder %v2324, 0.0004427343
        %v2326 = vsel %vm2325, %v2323, %v2320
        %v2327 = vadd.f32 %v2193, 1.0
        %v2328 = vlog2.pop %v2327
        %v2329 = vmul.f32 %v2328, 0.6931472
        %v2330 = vmul.f32 -0.5, %v2193
        %v2331 = vadd.f32 %v2330, 1.0
        %v2332 = vmul.f32 %v2331, %v2193
        %v2333 = vand.u32 2147483647, %v2193
        %vm2334 = vcmp.lt.f32.partialorder %v2333, 0.0004427343
        %v2335 = vsel %vm2334, %v2332, %v2329
        %v2336 = vadd.f32 %v2195, 1.0
        %v2337 = vlog2.pop %v2336
        %v2338 = vmul.f32 %v2337, 0.6931472
        %v2339 = vmul.f32 -0.5, %v2195
        %v2340 = vadd.f32 %v2339, 1.0
        %v2341 = vmul.f32 %v2340, %v2195
        %v2342 = vand.u32 2147483647, %v2195
        %vm2343 = vcmp.lt.f32.partialorder %v2342, 0.0004427343
        %v2344 = vsel %vm2343, %v2341, %v2338
        %v2345 = vadd.f32 %v2197, 1.0
        %v2346 = vlog2.pop %v2345
        %v2347 = vmul.f32 %v2346, 0.6931472
        %v2348 = vmul.f32 -0.5, %v2197
        %v2349 = vadd.f32 %v2348, 1.0
        %v2350 = vmul.f32 %v2349, %v2197
        %v2351 = vand.u32 2147483647, %v2197
        %vm2352 = vcmp.lt.f32.partialorder %v2351, 0.0004427343
        %v2353 = vsel %vm2352, %v2350, %v2347
        %v2354 = vadd.f32 %v2199, 1.0
        %v2355 = vlog2.pop %v2354
        %v2356 = vmul.f32 %v2355, 0.6931472
        %v2357 = vmul.f32 -0.5, %v2199
        %v2358 = vadd.f32 %v2357, 1.0
        %v2359 = vmul.f32 %v2358, %v2199
        %v2360 = vand.u32 2147483647, %v2199
        %vm2361 = vcmp.lt.f32.partialorder %v2360, 0.0004427343
        %v2362 = vsel %vm2361, %v2359, %v2356
        %v2363 = vadd.f32 %v2201, 1.0
        %v2364 = vlog2.pop %v2363
        %v2365 = vmul.f32 %v2364, 0.6931472
        %v2366 = vmul.f32 -0.5, %v2201
        %v2367 = vadd.f32 %v2366, 1.0
        %v2368 = vmul.f32 %v2367, %v2201
        %v2369 = vand.u32 2147483647, %v2201
        %vm2370 = vcmp.lt.f32.partialorder %v2369, 0.0004427343
        %v2371 = vsel %vm2370, %v2368, %v2365
        %v2372 = vadd.f32 %v2203, 1.0
        %v2373 = vlog2.pop %v2372
        %v2374 = vmul.f32 %v2373, 0.6931472
        %v2375 = vmul.f32 -0.5, %v2203
        %v2376 = vadd.f32 %v2375, 1.0
        %v2377 = vmul.f32 %v2376, %v2203
        %v2378 = vand.u32 2147483647, %v2203
        %vm2379 = vcmp.lt.f32.partialorder %v2378, 0.0004427343
        %v2380 = vsel %vm2379, %v2377, %v2374
        %v2381 = vadd.f32 %v2205, 1.0
        %v2382 = vlog2.pop %v2381
        %v2383 = vmul.f32 %v2382, 0.6931472
        %v2384 = vmul.f32 -0.5, %v2205
        %v2385 = vadd.f32 %v2384, 1.0
        %v2386 = vmul.f32 %v2385, %v2205
        %v2387 = vand.u32 2147483647, %v2205
        %vm2388 = vcmp.lt.f32.partialorder %v2387, 0.0004427343
        %v2389 = vsel %vm2388, %v2386, %v2383
        %v2390 = vadd.f32 %v2207, 1.0
        %v2391 = vlog2.pop %v2390
        %v2392 = vmul.f32 %v2391, 0.6931472
        %v2393 = vmul.f32 -0.5, %v2207
        %v2394 = vadd.f32 %v2393, 1.0
        %v2395 = vmul.f32 %v2394, %v2207
        %v2396 = vand.u32 2147483647, %v2207
        %vm2397 = vcmp.lt.f32.partialorder %v2396, 0.0004427343
        %v2398 = vsel %vm2397, %v2395, %v2392
        %v2399 = vadd.f32 %v2209, 1.0
        %v2400 = vlog2.pop %v2399
        %v2401 = vmul.f32 %v2400, 0.6931472
        %v2402 = vmul.f32 -0.5, %v2209
        %v2403 = vadd.f32 %v2402, 1.0
        %v2404 = vmul.f32 %v2403, %v2209
        %v2405 = vand.u32 2147483647, %v2209
        %vm2406 = vcmp.lt.f32.partialorder %v2405, 0.0004427343
        %v2407 = vsel %vm2406, %v2404, %v2401
        %v2408 = vadd.f32 %v2211, 1.0
        %v2409 = vlog2.pop %v2408
        %v2410 = vmul.f32 %v2409, 0.6931472
        %v2411 = vmul.f32 -0.5, %v2211
        %v2412 = vadd.f32 %v2411, 1.0
        %v2413 = vmul.f32 %v2412, %v2211
        %v2414 = vand.u32 2147483647, %v2211
        %vm2415 = vcmp.lt.f32.partialorder %v2414, 0.0004427343
        %v2416 = vsel %vm2415, %v2413, %v2410
        %v2417 = vadd.f32 %v2213, 1.0
        %v2418 = vlog2.pop %v2417
        %v2419 = vmul.f32 %v2418, 0.6931472
        %v2420 = vmul.f32 -0.5, %v2213
        %v2421 = vadd.f32 %v2420, 1.0
        %v2422 = vmul.f32 %v2421, %v2213
        %v2423 = vand.u32 2147483647, %v2213
        %vm2424 = vcmp.lt.f32.partialorder %v2423, 0.0004427343
        %v2425 = vsel %vm2424, %v2422, %v2419
        %v2426 = vadd.f32 %v2215, 1.0
        %v2427 = vlog2.pop %v2426
        %v2428 = vmul.f32 %v2427, 0.6931472
        %v2429 = vmul.f32 -0.5, %v2215
        %v2430 = vadd.f32 %v2429, 1.0
        %v2431 = vmul.f32 %v2430, %v2215
        %v2432 = vand.u32 2147483647, %v2215
        %vm2433 = vcmp.lt.f32.partialorder %v2432, 0.0004427343
        %v2434 = vsel %vm2433, %v2431, %v2428
        %v2435 = vadd.f32 %v2217, 1.0
        %v2436 = vlog2.pop %v2435
        %v2437 = vmul.f32 %v2436, 0.6931472
        %v2438 = vmul.f32 -0.5, %v2217
        %v2439 = vadd.f32 %v2438, 1.0
        %v2440 = vmul.f32 %v2439, %v2217
        %v2441 = vand.u32 2147483647, %v2217
        %vm2442 = vcmp.lt.f32.partialorder %v2441, 0.0004427343
        %v2443 = vsel %vm2442, %v2440, %v2437
        %v2444 = vadd.f32 %v2219, 1.0
        %v2445 = vlog2.pop %v2444
        %v2446 = vmul.f32 %v2445, 0.6931472
        %v2447 = vmul.f32 -0.5, %v2219
        %v2448 = vadd.f32 %v2447, 1.0
        %v2449 = vmul.f32 %v2448, %v2219
        %v2450 = vand.u32 2147483647, %v2219
        %vm2451 = vcmp.lt.f32.partialorder %v2450, 0.0004427343
        %v2452 = vsel %vm2451, %v2449, %v2446
        %v2453 = vadd.f32 %v2221, 1.0
        %v2454 = vlog2.pop %v2453
        %v2455 = vmul.f32 %v2454, 0.6931472
        %v2456 = vmul.f32 -0.5, %v2221
        %v2457 = vadd.f32 %v2456, 1.0
        %v2458 = vmul.f32 %v2457, %v2221
        %v2459 = vand.u32 2147483647, %v2221
        %vm2460 = vcmp.lt.f32.partialorder %v2459, 0.0004427343
        %v2461 = vsel %vm2460, %v2458, %v2455
        %v2462 = vadd.f32 %v2302, %v2326
        %v2463 = vadd.f32 %v2303, %v2335
        %v2464 = vadd.f32 %v2304, %v2344
        %v2465 = vadd.f32 %v2305, %v2353
        %v2466 = vadd.f32 %v2306, %v2362
        %v2467 = vadd.f32 %v2307, %v2371
        %v2468 = vadd.f32 %v2308, %v2380
        %v2469 = vadd.f32 %v2309, %v2389
        %v2470 = vadd.f32 %v2310, %v2398
        %v2471 = vadd.f32 %v2311, %v2407
        %v2472 = vadd.f32 %v2312, %v2416
        %v2473 = vadd.f32 %v2313, %v2425
        %v2474 = vadd.f32 %v2314, %v2434
        %v2475 = vadd.f32 %v2315, %v2443
        %v2476 = vadd.f32 %v2316, %v2452
        %v2477 = vadd.f32 %v2317, %v2461
        %v2478 = vadd.f32 %v2462, 1.0
        %v2479 = vadd.f32 %v2463, 1.0
        %v2480 = vadd.f32 %v2464, 1.0
        %v2481 = vadd.f32 %v2465, 1.0
        %v2482 = vadd.f32 %v2466, 1.0
        %v2483 = vadd.f32 %v2467, 1.0
        %v2484 = vadd.f32 %v2468, 1.0
        %v2485 = vadd.f32 %v2469, 1.0
        %v2486 = vadd.f32 %v2470, 1.0
        %v2487 = vadd.f32 %v2471, 1.0
        %v2488 = vadd.f32 %v2472, 1.0
        %v2489 = vadd.f32 %v2473, 1.0
        %v2490 = vadd.f32 %v2474, 1.0
        %v2491 = vadd.f32 %v2475, 1.0
        %v2492 = vadd.f32 %v2476, 1.0
        %v2493 = vadd.f32 %v2477, 1.0
        %vm2494 = vcmask 1040384
        %v2495 = vsel %vm2494, %v1076, %v2478
        %v2496 = vsel %vm2494, %v1078, %v2479
        %v2497 = vsel %vm2494, %v1230, %v2480
        %v2498 = vsel %vm2494, %v1232, %v2481
        %v2499 = vsel %vm2494, %v1384, %v2482
        %v2500 = vsel %vm2494, %v1386, %v2483
        %v2501 = vsel %vm2494, %v1538, %v2484
        %v2502 = vsel %vm2494, %v1540, %v2485
        %v2503 = vsel %vm2494, %v1692, %v2486
        %v2504 = vsel %vm2494, %v1694, %v2487
        %v2505 = vsel %vm2494, %v1846, %v2488
        %v2506 = vsel %vm2494, %v1848, %v2489
        %v2507 = vsel %vm2494, %v2000, %v2490
        %v2508 = vsel %vm2494, %v2002, %v2491
        %v2509 = vsel %vm2494, %v2154, %v2492
        %v2510 = vsel %vm2494, %v2156, %v2493
        %2511 = vst [vmem:[%s250] sm:$0xff] %v1070
        %2512 = vst [vmem:[%s250 + $0x8] sm:$0xff] %v1072
        %2513 = vst [vmem:[%s250 + $0x10] sm:$0xff] %v1224
        %2514 = vst [vmem:[%s250 + $0x18] sm:$0xff] %v1226
        %2515 = vst [vmem:[%s250 + $0x20] sm:$0xff] %v1378
        %2516 = vst [vmem:[%s250 + $0x28] sm:$0xff] %v1380
        %2517 = vst [vmem:[%s250 + $0x30] sm:$0xff] %v1532
        %2518 = vst [vmem:[%s250 + $0x38] sm:$0xff] %v1534
        %2519 = vst [vmem:[%s250 + $0x40] sm:$0xff] %v1686
        %2520 = vst [vmem:[%s250 + $0x48] sm:$0xff] %v1688
        %2521 = vst [vmem:[%s250 + $0x50] sm:$0xff] %v1840
        %2522 = vst [vmem:[%s250 + $0x58] sm:$0xff] %v1842
        %2523 = vst [vmem:[%s250 + $0x60] sm:$0xff] %v1994
        %2524 = vst [vmem:[%s250 + $0x68] sm:$0xff] %v1996
        %2525 = vst [vmem:[%s250 + $0x70] sm:$0xff] %v2148
        %2526 = vst [vmem:[%s250 + $0x78] sm:$0xff] %v2150
        %2527 = vst [vmem:[%s250 + $0x80] sm:$0xf] %v2495
        %2528 = vst [vmem:[%s250 + $0x88] sm:$0xf] %v2496
        %2529 = vst [vmem:[%s250 + $0x90] sm:$0xf] %v2497
        %2530 = vst [vmem:[%s250 + $0x98] sm:$0xf] %v2498
        %2531 = vst [vmem:[%s250 + $0xa0] sm:$0xf] %v2499
        %2532 = vst [vmem:[%s250 + $0xa8] sm:$0xf] %v2500
        %2533 = vst [vmem:[%s250 + $0xb0] sm:$0xf] %v2501
        %2534 = vst [vmem:[%s250 + $0xb8] sm:$0xf] %v2502
        %2535 = vst [vmem:[%s250 + $0xc0] sm:$0xf] %v2503
        %2536 = vst [vmem:[%s250 + $0xc8] sm:$0xf] %v2504
        %2537 = vst [vmem:[%s250 + $0xd0] sm:$0xf] %v2505
        %2538 = vst [vmem:[%s250 + $0xd8] sm:$0xf] %v2506
        %2539 = vst [vmem:[%s250 + $0xe0] sm:$0xf] %v2507
        %2540 = vst [vmem:[%s250 + $0xe8] sm:$0xf] %v2508
        %2541 = vst [vmem:[%s250 + $0xf0] sm:$0xf] %v2509
        %2542 = vst [vmem:[%s250 + $0xf8] sm:$0xf] %v2510
        %v2559 = vcombine.low %v2286, %v2287
        %v2560 = vcombine.low %v2288, %v2289
        %v2561 = vcombine.low %v2290, %v2291
        %v2562 = vcombine.low %v2292, %v2293
        %v2564 = vunpack.c.l.s4 1966171168
        %v2565 = vunpack.c.0.s8 %v2564
        %v2566 = vlaneseq
        %v2567 = vshrl.u32 %v2566, 7
        %v2568 = vsub.s32 %v2565, %v2567
        %v2569 = vrot.slane %v2559, %v2568
        %v2571 = vunpack.c.l.s4 1966171168
        %v2572 = vunpack.c.0.s8 %v2571
        %v2573 = vlaneseq
        %v2574 = vshrl.u32 %v2573, 7
        %v2575 = vsub.s32 %v2572, %v2574
        %v2576 = vrot.slane %v2560, %v2575
        %v2578 = vunpack.c.l.s4 1966171168
        %v2579 = vunpack.c.0.s8 %v2578
        %v2580 = vlaneseq
        %v2581 = vshrl.u32 %v2580, 7
        %v2582 = vsub.s32 %v2579, %v2581
        %v2583 = vrot.slane %v2561, %v2582
        %v2585 = vunpack.c.l.s4 1966171168
        %v2586 = vunpack.c.0.s8 %v2585
        %v2587 = vlaneseq
        %v2588 = vshrl.u32 %v2587, 7
        %v2589 = vsub.s32 %v2586, %v2588
        %v2590 = vrot.slane %v2562, %v2589
        %v2591 = vcombine.low %v2569, %v2576
        %v2592 = vcombine.low %v2583, %v2590
        %v2594 = vunpack.c.l.s4 1966171168
        %v2595 = vunpack.c.0.s8 %v2594
        %v2596 = vlaneseq
        %v2597 = vshrl.u32 %v2596, 7
        %v2598 = vsub.s32 %v2595, %v2597
        %v2599 = vrot.slane %v2591, %v2598
        %v2601 = vunpack.c.l.s4 1966171168
        %v2602 = vunpack.c.0.s8 %v2601
        %v2603 = vlaneseq
        %v2604 = vshrl.u32 %v2603, 7
        %v2605 = vsub.s32 %v2602, %v2604
        %v2606 = vrot.slane %v2592, %v2605
        %v2607 = vcombine.low %v2599, %v2606
        %v2608 = vcombine.low %v2294, %v2295
        %v2609 = vcombine.low %v2296, %v2297
        %v2610 = vcombine.low %v2298, %v2299
        %v2611 = vcombine.low %v2300, %v2301
        %v2613 = vunpack.c.l.s4 1966171168
        %v2614 = vunpack.c.0.s8 %v2613
        %v2615 = vlaneseq
        %v2616 = vshrl.u32 %v2615, 7
        %v2617 = vsub.s32 %v2614, %v2616
        %v2618 = vrot.slane %v2608, %v2617
        %v2620 = vunpack.c.l.s4 1966171168
        %v2621 = vunpack.c.0.s8 %v2620
        %v2622 = vlaneseq
        %v2623 = vshrl.u32 %v2622, 7
        %v2624 = vsub.s32 %v2621, %v2623
        %v2625 = vrot.slane %v2609, %v2624
        %v2627 = vunpack.c.l.s4 1966171168
        %v2628 = vunpack.c.0.s8 %v2627
        %v2629 = vlaneseq
        %v2630 = vshrl.u32 %v2629, 7
        %v2631 = vsub.s32 %v2628, %v2630
        %v2632 = vrot.slane %v2610, %v2631
        %v2634 = vunpack.c.l.s4 1966171168
        %v2635 = vunpack.c.0.s8 %v2634
        %v2636 = vlaneseq
        %v2637 = vshrl.u32 %v2636, 7
        %v2638 = vsub.s32 %v2635, %v2637
        %v2639 = vrot.slane %v2611, %v2638
        %v2640 = vcombine.low %v2618, %v2625
        %v2641 = vcombine.low %v2632, %v2639
        %v2643 = vunpack.c.l.s4 1966171168
        %v2644 = vunpack.c.0.s8 %v2643
        %v2645 = vlaneseq
        %v2646 = vshrl.u32 %v2645, 7
        %v2647 = vsub.s32 %v2644, %v2646
        %v2648 = vrot.slane %v2640, %v2647
        %v2650 = vunpack.c.l.s4 1966171168
        %v2651 = vunpack.c.0.s8 %v2650
        %v2652 = vlaneseq
        %v2653 = vshrl.u32 %v2652, 7
        %v2654 = vsub.s32 %v2651, %v2653
        %v2655 = vrot.slane %v2641, %v2654
        %v2656 = vcombine.low %v2648, %v2655
        %2659 = vst [vmem:[%s257] sm:$0xff] %v2607
        %2660 = vst [vmem:[%s257 + $0x8] sm:$0xff] %v2656
        %s2661 = sand.u32 %s115, 1
        %s2662 = sand.u32 %s115, 1
        %s2663 = smul.addr %s2662, 256
        %s2664 = scalar_lea.vmem [#allocation7], %s2663
        %s2665 = sand.u32 %s143, 1
        %s2666 = scalar_lea.sflag [#allocation4], %s2665
        %s2667 = sand.u32 %s143, 1
        %s2668 = smul.addr %s2667, 16
        %s2669 = scalar_lea.vmem [#allocation8], %s2668
        // Predicated region
        $region41: #{tpu_custom_call.1} parent=31 // pred_check
          %p2670 = pneg %p125
        $region42: #{tpu_custom_call.1} parent=31 // pred_check_branch
          %2672 = sbr.rel (%p2670) target = $region44
        $region43: #{tpu_custom_call.1} parent=31 // pred_region
          %s2673 = smul.u32 16, %s28
          %s2674 = smul.addr %s27, 128
          %s2675 = sadd.s32 %s2673, %s2674
          %s2676 = smul.addr %s2675, 8
          %s2677 = scalar_lea.vmem %s3, %s2676
          // Predicated region
          $region45: #{tpu_custom_call.1} parent=43 // pred_check
            _
          $region46: #{tpu_custom_call.1} parent=43 // pred_check_branch
            %2679 = sbr.rel (0) target = $region48
          $region47: #{tpu_custom_call.1} parent=43 // pred_region
            // Predicated region
            $region49: #{tpu_custom_call.1} parent=47 // pred_check
              _
            $region50: #{tpu_custom_call.1} parent=47 // pred_check_branch
              %2681 = sbr.rel (0) target = $region52
            $region51: #{tpu_custom_call.1} parent=47 // pred_region
              loop: start=0, step=1, limit=1
              $region53: #{tpu_custom_call.1} parent=51 // loop_pre_header
                _
              $region54: #{tpu_custom_call.1} parent=51 // loop_header
                %s2683 = sphi 0, %s2687
                %p2684 = scmp.ge.s32.totalorder %s2683, 1
                %s2688 = sphi %s2664, %s2664
                %s2689 = sphi %s2677, %s2677
              $region55: #{tpu_custom_call.1} parent=51 // loop_header_branch
                %2686 = sbr.rel (%p2684) target = $region59
              $region56: #{tpu_custom_call.1} parent=51 // loop_body
                %v2690 = vld [vmem:[%s2688] sm:$0xff]
                %2691 = vst [vmem:[%s2689] sm:$0xff] %v2690
                %v2692 = vld [vmem:[%s2688 + $0x8] sm:$0xff]
                %2693 = vst [vmem:[%s2689 + $0x8] sm:$0xff] %v2692
                %v2694 = vld [vmem:[%s2688 + $0x10] sm:$0xff]
                %2695 = vst [vmem:[%s2689 + $0x10] sm:$0xff] %v2694
                %v2696 = vld [vmem:[%s2688 + $0x18] sm:$0xff]
                %2697 = vst [vmem:[%s2689 + $0x18] sm:$0xff] %v2696
                %v2698 = vld [vmem:[%s2688 + $0x20] sm:$0xff]
                %2699 = vst [vmem:[%s2689 + $0x20] sm:$0xff] %v2698
                %v2700 = vld [vmem:[%s2688 + $0x28] sm:$0xff]
                %2701 = vst [vmem:[%s2689 + $0x28] sm:$0xff] %v2700
                %v2702 = vld [vmem:[%s2688 + $0x30] sm:$0xff]
                %2703 = vst [vmem:[%s2689 + $0x30] sm:$0xff] %v2702
                %v2704 = vld [vmem:[%s2688 + $0x38] sm:$0xff]
                %2705 = vst [vmem:[%s2689 + $0x38] sm:$0xff] %v2704
                %v2706 = vld [vmem:[%s2688 + $0x40] sm:$0xff]
                %2707 = vst [vmem:[%s2689 + $0x40] sm:$0xff] %v2706
                %v2708 = vld [vmem:[%s2688 + $0x48] sm:$0xff]
                %2709 = vst [vmem:[%s2689 + $0x48] sm:$0xff] %v2708
                %v2710 = vld [vmem:[%s2688 + $0x50] sm:$0xff]
                %2711 = vst [vmem:[%s2689 + $0x50] sm:$0xff] %v2710
                %v2712 = vld [vmem:[%s2688 + $0x58] sm:$0xff]
                %2713 = vst [vmem:[%s2689 + $0x58] sm:$0xff] %v2712
                %v2714 = vld [vmem:[%s2688 + $0x60] sm:$0xff]
                %2715 = vst [vmem:[%s2689 + $0x60] sm:$0xff] %v2714
                %v2716 = vld [vmem:[%s2688 + $0x68] sm:$0xff]
                %2717 = vst [vmem:[%s2689 + $0x68] sm:$0xff] %v2716
                %v2718 = vld [vmem:[%s2688 + $0x70] sm:$0xff]
                %2719 = vst [vmem:[%s2689 + $0x70] sm:$0xff] %v2718
                %v2720 = vld [vmem:[%s2688 + $0x78] sm:$0xff]
                %2721 = vst [vmem:[%s2689 + $0x78] sm:$0xff] %v2720
                %v2722 = vld [vmem:[%s2688 + $0x80] sm:$0xff]
                %2723 = vst [vmem:[%s2689 + $0x200] sm:$0xff] %v2722
                %v2724 = vld [vmem:[%s2688 + $0x88] sm:$0xff]
                %2725 = vst [vmem:[%s2689 + $0x208] sm:$0xff] %v2724
                %v2726 = vld [vmem:[%s2688 + $0x90] sm:$0xff]
                %2727 = vst [vmem:[%s2689 + $0x210] sm:$0xff] %v2726
                %v2728 = vld [vmem:[%s2688 + $0x98] sm:$0xff]
                %2729 = vst [vmem:[%s2689 + $0x218] sm:$0xff] %v2728
                %v2730 = vld [vmem:[%s2688 + $0xa0] sm:$0xff]
                %2731 = vst [vmem:[%s2689 + $0x220] sm:$0xff] %v2730
                %v2732 = vld [vmem:[%s2688 + $0xa8] sm:$0xff]
                %2733 = vst [vmem:[%s2689 + $0x228] sm:$0xff] %v2732
                %v2734 = vld [vmem:[%s2688 + $0xb0] sm:$0xff]
                %2735 = vst [vmem:[%s2689 + $0x230] sm:$0xff] %v2734
                %v2736 = vld [vmem:[%s2688 + $0xb8] sm:$0xff]
                %2737 = vst [vmem:[%s2689 + $0x238] sm:$0xff] %v2736
                %v2738 = vld [vmem:[%s2688 + $0xc0] sm:$0xff]
                %2739 = vst [vmem:[%s2689 + $0x240] sm:$0xff] %v2738
                %v2740 = vld [vmem:[%s2688 + $0xc8] sm:$0xff]
                %2741 = vst [vmem:[%s2689 + $0x248] sm:$0xff] %v2740
                %v2742 = vld [vmem:[%s2688 + $0xd0] sm:$0xff]
                %2743 = vst [vmem:[%s2689 + $0x250] sm:$0xff] %v2742
                %v2744 = vld [vmem:[%s2688 + $0xd8] sm:$0xff]
                %2745 = vst [vmem:[%s2689 + $0x258] sm:$0xff] %v2744
                %v2746 = vld [vmem:[%s2688 + $0xe0] sm:$0xff]
                %2747 = vst [vmem:[%s2689 + $0x260] sm:$0xff] %v2746
                %v2748 = vld [vmem:[%s2688 + $0xe8] sm:$0xff]
                %2749 = vst [vmem:[%s2689 + $0x268] sm:$0xff] %v2748
                %v2750 = vld [vmem:[%s2688 + $0xf0] sm:$0xff]
                %2751 = vst [vmem:[%s2689 + $0x270] sm:$0xff] %v2750
                %v2752 = vld [vmem:[%s2688 + $0xf8] sm:$0xff]
                %2753 = vst [vmem:[%s2689 + $0x278] sm:$0xff] %v2752
              $region57: #{tpu_custom_call.1} parent=51 // loop_footer
                %s2687 = sadd.s32 1, %s2683
              $region58: #{tpu_custom_call.1} parent=51 // loop_footer_branch
                %2682 = sbr.rel target = $region54
              $region59: #{tpu_custom_call.1} parent=51 // loop_exit
                _
            $region52: #{tpu_custom_call.1} parent=47 // pred_fallthru
              _
            // Predicated region
            $region60: #{tpu_custom_call.1} parent=47 // pred_check
              _
            $region61: #{tpu_custom_call.1} parent=47 // pred_check_branch
              %2755 = sbr.rel target = $region63
            $region62: #{tpu_custom_call.1} parent=47 // pred_region
              _
            $region63: #{tpu_custom_call.1} parent=47 // pred_fallthru
              _
          $region48: #{tpu_custom_call.1} parent=43 // pred_fallthru
            _
          %2756 = vnop
        $region44: #{tpu_custom_call.1} parent=31 // pred_fallthru
          _
        // Predicated region
        $region64: #{tpu_custom_call.1} parent=31 // pred_check
          %p2757 = pneg %p153
        $region65: #{tpu_custom_call.1} parent=31 // pred_check_branch
          %2759 = sbr.rel (%p2757) target = $region67
        $region66: #{tpu_custom_call.1} parent=31 // pred_region
          %s2760 = smul.u32 16, %s28
          %s2762 = ssub.s32 256, 256
          %2763 = vsyncadd %s2666, %s2762
          %s2764 = smul.addr %s27, 64
          %s2765 = sadd.s32 %s2760, %s2764
          %s2766 = smul.addr %s2765, 16
          %s2767 = scalar_lea.hbm %s4, %s2766
          %s2769 = sshll.u32 %s2669, 4
          %s2770 = int_to_ptr.vmem [resolvable:$true] %s2769
          %2772 = dma.vmem_to_hbm [thread:$0]  %s2770, 256, %s2767, %s2666
        $region67: #{tpu_custom_call.1} parent=31 // pred_fallthru
          _
      $region32: #{tpu_custom_call.1} parent=5 // pred_fallthru
        _
      %p2773 = scmp.le.s32.totalorder 2, %s18
      // Predicated region
      $region68: #{tpu_custom_call.1} parent=5 // pred_check
        %p2774 = pneg %p2773
      $region69: #{tpu_custom_call.1} parent=5 // pred_check_branch
        %2776 = sbr.rel (%p2774) target = $region71
      $region70: #{tpu_custom_call.1} parent=5 // pred_region
        %s2777 = ssub.s32 %s18, 2
        // Predicated region
        $region72: #{tpu_custom_call.1} parent=70 // pred_check
          %p2778 = pneg %p131
        $region73: #{tpu_custom_call.1} parent=70 // pred_check_branch
          %2780 = sbr.rel (%p2778) target = $region75
        $region74: #{tpu_custom_call.1} parent=70 // pred_region
          %s2781 = sand.u32 %s116, 1
          %s2782 = sand.u32 %s116, 1
          %s2783 = smul.addr %s2782, 256
          %s2784 = scalar_lea.vmem [#allocation7], %s2783
        $region75: #{tpu_custom_call.1} parent=70 // pred_fallthru
          _
        // Predicated region
        $region76: #{tpu_custom_call.1} parent=70 // pred_check
          %p2785 = pneg %p159
        $region77: #{tpu_custom_call.1} parent=70 // pred_check_branch
          %2787 = sbr.rel (%p2785) target = $region79
        $region78: #{tpu_custom_call.1} parent=70 // pred_region
          %s2788 = sand.u32 %s144, 1
          %s2789 = scalar_lea.sflag [#allocation4], %s2788
          %s2790 = sand.u32 %s144, 1
          %s2791 = smul.addr %s2790, 16
          %s2792 = scalar_lea.vmem [#allocation8], %s2791
          %2793 = dma.done %s2789, 256
        $region79: #{tpu_custom_call.1} parent=70 // pred_fallthru
          _
      $region71: #{tpu_custom_call.1} parent=5 // pred_fallthru
        _
    $region6: #{tpu_custom_call.1} parent=1 // loop_footer
      %s22 = sadd.s32 1, %s18
    $region7: #{tpu_custom_call.1} parent=1 // loop_footer_branch
      %17 = sbr.rel target = $region3
    $region8: #{tpu_custom_call.1} parent=1 // loop_exit
      _
    %2794 = vsyncpa [#allocation3], 1
    %s2795 = scalar_lea.sflag [#allocation3], 1
    %2796 = vsyncpa %s2795, 1
    %2797 = vsyncpa [#allocation6], 1
    %2798 = vsyncpa [#allocation4], 1
    %s2799 = scalar_lea.sflag [#allocation4], 1
    %2800 = vsyncpa %s2799, 1

</llo_original>
